<compile_context>
chip_gen: v6e
topology: v6e:2x2x1
jax: 0.10.0
libtpu: 0.0.40
codegen_flags: <defaults>
</compile_context>

<pallas_src>
import jax
import jax.numpy as jnp
from jax.experimental import pallas as pl
from jax.experimental.pallas import tpu as pltpu

BN_EPS = 1e-5
_VMEM_LIMIT = 32 * 1024 * 1024  # explicit: v5e scoped default is only 16 MiB


def _round_up(x, m):
    return ((x + m - 1) // m) * m


# ---------------------------------------------------------------------------
# Pallas kernels (hot path)
# ---------------------------------------------------------------------------
def _conv_bn_relu_kernel(p_ref, w_ref, shift_ref, o_ref):
    # p_ref:     [TM, K]    bf16 im2col patch tile
    # w_ref:     [K, Cout]  bf16 weights, BN scale pre-folded
    # shift_ref: [1, Cout]  f32 folded BN shift (+ conv bias)
    # o_ref:     [TM, Cout] f32
    acc = jnp.dot(p_ref[...], w_ref[...], preferred_element_type=jnp.float32)
    o_ref[...] = jnp.maximum(acc + shift_ref[...], 0.0)


def _max3_kernel(a_ref, b_ref, c_ref, o_ref):
    # 3-way elementwise max (row taps of a separable 3x3/stride-2 max pool).
    o_ref[...] = jnp.maximum(jnp.maximum(a_ref[...], b_ref[...]), c_ref[...])


# ---------------------------------------------------------------------------
# Wrappers (glue: patch extraction, padding, pallas_call setup)
# ---------------------------------------------------------------------------
def _extract_patches(x, kh, kw, sh, sw, ph, pw):
    # x: [N, H, W, C]  ->  patches [N*Ho*Wo, kh*kw*C]
    # TODO(synk): im2col inflates HBM traffic by kh*kw; a tap-loop inside the
    # kernel (accumulating kh*kw small matmuls over shifted blocks) would remove
    # it, at the cost of a much more complex index_map.
    x = jnp.pad(x, ((0, 0), (ph, ph), (pw, pw), (0, 0)))
    N, H, W, C = x.shape
    Ho = (H - kh) // sh + 1
    Wo = (W - kw) // sw + 1
    cols = []
    for i in range(kh):
        for j in range(kw):
            cols.append(x[:, i:i + sh * (Ho - 1) + 1:sh,
                           j:j + sw * (Wo - 1) + 1:sw, :])
    patches = jnp.stack(cols, axis=3)  # [N, Ho, Wo, kh*kw, C]
    return patches.reshape(N * Ho * Wo, kh * kw * C), (N, Ho, Wo)


def _pick_tm(M):
    # Multiple of 8, capped at 512, sized so larger layers get >=2 grid steps
    # (lets megacore chips shard the "parallel" axis across TensorCores).
    return min(512, _round_up(max((M + 1) // 2, 1), 8))


def conv_bn_relu(x, params, strides, padding):
    """Conv2d + BatchNorm(eval, folded) + ReLU.  x: [N,H,W,C] f32."""
    w = params["weight"]          # [kh, kw, cin, cout] bf16, BN scale folded in
    shift = params["shift"]       # [1, cout] f32
    kh, kw, _, cout = w.shape
    sh, sw = strides
    ph, pw = padding

    patches, (N, Ho, Wo) = _extract_patches(x, kh, kw, sh, sw, ph, pw)
    M, K = patches.shape
    TM = _pick_tm(M)
    M_pad = _round_up(M, TM)

    patches = patches.astype(jnp.bfloat16)
    if M_pad != M:
        patches = jnp.pad(patches, ((0, M_pad - M), (0, 0)))
    w2 = w.reshape(K, cout)

    out = pl.pallas_call(
        _conv_bn_relu_kernel,
        out_shape=jax.ShapeDtypeStruct((M_pad, cout), jnp.float32),
        grid=(M_pad // TM,),
        in_specs=[
            pl.BlockSpec((TM, K), lambda i: (i, 0)),
            pl.BlockSpec((K, cout), lambda i: (0, 0)),
            pl.BlockSpec((1, cout), lambda i: (0, 0)),
        ],
        out_specs=pl.BlockSpec((TM, cout), lambda i: (i, 0)),
        compiler_params=pltpu.CompilerParams(
            dimension_semantics=("parallel",),
            vmem_limit_bytes=_VMEM_LIMIT),
    )(patches, w2, shift)

    if M_pad != M:
        out = out[:M]
    return out.reshape(N, Ho, Wo, cout)


def maxpool_3x3_s2(x):
    """MaxPool2d(kernel=3, stride=2, padding=0).  x: [N,H,W,C] f32."""
    N, H, W, C = x.shape
    Ho = (H - 3) // 2 + 1
    Wo = (W - 3) // 2 + 1

    # Separable pool: W-direction 3-tap max at stride 2 in glue (one pass)...
    wl = 2 * (Wo - 1) + 1
    xc = jnp.maximum(
        jnp.maximum(x[:, :, 0:wl:2, :], x[:, :, 1:1 + wl:2, :]),
        x[:, :, 2:2 + wl:2, :])                      # [N, H, Wo, C]

    # ...then the 3 H-direction row taps reduced inside a Pallas kernel.
    hl = 2 * (Ho - 1) + 1
    r0 = xc[:, 0:hl:2].reshape(-1, C)
    r1 = xc[:, 1:1 + hl:2].reshape(-1, C)
    r2 = xc[:, 2:2 + hl:2].reshape(-1, C)

    M = r0.shape[0]
    TM = _pick_tm(M)
    M_pad = _round_up(M, TM)
    pad = M_pad - M
    if pad:
        r0 = jnp.pad(r0, ((0, pad), (0, 0)))
        r1 = jnp.pad(r1, ((0, pad), (0, 0)))
        r2 = jnp.pad(r2, ((0, pad), (0, 0)))

    out = pl.pallas_call(
        _max3_kernel,
        out_shape=jax.ShapeDtypeStruct((M_pad, C), jnp.float32),
        grid=(M_pad // TM,),
        in_specs=[pl.BlockSpec((TM, C), lambda i: (i, 0)) for _ in range(3)],
        out_specs=pl.BlockSpec((TM, C), lambda i: (i, 0)),
        compiler_params=pltpu.CompilerParams(
            dimension_semantics=("parallel",),
            vmem_limit_bytes=_VMEM_LIMIT),
    )(r0, r1, r2)

    if pad:
        out = out[:M]
    return out.reshape(N, Ho, Wo, C)


# ---------------------------------------------------------------------------
# Parameter construction (deterministic, matches Conv2d_bn init shapes)
# ---------------------------------------------------------------------------
def _make_conv_bn(key, cin, cout, kernel_size):
    kh, kw = kernel_size if isinstance(kernel_size, tuple) else (kernel_size, kernel_size)
    fan_in = cin * kh * kw
    fan_out = cout * kh * kw
    bound = (6.0 / (fan_in + fan_out)) ** 0.5          # xavier_uniform
    w = jax.random.uniform(key, (kh, kw, cin, cout), jnp.float32, -bound, bound)
    # Eval-mode BatchNorm folding with init stats (gamma=1, beta=0, mean=0, var=1):
    #   y = conv * scale + shift,  scale = gamma/sqrt(var+eps),
    #   shift = beta + (bias - mean) * scale   (bias = 0 here)
    # TODO(synk): training-mode BatchNorm batch statistics are not implemented.
    scale = jnp.full((cout,), 1.0 / (1.0 + BN_EPS) ** 0.5, jnp.float32)
    shift = jnp.zeros((1, cout), jnp.float32)
    w_folded = (w * scale[None, None, None, :]).astype(jnp.bfloat16)
    return {"weight": w_folded, "shift": shift}


def _fuse_cout(a, b):
    # Concatenate two convs (same kernel/input) along Cout -> one lane-dense matmul.
    return {"weight": jnp.concatenate([a["weight"], b["weight"]], axis=-1),
            "shift": jnp.concatenate([a["shift"], b["shift"]], axis=-1)}


def init_stem_params(key, in_filters=2):
    keys = jax.random.split(key, 11)
    sl0 = _make_conv_bn(keys[4], 160, 64, 1)            # 1x1 same
    sr0 = _make_conv_bn(keys[6], 160, 64, 1)            # 1x1 same
    return {
        "fb0": _make_conv_bn(keys[0], in_filters, 32, 3),    # 3x3 s2 valid
        "fb1": _make_conv_bn(keys[1], 32, 32, 3),            # 3x3 s1 valid
        "fb2": _make_conv_bn(keys[2], 32, 64, 3),            # 3x3 s1 same
        "first_right": _make_conv_bn(keys[3], 64, 96, 3),    # 3x3 s2 valid
        "second_in_fused": _fuse_cout(sl0, sr0),             # 160 -> 128 (64|64)
        "sl1": _make_conv_bn(keys[5], 64, 96, 3),            # 3x3 valid
        "sr1": _make_conv_bn(keys[7], 64, 64, (7, 1)),       # (7,1) same
        "sr2": _make_conv_bn(keys[8], 64, 64, (1, 7)),       # (1,7) same
        "sr3": _make_conv_bn(keys[9], 64, 96, 3),            # 3x3 valid
        "third_left": _make_conv_bn(keys[10], 192, 192, 3),  # 3x3 s2 valid
    }


# ---------------------------------------------------------------------------
# StemBlock forward
# ---------------------------------------------------------------------------
def stem_forward(params, x_nchw):
    x = jnp.transpose(x_nchw, (0, 2, 3, 1)).astype(jnp.float32)   # NCHW -> NHWC
    # first_block
    x = conv_bn_relu(x, params["fb0"], (2, 2), (0, 0))
    x = conv_bn_relu(x, params["fb1"], (1, 1), (0, 0))
    x = conv_bn_relu(x, params["fb2"], (1, 1), (1, 1))
    # first split
    x_l = maxpool_3x3_s2(x)
    x_r = conv_bn_relu(x, params["first_right"], (2, 2), (0, 0))
    x = jnp.concatenate([x_l, x_r], axis=-1)                      # 160 ch
    # second split: the two parallel 1x1 convs are fused into one 160->128 matmul
    y = conv_bn_relu(x, params["second_in_fused"], (1, 1), (0, 0))
    x_l, x_r = y[..., :64], y[..., 64:]
    x_l = conv_bn_relu(x_l, params["sl1"], (1, 1), (0, 0))
    x_r = conv_bn_relu(x_r, params["sr1"], (1, 1), (3, 0))
    x_r = conv_bn_relu(x_r, params["sr2"], (1, 1), (0, 3))
    x_r = conv_bn_relu(x_r, params["sr3"], (1, 1), (0, 0))
    x = jnp.concatenate([x_l, x_r], axis=-1)                      # 192 ch
    # third split
    x_l = conv_bn_relu(x, params["third_left"], (2, 2), (0, 0))
    x_r = maxpool_3x3_s2(x)
    x = jnp.concatenate([x_l, x_r], axis=-1)                      # 384 ch
    # TODO(synk): branch outputs could be written straight into the concat buffer
    # via out_spec channel offsets; kept as jnp.concatenate for clarity.
    return jnp.transpose(x, (0, 3, 1, 2))                         # NHWC -> NCHW


if __name__ == "__main__":
    key = jax.random.PRNGKey(0)
    pkey, xkey = jax.random.split(key)
    params = init_stem_params(pkey, in_filters=2)
    # Small input consistent with the module: batch=2, channels=2, spatial=27x27
    # (small spatial size that still survives all valid convs / stride-2 stages).
    x = jax.random.normal(xkey, (2, 2, 27, 27), jnp.float32)

    out = jax.jit(stem_forward)(params, x)
    out = jax.block_until_ready(out)

    assert out.shape == (2, 384, 1, 1), out.shape
    assert out.dtype == jnp.float32
    assert bool(jnp.all(jnp.isfinite(out)))
    print("KERNEL_OK")
</pallas_src>

<mosaic_0001>
module attributes {stable_mosaic.version = 11 : i64} {
  func.func @_conv_bn_relu_kernel(%arg0: i32, %arg1: memref<176x18xbf16, #tpu.memory_space<vmem>>, %arg2: memref<18x32xbf16, #tpu.memory_space<vmem>>, %arg3: memref<1x32xf32, #tpu.memory_space<vmem>>, %arg4: memref<176x32xf32, #tpu.memory_space<vmem>>) attributes {dimension_semantics = [#tpu.dimension_semantics<parallel>], iteration_bounds = array<i64: 2>, scalar_prefetch = 0 : i64, scratch_operands = 0 : i64, tpu.core_type = #tpu.core_type<tc>, window_params = [{transform_indices = @transform_0, window_bounds = array<i64: 176, 18>}, {pipeline_mode = #tpu.pipeline_mode<synchronous>, transform_indices = @transform_1, window_bounds = array<i64: 18, 32>}, {pipeline_mode = #tpu.pipeline_mode<synchronous>, transform_indices = @transform_2, window_bounds = array<i64: 1, 32>}, {transform_indices = @transform_3, window_bounds = array<i64: 176, 32>}]} {
    %c0 = arith.constant 0 : index
    %c0_0 = arith.constant 0 : index
    %0 = vector.load %arg1[%c0, %c0_0] : memref<176x18xbf16, #tpu.memory_space<vmem>>, vector<176x18xbf16>
    %c0_1 = arith.constant 0 : index
    %c0_2 = arith.constant 0 : index
    %1 = vector.load %arg2[%c0_1, %c0_2] : memref<18x32xbf16, #tpu.memory_space<vmem>>, vector<18x32xbf16>
    %cst = arith.constant dense<0.000000e+00> : vector<176x32xf32>
    %2 = tpu.matmul %0, %1, %cst {dimension_numbers = #tpu.dot_dimension_numbers<[1], [0], [0], [1], [0, 0, 1, 1], [], []>} : vector<176x18xbf16>, vector<18x32xbf16>, vector<176x32xf32> -> vector<176x32xf32>
    %c0_3 = arith.constant 0 : index
    %c0_4 = arith.constant 0 : index
    %3 = vector.load %arg3[%c0_3, %c0_4] : memref<1x32xf32, #tpu.memory_space<vmem>>, vector<1x32xf32>
    %4 = vector.broadcast %3 : vector<1x32xf32> to vector<176x32xf32>
    %5 = arith.addf %2, %4 : vector<176x32xf32>
    %cst_5 = arith.constant 0.000000e+00 : f32
    %6 = vector.broadcast %cst_5 : f32 to vector<176x32xf32>
    %7 = arith.maximumf %5, %6 : vector<176x32xf32>
    %c0_6 = arith.constant 0 : index
    %c0_7 = arith.constant 0 : index
    %8 = vector.load %arg4[%c0_6, %c0_7] : memref<176x32xf32, #tpu.memory_space<vmem>>, vector<176x32xf32>
    tpu.vector_store %arg4[%c0_6, %c0_7], %7 {strides = array<i32>} : memref<176x32xf32, #tpu.memory_space<vmem>>, vector<176x32xf32>,
    return
  }
  func.func @transform_0(%arg0: i32) -> (i32, i32) {
    %c0_i32 = arith.constant 0 : i32
    %c0_i32_0 = arith.constant 0 : i32
    return %arg0, %c0_i32 : i32, i32
  }
  func.func @transform_1(%arg0: i32) -> (i32, i32) {
    %c0_i32 = arith.constant 0 : i32
    %c0_i32_0 = arith.constant 0 : i32
    %c0_i32_1 = arith.constant 0 : i32
    return %c0_i32, %c0_i32_0 : i32, i32
  }
  func.func @transform_2(%arg0: i32) -> (i32, i32) {
    %c0_i32 = arith.constant 0 : i32
    %c0_i32_0 = arith.constant 0 : i32
    %c0_i32_1 = arith.constant 0 : i32
    return %c0_i32, %c0_i32_0 : i32, i32
  }
  func.func @transform_3(%arg0: i32) -> (i32, i32) {
    %c0_i32 = arith.constant 0 : i32
    %c0_i32_0 = arith.constant 0 : i32
    return %arg0, %c0_i32 : i32, i32
  }
}

module attributes {stable_mosaic.version = 11 : i64} {
  func.func @_conv_bn_relu_kernel(%arg0: i32, %arg1: memref<128x288xbf16, #tpu.memory_space<vmem>>, %arg2: memref<288x32xbf16, #tpu.memory_space<vmem>>, %arg3: memref<1x32xf32, #tpu.memory_space<vmem>>, %arg4: memref<128x32xf32, #tpu.memory_space<vmem>>) attributes {dimension_semantics = [#tpu.dimension_semantics<parallel>], iteration_bounds = array<i64: 2>, scalar_prefetch = 0 : i64, scratch_operands = 0 : i64, tpu.core_type = #tpu.core_type<tc>, window_params = [{transform_indices = @transform_0, window_bounds = array<i64: 128, 288>}, {pipeline_mode = #tpu.pipeline_mode<synchronous>, transform_indices = @transform_1, window_bounds = array<i64: 288, 32>}, {pipeline_mode = #tpu.pipeline_mode<synchronous>, transform_indices = @transform_2, window_bounds = array<i64: 1, 32>}, {transform_indices = @transform_3, window_bounds = array<i64: 128, 32>}]} {
    %c0 = arith.constant 0 : index
    %c0_0 = arith.constant 0 : index
    %0 = vector.load %arg1[%c0, %c0_0] : memref<128x288xbf16, #tpu.memory_space<vmem>>, vector<128x288xbf16>
    %c0_1 = arith.constant 0 : index
    %c0_2 = arith.constant 0 : index
    %1 = vector.load %arg2[%c0_1, %c0_2] : memref<288x32xbf16, #tpu.memory_space<vmem>>, vector<288x32xbf16>
    %cst = arith.constant dense<0.000000e+00> : vector<128x32xf32>
    %2 = tpu.matmul %0, %1, %cst {dimension_numbers = #tpu.dot_dimension_numbers<[1], [0], [0], [1], [0, 0, 1, 1], [], []>} : vector<128x288xbf16>, vector<288x32xbf16>, vector<128x32xf32> -> vector<128x32xf32>
    %c0_3 = arith.constant 0 : index
    %c0_4 = arith.constant 0 : index
    %3 = vector.load %arg3[%c0_3, %c0_4] : memref<1x32xf32, #tpu.memory_space<vmem>>, vector<1x32xf32>
    %4 = vector.broadcast %3 : vector<1x32xf32> to vector<128x32xf32>
    %5 = arith.addf %2, %4 : vector<128x32xf32>
    %cst_5 = arith.constant 0.000000e+00 : f32
    %6 = vector.broadcast %cst_5 : f32 to vector<128x32xf32>
    %7 = arith.maximumf %5, %6 : vector<128x32xf32>
    %c0_6 = arith.constant 0 : index
    %c0_7 = arith.constant 0 : index
    %8 = vector.load %arg4[%c0_6, %c0_7] : memref<128x32xf32, #tpu.memory_space<vmem>>, vector<128x32xf32>
    tpu.vector_store %arg4[%c0_6, %c0_7], %7 {strides = array<i32>} : memref<128x32xf32, #tpu.memory_space<vmem>>, vector<128x32xf32>,
    return
  }
  func.func @transform_0(%arg0: i32) -> (i32, i32) {
    %c0_i32 = arith.constant 0 : i32
    %c0_i32_0 = arith.constant 0 : i32
    return %arg0, %c0_i32 : i32, i32
  }
  func.func @transform_1(%arg0: i32) -> (i32, i32) {
    %c0_i32 = arith.constant 0 : i32
    %c0_i32_0 = arith.constant 0 : i32
    %c0_i32_1 = arith.constant 0 : i32
    return %c0_i32, %c0_i32_0 : i32, i32
  }
  func.func @transform_2(%arg0: i32) -> (i32, i32) {
    %c0_i32 = arith.constant 0 : i32
    %c0_i32_0 = arith.constant 0 : i32
    %c0_i32_1 = arith.constant 0 : i32
    return %c0_i32, %c0_i32_0 : i32, i32
  }
  func.func @transform_3(%arg0: i32) -> (i32, i32) {
    %c0_i32 = arith.constant 0 : i32
    %c0_i32_0 = arith.constant 0 : i32
    return %arg0, %c0_i32 : i32, i32
  }
}

module attributes {stable_mosaic.version = 11 : i64} {
  func.func @_conv_bn_relu_kernel(%arg0: i32, %arg1: memref<128x288xbf16, #tpu.memory_space<vmem>>, %arg2: memref<288x64xbf16, #tpu.memory_space<vmem>>, %arg3: memref<1x64xf32, #tpu.memory_space<vmem>>, %arg4: memref<128x64xf32, #tpu.memory_space<vmem>>) attributes {dimension_semantics = [#tpu.dimension_semantics<parallel>], iteration_bounds = array<i64: 2>, scalar_prefetch = 0 : i64, scratch_operands = 0 : i64, tpu.core_type = #tpu.core_type<tc>, window_params = [{transform_indices = @transform_0, window_bounds = array<i64: 128, 288>}, {pipeline_mode = #tpu.pipeline_mode<synchronous>, transform_indices = @transform_1, window_bounds = array<i64: 288, 64>}, {pipeline_mode = #tpu.pipeline_mode<synchronous>, transform_indices = @transform_2, window_bounds = array<i64: 1, 64>}, {transform_indices = @transform_3, window_bounds = array<i64: 128, 64>}]} {
    %c0 = arith.constant 0 : index
    %c0_0 = arith.constant 0 : index
    %0 = vector.load %arg1[%c0, %c0_0] : memref<128x288xbf16, #tpu.memory_space<vmem>>, vector<128x288xbf16>
    %c0_1 = arith.constant 0 : index
    %c0_2 = arith.constant 0 : index
    %1 = vector.load %arg2[%c0_1, %c0_2] : memref<288x64xbf16, #tpu.memory_space<vmem>>, vector<288x64xbf16>
    %cst = arith.constant dense<0.000000e+00> : vector<128x64xf32>
    %2 = tpu.matmul %0, %1, %cst {dimension_numbers = #tpu.dot_dimension_numbers<[1], [0], [0], [1], [0, 0, 1, 1], [], []>} : vector<128x288xbf16>, vector<288x64xbf16>, vector<128x64xf32> -> vector<128x64xf32>
    %c0_3 = arith.constant 0 : index
    %c0_4 = arith.constant 0 : index
    %3 = vector.load %arg3[%c0_3, %c0_4] : memref<1x64xf32, #tpu.memory_space<vmem>>, vector<1x64xf32>
    %4 = vector.broadcast %3 : vector<1x64xf32> to vector<128x64xf32>
    %5 = arith.addf %2, %4 : vector<128x64xf32>
    %cst_5 = arith.constant 0.000000e+00 : f32
    %6 = vector.broadcast %cst_5 : f32 to vector<128x64xf32>
    %7 = arith.maximumf %5, %6 : vector<128x64xf32>
    %c0_6 = arith.constant 0 : index
    %c0_7 = arith.constant 0 : index
    %8 = vector.load %arg4[%c0_6, %c0_7] : memref<128x64xf32, #tpu.memory_space<vmem>>, vector<128x64xf32>
    tpu.vector_store %arg4[%c0_6, %c0_7], %7 {strides = array<i32>} : memref<128x64xf32, #tpu.memory_space<vmem>>, vector<128x64xf32>,
    return
  }
  func.func @transform_0(%arg0: i32) -> (i32, i32) {
    %c0_i32 = arith.constant 0 : i32
    %c0_i32_0 = arith.constant 0 : i32
    return %arg0, %c0_i32 : i32, i32
  }
  func.func @transform_1(%arg0: i32) -> (i32, i32) {
    %c0_i32 = arith.constant 0 : i32
    %c0_i32_0 = arith.constant 0 : i32
    %c0_i32_1 = arith.constant 0 : i32
    return %c0_i32, %c0_i32_0 : i32, i32
  }
  func.func @transform_2(%arg0: i32) -> (i32, i32) {
    %c0_i32 = arith.constant 0 : i32
    %c0_i32_0 = arith.constant 0 : i32
    %c0_i32_1 = arith.constant 0 : i32
    return %c0_i32, %c0_i32_0 : i32, i32
  }
  func.func @transform_3(%arg0: i32) -> (i32, i32) {
    %c0_i32 = arith.constant 0 : i32
    %c0_i32_0 = arith.constant 0 : i32
    return %arg0, %c0_i32 : i32, i32
  }
}

module attributes {stable_mosaic.version = 11 : i64} {
  func.func @_max3_kernel(%arg0: i32, %arg1: memref<32x64xf32, #tpu.memory_space<vmem>>, %arg2: memref<32x64xf32, #tpu.memory_space<vmem>>, %arg3: memref<32x64xf32, #tpu.memory_space<vmem>>, %arg4: memref<32x64xf32, #tpu.memory_space<vmem>>) attributes {dimension_semantics = [#tpu.dimension_semantics<parallel>], iteration_bounds = array<i64: 2>, scalar_prefetch = 0 : i64, scratch_operands = 0 : i64, tpu.core_type = #tpu.core_type<tc>, window_params = [{transform_indices = @transform_0, window_bounds = array<i64: 32, 64>}, {transform_indices = @transform_1, window_bounds = array<i64: 32, 64>}, {transform_indices = @transform_2, window_bounds = array<i64: 32, 64>}, {transform_indices = @transform_3, window_bounds = array<i64: 32, 64>}]} {
    %c0 = arith.constant 0 : index
    %c0_0 = arith.constant 0 : index
    %0 = vector.load %arg1[%c0, %c0_0] : memref<32x64xf32, #tpu.memory_space<vmem>>, vector<32x64xf32>
    %c0_1 = arith.constant 0 : index
    %c0_2 = arith.constant 0 : index
    %1 = vector.load %arg2[%c0_1, %c0_2] : memref<32x64xf32, #tpu.memory_space<vmem>>, vector<32x64xf32>
    %2 = arith.maximumf %0, %1 : vector<32x64xf32>
    %c0_3 = arith.constant 0 : index
    %c0_4 = arith.constant 0 : index
    %3 = vector.load %arg3[%c0_3, %c0_4] : memref<32x64xf32, #tpu.memory_space<vmem>>, vector<32x64xf32>
    %4 = arith.maximumf %2, %3 : vector<32x64xf32>
    %c0_5 = arith.constant 0 : index
    %c0_6 = arith.constant 0 : index
    %5 = vector.load %arg4[%c0_5, %c0_6] : memref<32x64xf32, #tpu.memory_space<vmem>>, vector<32x64xf32>
    tpu.vector_store %arg4[%c0_5, %c0_6], %4 {strides = array<i32>} : memref<32x64xf32, #tpu.memory_space<vmem>>, vector<32x64xf32>,
    return
  }
  func.func @transform_0(%arg0: i32) -> (i32, i32) {
    %c0_i32 = arith.constant 0 : i32
    %c0_i32_0 = arith.constant 0 : i32
    return %arg0, %c0_i32 : i32, i32
  }
  func.func @transform_1(%arg0: i32) -> (i32, i32) {
    %c0_i32 = arith.constant 0 : i32
    %c0_i32_0 = arith.constant 0 : i32
    return %arg0, %c0_i32 : i32, i32
  }
  func.func @transform_2(%arg0: i32) -> (i32, i32) {
    %c0_i32 = arith.constant 0 : i32
    %c0_i32_0 = arith.constant 0 : i32
    return %arg0, %c0_i32 : i32, i32
  }
  func.func @transform_3(%arg0: i32) -> (i32, i32) {
    %c0_i32 = arith.constant 0 : i32
    %c0_i32_0 = arith.constant 0 : i32
    return %arg0, %c0_i32 : i32, i32
  }
}

module attributes {stable_mosaic.version = 11 : i64} {
  func.func @_conv_bn_relu_kernel(%arg0: i32, %arg1: memref<32x576xbf16, #tpu.memory_space<vmem>>, %arg2: memref<576x96xbf16, #tpu.memory_space<vmem>>, %arg3: memref<1x96xf32, #tpu.memory_space<vmem>>, %arg4: memref<32x96xf32, #tpu.memory_space<vmem>>) attributes {dimension_semantics = [#tpu.dimension_semantics<parallel>], iteration_bounds = array<i64: 2>, scalar_prefetch = 0 : i64, scratch_operands = 0 : i64, tpu.core_type = #tpu.core_type<tc>, window_params = [{transform_indices = @transform_0, window_bounds = array<i64: 32, 576>}, {pipeline_mode = #tpu.pipeline_mode<synchronous>, transform_indices = @transform_1, window_bounds = array<i64: 576, 96>}, {pipeline_mode = #tpu.pipeline_mode<synchronous>, transform_indices = @transform_2, window_bounds = array<i64: 1, 96>}, {transform_indices = @transform_3, window_bounds = array<i64: 32, 96>}]} {
    %c0 = arith.constant 0 : index
    %c0_0 = arith.constant 0 : index
    %0 = vector.load %arg1[%c0, %c0_0] : memref<32x576xbf16, #tpu.memory_space<vmem>>, vector<32x576xbf16>
    %c0_1 = arith.constant 0 : index
    %c0_2 = arith.constant 0 : index
    %1 = vector.load %arg2[%c0_1, %c0_2] : memref<576x96xbf16, #tpu.memory_space<vmem>>, vector<576x96xbf16>
    %cst = arith.constant dense<0.000000e+00> : vector<32x96xf32>
    %2 = tpu.matmul %0, %1, %cst {dimension_numbers = #tpu.dot_dimension_numbers<[1], [0], [0], [1], [0, 0, 1, 1], [], []>} : vector<32x576xbf16>, vector<576x96xbf16>, vector<32x96xf32> -> vector<32x96xf32>
    %c0_3 = arith.constant 0 : index
    %c0_4 = arith.constant 0 : index
    %3 = vector.load %arg3[%c0_3, %c0_4] : memref<1x96xf32, #tpu.memory_space<vmem>>, vector<1x96xf32>
    %4 = vector.broadcast %3 : vector<1x96xf32> to vector<32x96xf32>
    %5 = arith.addf %2, %4 : vector<32x96xf32>
    %cst_5 = arith.constant 0.000000e+00 : f32
    %6 = vector.broadcast %cst_5 : f32 to vector<32x96xf32>
    %7 = arith.maximumf %5, %6 : vector<32x96xf32>
    %c0_6 = arith.constant 0 : index
    %c0_7 = arith.constant 0 : index
    %8 = vector.load %arg4[%c0_6, %c0_7] : memref<32x96xf32, #tpu.memory_space<vmem>>, vector<32x96xf32>
    tpu.vector_store %arg4[%c0_6, %c0_7], %7 {strides = array<i32>} : memref<32x96xf32, #tpu.memory_space<vmem>>, vector<32x96xf32>,
    return
  }
  func.func @transform_0(%arg0: i32) -> (i32, i32) {
    %c0_i32 = arith.constant 0 : i32
    %c0_i32_0 = arith.constant 0 : i32
    return %arg0, %c0_i32 : i32, i32
  }
  func.func @transform_1(%arg0: i32) -> (i32, i32) {
    %c0_i32 = arith.constant 0 : i32
    %c0_i32_0 = arith.constant 0 : i32
    %c0_i32_1 = arith.constant 0 : i32
    return %c0_i32, %c0_i32_0 : i32, i32
  }
  func.func @transform_2(%arg0: i32) -> (i32, i32) {
    %c0_i32 = arith.constant 0 : i32
    %c0_i32_0 = arith.constant 0 : i32
    %c0_i32_1 = arith.constant 0 : i32
    return %c0_i32, %c0_i32_0 : i32, i32
  }
  func.func @transform_3(%arg0: i32) -> (i32, i32) {
    %c0_i32 = arith.constant 0 : i32
    %c0_i32_0 = arith.constant 0 : i32
    return %arg0, %c0_i32 : i32, i32
  }
}

module attributes {stable_mosaic.version = 11 : i64} {
  func.func @_conv_bn_relu_kernel(%arg0: i32, %arg1: memref<32x160xbf16, #tpu.memory_space<vmem>>, %arg2: memref<160x128xbf16, #tpu.memory_space<vmem>>, %arg3: memref<1x128xf32, #tpu.memory_space<vmem>>, %arg4: memref<32x128xf32, #tpu.memory_space<vmem>>) attributes {dimension_semantics = [#tpu.dimension_semantics<parallel>], iteration_bounds = array<i64: 2>, scalar_prefetch = 0 : i64, scratch_operands = 0 : i64, tpu.core_type = #tpu.core_type<tc>, window_params = [{transform_indices = @transform_0, window_bounds = array<i64: 32, 160>}, {pipeline_mode = #tpu.pipeline_mode<synchronous>, transform_indices = @transform_1, window_bounds = array<i64: 160, 128>}, {pipeline_mode = #tpu.pipeline_mode<synchronous>, transform_indices = @transform_2, window_bounds = array<i64: 1, 128>}, {transform_indices = @transform_3, window_bounds = array<i64: 32, 128>}]} {
    %c0 = arith.constant 0 : index
    %c0_0 = arith.constant 0 : index
    %0 = vector.load %arg1[%c0, %c0_0] : memref<32x160xbf16, #tpu.memory_space<vmem>>, vector<32x160xbf16>
    %c0_1 = arith.constant 0 : index
    %c0_2 = arith.constant 0 : index
    %1 = vector.load %arg2[%c0_1, %c0_2] : memref<160x128xbf16, #tpu.memory_space<vmem>>, vector<160x128xbf16>
    %cst = arith.constant dense<0.000000e+00> : vector<32x128xf32>
    %2 = tpu.matmul %0, %1, %cst {dimension_numbers = #tpu.dot_dimension_numbers<[1], [0], [0], [1], [0, 0, 1, 1], [], []>} : vector<32x160xbf16>, vector<160x128xbf16>, vector<32x128xf32> -> vector<32x128xf32>
    %c0_3 = arith.constant 0 : index
    %c0_4 = arith.constant 0 : index
    %3 = vector.load %arg3[%c0_3, %c0_4] : memref<1x128xf32, #tpu.memory_space<vmem>>, vector<1x128xf32>
    %4 = vector.broadcast %3 : vector<1x128xf32> to vector<32x128xf32>
    %5 = arith.addf %2, %4 : vector<32x128xf32>
    %cst_5 = arith.constant 0.000000e+00 : f32
    %6 = vector.broadcast %cst_5 : f32 to vector<32x128xf32>
    %7 = arith.maximumf %5, %6 : vector<32x128xf32>
    %c0_6 = arith.constant 0 : index
    %c0_7 = arith.constant 0 : index
    %8 = vector.load %arg4[%c0_6, %c0_7] : memref<32x128xf32, #tpu.memory_space<vmem>>, vector<32x128xf32>
    tpu.vector_store %arg4[%c0_6, %c0_7], %7 {strides = array<i32>} : memref<32x128xf32, #tpu.memory_space<vmem>>, vector<32x128xf32>,
    return
  }
  func.func @transform_0(%arg0: i32) -> (i32, i32) {
    %c0_i32 = arith.constant 0 : i32
    %c0_i32_0 = arith.constant 0 : i32
    return %arg0, %c0_i32 : i32, i32
  }
  func.func @transform_1(%arg0: i32) -> (i32, i32) {
    %c0_i32 = arith.constant 0 : i32
    %c0_i32_0 = arith.constant 0 : i32
    %c0_i32_1 = arith.constant 0 : i32
    return %c0_i32, %c0_i32_0 : i32, i32
  }
  func.func @transform_2(%arg0: i32) -> (i32, i32) {
    %c0_i32 = arith.constant 0 : i32
    %c0_i32_0 = arith.constant 0 : i32
    %c0_i32_1 = arith.constant 0 : i32
    return %c0_i32, %c0_i32_0 : i32, i32
  }
  func.func @transform_3(%arg0: i32) -> (i32, i32) {
    %c0_i32 = arith.constant 0 : i32
    %c0_i32_0 = arith.constant 0 : i32
    return %arg0, %c0_i32 : i32, i32
  }
}

module attributes {stable_mosaic.version = 11 : i64} {
  func.func @_conv_bn_relu_kernel(%arg0: i32, %arg1: memref<16x576xbf16, #tpu.memory_space<vmem>>, %arg2: memref<576x96xbf16, #tpu.memory_space<vmem>>, %arg3: memref<1x96xf32, #tpu.memory_space<vmem>>, %arg4: memref<16x96xf32, #tpu.memory_space<vmem>>) attributes {dimension_semantics = [#tpu.dimension_semantics<parallel>], iteration_bounds = array<i64: 2>, scalar_prefetch = 0 : i64, scratch_operands = 0 : i64, tpu.core_type = #tpu.core_type<tc>, window_params = [{transform_indices = @transform_0, window_bounds = array<i64: 16, 576>}, {pipeline_mode = #tpu.pipeline_mode<synchronous>, transform_indices = @transform_1, window_bounds = array<i64: 576, 96>}, {pipeline_mode = #tpu.pipeline_mode<synchronous>, transform_indices = @transform_2, window_bounds = array<i64: 1, 96>}, {transform_indices = @transform_3, window_bounds = array<i64: 16, 96>}]} {
    %c0 = arith.constant 0 : index
    %c0_0 = arith.constant 0 : index
    %0 = vector.load %arg1[%c0, %c0_0] : memref<16x576xbf16, #tpu.memory_space<vmem>>, vector<16x576xbf16>
    %c0_1 = arith.constant 0 : index
    %c0_2 = arith.constant 0 : index
    %1 = vector.load %arg2[%c0_1, %c0_2] : memref<576x96xbf16, #tpu.memory_space<vmem>>, vector<576x96xbf16>
    %cst = arith.constant dense<0.000000e+00> : vector<16x96xf32>
    %2 = tpu.matmul %0, %1, %cst {dimension_numbers = #tpu.dot_dimension_numbers<[1], [0], [0], [1], [0, 0, 1, 1], [], []>} : vector<16x576xbf16>, vector<576x96xbf16>, vector<16x96xf32> -> vector<16x96xf32>
    %c0_3 = arith.constant 0 : index
    %c0_4 = arith.constant 0 : index
    %3 = vector.load %arg3[%c0_3, %c0_4] : memref<1x96xf32, #tpu.memory_space<vmem>>, vector<1x96xf32>
    %4 = vector.broadcast %3 : vector<1x96xf32> to vector<16x96xf32>
    %5 = arith.addf %2, %4 : vector<16x96xf32>
    %cst_5 = arith.constant 0.000000e+00 : f32
    %6 = vector.broadcast %cst_5 : f32 to vector<16x96xf32>
    %7 = arith.maximumf %5, %6 : vector<16x96xf32>
    %c0_6 = arith.constant 0 : index
    %c0_7 = arith.constant 0 : index
    %8 = vector.load %arg4[%c0_6, %c0_7] : memref<16x96xf32, #tpu.memory_space<vmem>>, vector<16x96xf32>
    tpu.vector_store %arg4[%c0_6, %c0_7], %7 {strides = array<i32>} : memref<16x96xf32, #tpu.memory_space<vmem>>, vector<16x96xf32>,
    return
  }
  func.func @transform_0(%arg0: i32) -> (i32, i32) {
    %c0_i32 = arith.constant 0 : i32
    %c0_i32_0 = arith.constant 0 : i32
    return %arg0, %c0_i32 : i32, i32
  }
  func.func @transform_1(%arg0: i32) -> (i32, i32) {
    %c0_i32 = arith.constant 0 : i32
    %c0_i32_0 = arith.constant 0 : i32
    %c0_i32_1 = arith.constant 0 : i32
    return %c0_i32, %c0_i32_0 : i32, i32
  }
  func.func @transform_2(%arg0: i32) -> (i32, i32) {
    %c0_i32 = arith.constant 0 : i32
    %c0_i32_0 = arith.constant 0 : i32
    %c0_i32_1 = arith.constant 0 : i32
    return %c0_i32, %c0_i32_0 : i32, i32
  }
  func.func @transform_3(%arg0: i32) -> (i32, i32) {
    %c0_i32 = arith.constant 0 : i32
    %c0_i32_0 = arith.constant 0 : i32
    return %arg0, %c0_i32 : i32, i32
  }
}

module attributes {stable_mosaic.version = 11 : i64} {
  func.func @_conv_bn_relu_kernel(%arg0: i32, %arg1: memref<32x448xbf16, #tpu.memory_space<vmem>>, %arg2: memref<448x64xbf16, #tpu.memory_space<vmem>>, %arg3: memref<1x64xf32, #tpu.memory_space<vmem>>, %arg4: memref<32x64xf32, #tpu.memory_space<vmem>>) attributes {dimension_semantics = [#tpu.dimension_semantics<parallel>], iteration_bounds = array<i64: 2>, scalar_prefetch = 0 : i64, scratch_operands = 0 : i64, tpu.core_type = #tpu.core_type<tc>, window_params = [{transform_indices = @transform_0, window_bounds = array<i64: 32, 448>}, {pipeline_mode = #tpu.pipeline_mode<synchronous>, transform_indices = @transform_1, window_bounds = array<i64: 448, 64>}, {pipeline_mode = #tpu.pipeline_mode<synchronous>, transform_indices = @transform_2, window_bounds = array<i64: 1, 64>}, {transform_indices = @transform_3, window_bounds = array<i64: 32, 64>}]} {
    %c0 = arith.constant 0 : index
    %c0_0 = arith.constant 0 : index
    %0 = vector.load %arg1[%c0, %c0_0] : memref<32x448xbf16, #tpu.memory_space<vmem>>, vector<32x448xbf16>
    %c0_1 = arith.constant 0 : index
    %c0_2 = arith.constant 0 : index
    %1 = vector.load %arg2[%c0_1, %c0_2] : memref<448x64xbf16, #tpu.memory_space<vmem>>, vector<448x64xbf16>
    %cst = arith.constant dense<0.000000e+00> : vector<32x64xf32>
    %2 = tpu.matmul %0, %1, %cst {dimension_numbers = #tpu.dot_dimension_numbers<[1], [0], [0], [1], [0, 0, 1, 1], [], []>} : vector<32x448xbf16>, vector<448x64xbf16>, vector<32x64xf32> -> vector<32x64xf32>
    %c0_3 = arith.constant 0 : index
    %c0_4 = arith.constant 0 : index
    %3 = vector.load %arg3[%c0_3, %c0_4] : memref<1x64xf32, #tpu.memory_space<vmem>>, vector<1x64xf32>
    %4 = vector.broadcast %3 : vector<1x64xf32> to vector<32x64xf32>
    %5 = arith.addf %2, %4 : vector<32x64xf32>
    %cst_5 = arith.constant 0.000000e+00 : f32
    %6 = vector.broadcast %cst_5 : f32 to vector<32x64xf32>
    %7 = arith.maximumf %5, %6 : vector<32x64xf32>
    %c0_6 = arith.constant 0 : index
    %c0_7 = arith.constant 0 : index
    %8 = vector.load %arg4[%c0_6, %c0_7] : memref<32x64xf32, #tpu.memory_space<vmem>>, vector<32x64xf32>
    tpu.vector_store %arg4[%c0_6, %c0_7], %7 {strides = array<i32>} : memref<32x64xf32, #tpu.memory_space<vmem>>, vector<32x64xf32>,
    return
  }
  func.func @transform_0(%arg0: i32) -> (i32, i32) {
    %c0_i32 = arith.constant 0 : i32
    %c0_i32_0 = arith.constant 0 : i32
    return %arg0, %c0_i32 : i32, i32
  }
  func.func @transform_1(%arg0: i32) -> (i32, i32) {
    %c0_i32 = arith.constant 0 : i32
    %c0_i32_0 = arith.constant 0 : i32
    %c0_i32_1 = arith.constant 0 : i32
    return %c0_i32, %c0_i32_0 : i32, i32
  }
  func.func @transform_2(%arg0: i32) -> (i32, i32) {
    %c0_i32 = arith.constant 0 : i32
    %c0_i32_0 = arith.constant 0 : i32
    %c0_i32_1 = arith.constant 0 : i32
    return %c0_i32, %c0_i32_0 : i32, i32
  }
  func.func @transform_3(%arg0: i32) -> (i32, i32) {
    %c0_i32 = arith.constant 0 : i32
    %c0_i32_0 = arith.constant 0 : i32
    return %arg0, %c0_i32 : i32, i32
  }
}

module attributes {stable_mosaic.version = 11 : i64} {
  func.func @_max3_kernel(%arg0: i32, %arg1: memref<8x192xf32, #tpu.memory_space<vmem>>, %arg2: memref<8x192xf32, #tpu.memory_space<vmem>>, %arg3: memref<8x192xf32, #tpu.memory_space<vmem>>, %arg4: memref<8x192xf32, #tpu.memory_space<vmem>>) attributes {dimension_semantics = [#tpu.dimension_semantics<parallel>], iteration_bounds = array<i64: 1>, scalar_prefetch = 0 : i64, scratch_operands = 0 : i64, tpu.core_type = #tpu.core_type<tc>, window_params = [{transform_indices = @transform_0, window_bounds = array<i64: 8, 192>}, {transform_indices = @transform_1, window_bounds = array<i64: 8, 192>}, {transform_indices = @transform_2, window_bounds = array<i64: 8, 192>}, {transform_indices = @transform_3, window_bounds = array<i64: 8, 192>}]} {
    %c0 = arith.constant 0 : index
    %c0_0 = arith.constant 0 : index
    %0 = vector.load %arg1[%c0, %c0_0] : memref<8x192xf32, #tpu.memory_space<vmem>>, vector<8x192xf32>
    %c0_1 = arith.constant 0 : index
    %c0_2 = arith.constant 0 : index
    %1 = vector.load %arg2[%c0_1, %c0_2] : memref<8x192xf32, #tpu.memory_space<vmem>>, vector<8x192xf32>
    %2 = arith.maximumf %0, %1 : vector<8x192xf32>
    %c0_3 = arith.constant 0 : index
    %c0_4 = arith.constant 0 : index
    %3 = vector.load %arg3[%c0_3, %c0_4] : memref<8x192xf32, #tpu.memory_space<vmem>>, vector<8x192xf32>
    %4 = arith.maximumf %2, %3 : vector<8x192xf32>
    %c0_5 = arith.constant 0 : index
    %c0_6 = arith.constant 0 : index
    %5 = vector.load %arg4[%c0_5, %c0_6] : memref<8x192xf32, #tpu.memory_space<vmem>>, vector<8x192xf32>
    tpu.vector_store %arg4[%c0_5, %c0_6], %4 {strides = array<i32>} : memref<8x192xf32, #tpu.memory_space<vmem>>, vector<8x192xf32>,
    return
  }
  func.func @transform_0(%arg0: i32) -> (i32, i32) {
    %c0_i32 = arith.constant 0 : i32
    %c0_i32_0 = arith.constant 0 : i32
    return %arg0, %c0_i32 : i32, i32
  }
  func.func @transform_1(%arg0: i32) -> (i32, i32) {
    %c0_i32 = arith.constant 0 : i32
    %c0_i32_0 = arith.constant 0 : i32
    return %arg0, %c0_i32 : i32, i32
  }
  func.func @transform_2(%arg0: i32) -> (i32, i32) {
    %c0_i32 = arith.constant 0 : i32
    %c0_i32_0 = arith.constant 0 : i32
    return %arg0, %c0_i32 : i32, i32
  }
  func.func @transform_3(%arg0: i32) -> (i32, i32) {
    %c0_i32 = arith.constant 0 : i32
    %c0_i32_0 = arith.constant 0 : i32
    return %arg0, %c0_i32 : i32, i32
  }
}

module attributes {stable_mosaic.version = 11 : i64} {
  func.func @_conv_bn_relu_kernel(%arg0: i32, %arg1: memref<8x1728xbf16, #tpu.memory_space<vmem>>, %arg2: memref<1728x192xbf16, #tpu.memory_space<vmem>>, %arg3: memref<1x192xf32, #tpu.memory_space<vmem>>, %arg4: memref<8x192xf32, #tpu.memory_space<vmem>>) attributes {dimension_semantics = [#tpu.dimension_semantics<parallel>], iteration_bounds = array<i64: 1>, scalar_prefetch = 0 : i64, scratch_operands = 0 : i64, tpu.core_type = #tpu.core_type<tc>, window_params = [{transform_indices = @transform_0, window_bounds = array<i64: 8, 1728>}, {pipeline_mode = #tpu.pipeline_mode<synchronous>, transform_indices = @transform_1, window_bounds = array<i64: 1728, 192>}, {pipeline_mode = #tpu.pipeline_mode<synchronous>, transform_indices = @transform_2, window_bounds = array<i64: 1, 192>}, {transform_indices = @transform_3, window_bounds = array<i64: 8, 192>}]} {
    %c0 = arith.constant 0 : index
    %c0_0 = arith.constant 0 : index
    %0 = vector.load %arg1[%c0, %c0_0] : memref<8x1728xbf16, #tpu.memory_space<vmem>>, vector<8x1728xbf16>
    %c0_1 = arith.constant 0 : index
    %c0_2 = arith.constant 0 : index
    %1 = vector.load %arg2[%c0_1, %c0_2] : memref<1728x192xbf16, #tpu.memory_space<vmem>>, vector<1728x192xbf16>
    %cst = arith.constant dense<0.000000e+00> : vector<8x192xf32>
    %2 = tpu.matmul %0, %1, %cst {dimension_numbers = #tpu.dot_dimension_numbers<[1], [0], [0], [1], [0, 0, 1, 1], [], []>} : vector<8x1728xbf16>, vector<1728x192xbf16>, vector<8x192xf32> -> vector<8x192xf32>
    %c0_3 = arith.constant 0 : index
    %c0_4 = arith.constant 0 : index
    %3 = vector.load %arg3[%c0_3, %c0_4] : memref<1x192xf32, #tpu.memory_space<vmem>>, vector<1x192xf32>
    %4 = vector.broadcast %3 : vector<1x192xf32> to vector<8x192xf32>
    %5 = arith.addf %2, %4 : vector<8x192xf32>
    %cst_5 = arith.constant 0.000000e+00 : f32
    %6 = vector.broadcast %cst_5 : f32 to vector<8x192xf32>
    %7 = arith.maximumf %5, %6 : vector<8x192xf32>
    %c0_6 = arith.constant 0 : index
    %c0_7 = arith.constant 0 : index
    %8 = vector.load %arg4[%c0_6, %c0_7] : memref<8x192xf32, #tpu.memory_space<vmem>>, vector<8x192xf32>
    tpu.vector_store %arg4[%c0_6, %c0_7], %7 {strides = array<i32>} : memref<8x192xf32, #tpu.memory_space<vmem>>, vector<8x192xf32>,
    return
  }
  func.func @transform_0(%arg0: i32) -> (i32, i32) {
    %c0_i32 = arith.constant 0 : i32
    %c0_i32_0 = arith.constant 0 : i32
    return %arg0, %c0_i32 : i32, i32
  }
  func.func @transform_1(%arg0: i32) -> (i32, i32) {
    %c0_i32 = arith.constant 0 : i32
    %c0_i32_0 = arith.constant 0 : i32
    %c0_i32_1 = arith.constant 0 : i32
    return %c0_i32, %c0_i32_0 : i32, i32
  }
  func.func @transform_2(%arg0: i32) -> (i32, i32) {
    %c0_i32 = arith.constant 0 : i32
    %c0_i32_0 = arith.constant 0 : i32
    %c0_i32_1 = arith.constant 0 : i32
    return %c0_i32, %c0_i32_0 : i32, i32
  }
  func.func @transform_3(%arg0: i32) -> (i32, i32) {
    %c0_i32 = arith.constant 0 : i32
    %c0_i32_0 = arith.constant 0 : i32
    return %arg0, %c0_i32 : i32, i32
  }
}

</mosaic_0001>

<llo_original>
// kernel: stem_forward.12
$region0: #{stem_forward.12}
  #allocation0 [shape = 'u32[]', space=smem, size = 0x4, offset = 0x4, fixed_abs, tag = 'smem constant byte address 0x4 - core index']
  #allocation1 [shape = 'u32[144,128]{1,0:T(1,128)}', space=vmem, size = 0x12000, scoped, tag = 'internal scratch']
  %s0 = inlined_call_operand.vmem [shape: bf16[352,18], index: 0, kind: input, shape index: {}]
  %s1 = inlined_call_operand.vmem [shape: bf16[18,32], index: 1, kind: input, shape index: {}]
  %s2 = inlined_call_operand.vmem [shape: f32[1,32], index: 2, kind: input, shape index: {}]
  %s3 = inlined_call_operand.vmem [shape: f32[352,32], index: 3, kind: output, shape index: {}]
  %s4 = sld [smem:[#allocation0]]
  $region45: #{stem_forward.12} parent=0
    _
  %s6 = ssub.s32 1, %s4
  %s7 = scalar_select 0, %s6, %s4
  loop: start=0, step=1, limit=4
  $region2: #{stem_forward.12} parent=0 // loop_pre_header
    _
  $region3: #{stem_forward.12} parent=0 // loop_header
    %s9 = sphi 0, %s13
    %p10 = scmp.ge.s32.totalorder %s9, 4
    %s19 = sphi 0, %s21
    %s22 = sphi 0, %s19
    %s23 = sphi 0, %s22
    %s39 = sphi 0, %s23
    %s43 = sphi 0, %s43
    %s45 = sphi 0, %s43
    %s46 = sphi 0, %s45
    %s60 = sphi 0, %s46
    %s64 = sphi 0, %s64
    %s66 = sphi 0, %s64
    %s67 = sphi 0, %s66
    %s81 = sphi 0, %s67
    %s87 = sphi 0, %s89
    %s90 = sphi 0, %s87
    %s91 = sphi 0, %s90
    %s107 = sphi 0, %s91
  $region4: #{stem_forward.12} parent=0 // loop_header_branch
    %12 = sbr.rel (%p10) target = $region8
  $region5: #{stem_forward.12} parent=0 // loop_body
    %s14 = ssub.s32 %s9, 1
    %s15 = ssub.s32 %s9, 2
    %s16 = sadd.s32 %s9, 1
    %s17 = ssub.s32 %s9, %s16
    %p18 = scmp.eq.s32.totalorder %s17, 0
    %s20 = sadd.s32 %s19, 1
    %s21 = scalar_select %p18, %s19, %s20
    %p24 = pneg %p18
    %p25 = scmp.eq.s32.totalorder %s9, 1
    %p26 = por %p24, %p25
    %p27 = scmp.ne.s32.totalorder %s19, %s22
    %p28 = scmp.eq.s32.totalorder %s9, 0
    %p29 = por %p27, %p28
    %p30 = scmp.ne.s32.totalorder %s19, %s22
    %p31 = scmp.eq.s32.totalorder %s14, 1
    %p32 = por %p30, %p31
    %p33 = scmp.ne.s32.totalorder %s22, %s23
    %p34 = scmp.eq.s32.totalorder %s14, 0
    %p35 = por %p33, %p34
    %p36 = scmp.ne.s32.totalorder %s22, %s23
    %p37 = scmp.eq.s32.totalorder %s15, 1
    %p38 = por %p36, %p37
    %p40 = scmp.ne.s32.totalorder %s23, %s39
    %p41 = scmp.eq.s32.totalorder %s15, 0
    %p42 = por %p40, %p41
    %s44 = sadd.s32 %s43, 1
    %p47 = scmp.eq.s32.totalorder %s9, 1
    %p48 = scmp.ne.s32.totalorder %s43, %s45
    %p49 = scmp.eq.s32.totalorder %s9, 0
    %p50 = por %p48, %p49
    %p51 = scmp.ne.s32.totalorder %s43, %s45
    %p52 = scmp.eq.s32.totalorder %s14, 1
    %p53 = por %p51, %p52
    %p54 = scmp.ne.s32.totalorder %s45, %s46
    %p55 = scmp.eq.s32.totalorder %s14, 0
    %p56 = por %p54, %p55
    %p57 = scmp.ne.s32.totalorder %s45, %s46
    %p58 = scmp.eq.s32.totalorder %s15, 1
    %p59 = por %p57, %p58
    %p61 = scmp.ne.s32.totalorder %s46, %s60
    %p62 = scmp.eq.s32.totalorder %s15, 0
    %p63 = por %p61, %p62
    %s65 = sadd.s32 %s64, 1
    %p68 = scmp.eq.s32.totalorder %s9, 1
    %p69 = scmp.ne.s32.totalorder %s64, %s66
    %p70 = scmp.eq.s32.totalorder %s9, 0
    %p71 = por %p69, %p70
    %p72 = scmp.ne.s32.totalorder %s64, %s66
    %p73 = scmp.eq.s32.totalorder %s14, 1
    %p74 = por %p72, %p73
    %p75 = scmp.ne.s32.totalorder %s66, %s67
    %p76 = scmp.eq.s32.totalorder %s14, 0
    %p77 = por %p75, %p76
    %p78 = scmp.ne.s32.totalorder %s66, %s67
    %p79 = scmp.eq.s32.totalorder %s15, 1
    %p80 = por %p78, %p79
    %p82 = scmp.ne.s32.totalorder %s67, %s81
    %p83 = scmp.eq.s32.totalorder %s15, 0
    %p84 = por %p82, %p83
    %s85 = ssub.s32 %s9, %s16
    %p86 = scmp.eq.s32.totalorder %s85, 0
    %s88 = sadd.s32 %s87, 1
    %s89 = scalar_select %p86, %s87, %s88
    %p92 = pneg %p86
    %p93 = scmp.eq.s32.totalorder %s9, 1
    %p94 = por %p92, %p93
    %p95 = scmp.ne.s32.totalorder %s87, %s90
    %p96 = scmp.eq.s32.totalorder %s9, 0
    %p97 = por %p95, %p96
    %p98 = scmp.ne.s32.totalorder %s87, %s90
    %p99 = scmp.eq.s32.totalorder %s14, 1
    %p100 = por %p98, %p99
    %p101 = scmp.ne.s32.totalorder %s90, %s91
    %p102 = scmp.eq.s32.totalorder %s14, 0
    %p103 = por %p101, %p102
    %p104 = scmp.ne.s32.totalorder %s90, %s91
    %p105 = scmp.eq.s32.totalorder %s15, 1
    %p106 = por %p104, %p105
    %p108 = scmp.ne.s32.totalorder %s91, %s107
    %p109 = scmp.eq.s32.totalorder %s15, 0
    %p110 = por %p108, %p109
    %p111 = scmp.le.s32.totalorder 1, %s9
    %p112 = scmp.lt.s32.totalorder %s9, 3
    %p113 = pnand %p111, %p112
    %p114 = pneg %p113
    // Predicated region
    $region9: #{stem_forward.12} parent=5 // pred_check
      _
    $region10: #{stem_forward.12} parent=5 // pred_check_branch
      %116 = sbr.rel (%p113) target = $region12
    $region11: #{stem_forward.12} parent=5 // pred_region
      %s117 = ssub.s32 %s9, 1
      // Predicated region
      $region13: #{stem_forward.12} parent=11 // pred_check
        %p118 = pneg %p56
      $region14: #{stem_forward.12} parent=11 // pred_check_branch
        %120 = sbr.rel (%p118) target = $region16
      $region15: #{stem_forward.12} parent=11 // pred_region
        _
      $region16: #{stem_forward.12} parent=11 // pred_fallthru
        _
      // Predicated region
      $region17: #{stem_forward.12} parent=11 // pred_check
        %p121 = pneg %p77
      $region18: #{stem_forward.12} parent=11 // pred_check_branch
        %123 = sbr.rel (%p121) target = $region20
      $region19: #{stem_forward.12} parent=11 // pred_region
        _
      $region20: #{stem_forward.12} parent=11 // pred_fallthru
        _
    $region12: #{stem_forward.12} parent=5 // pred_fallthru
      _
    %p124 = scmp.lt.s32.totalorder %s9, 2
    // Predicated region
    $region21: #{stem_forward.12} parent=5 // pred_check
      %p125 = pneg %p124
    $region22: #{stem_forward.12} parent=5 // pred_check_branch
      %127 = sbr.rel (%p125) target = $region24
    $region23: #{stem_forward.12} parent=5 // pred_region
      // Predicated region
      $region25: #{stem_forward.12} parent=23 // pred_check
        %p128 = pneg %p29
      $region26: #{stem_forward.12} parent=23 // pred_check_branch
        %130 = sbr.rel (%p128) target = $region28
      $region27: #{stem_forward.12} parent=23 // pred_region
        %s131 = smul.u32 22, %s9
        %p132 = scmp.lt.s32.totalorder %s131, 43
        %s133 = scalar_select %p132, %s131, 43
        %s134 = smul.addr %s133, 4
        %s135 = scalar_lea.vmem %s0, %s134
        %s136 = smul.u32 22, %s9
      $region28: #{stem_forward.12} parent=23 // pred_fallthru
        _
    $region24: #{stem_forward.12} parent=5 // pred_fallthru
      _
    %p137 = scmp.le.s32.totalorder 1, %s9
    %p138 = scmp.lt.s32.totalorder %s9, 3
    %p139 = pnand %p137, %p138
    %p140 = pneg %p139
    // Predicated region
    $region29: #{stem_forward.12} parent=5 // pred_check
      _
    $region30: #{stem_forward.12} parent=5 // pred_check_branch
      %142 = sbr.rel (%p139) target = $region32
    $region31: #{stem_forward.12} parent=5 // pred_region
      %s143 = ssub.s32 %s9, 1
      %s144 = smul.u32 22, %s14
      %p145 = scmp.lt.s32.totalorder %s144, 43
      %s146 = scalar_select %p145, %s144, 43
      %s147 = smul.addr %s146, 4
      %s148 = scalar_lea.vmem %s0, %s147
      %p149 = pneg %p35
      %p150 = pneg %p32
      %p151 = pneg %p56
      %p152 = pneg %p53
      %p153 = pneg %p77
      %p154 = pneg %p74
      %p155 = pneg %p103
      %p156 = pneg %p100
      %s157 = smul.u32 22, %s14
      %p158 = scmp.lt.s32.totalorder %s157, 43
      %s159 = scalar_select %p158, %s157, 43
      %s160 = smul.addr %s159, 8
      %s161 = scalar_lea.vmem %s3, %s160
      %s162 = smul.u32 22, %s14
      %p163 = scmp.lt.s32.totalorder %s162, 43
      %s164 = scalar_select %p163, %s162, 43
      %s165 = smul.addr %s164, 4
      %s166 = scalar_lea.vmem %s0, %s165
      %s167 = smul.u32 22, %s14
      %s168 = smul.u32 22, %s14
      %p169 = scmp.lt.s32.totalorder %s168, 43
      %s170 = scalar_select %p169, %s168, 43
      %s171 = smul.addr %s170, 8
      %s172 = scalar_lea.vmem %s3, %s171
      %s173 = smul.u32 22, %s14
      %v175 = vld [vmem:[%s166] sm:$0xf]
      %v176 = vld [vmem:[%s166 + $0x4] sm:$0xf]
      %v177 = vld [vmem:[%s166 + $0x8] sm:$0xf]
      %v178 = vld [vmem:[%s166 + $0xc] sm:$0xf]
      %v179 = vld [vmem:[%s166 + $0x10] sm:$0xf]
      %v180 = vld [vmem:[%s166 + $0x14] sm:$0xf]
      %v181 = vld [vmem:[%s166 + $0x18] sm:$0xf]
      %v182 = vld [vmem:[%s166 + $0x1c] sm:$0xf]
      %v183 = vld [vmem:[%s166 + $0x20] sm:$0xf]
      %v184 = vld [vmem:[%s166 + $0x24] sm:$0xf]
      %v185 = vld [vmem:[%s166 + $0x28] sm:$0xf]
      %v186 = vld [vmem:[%s166 + $0x2c] sm:$0xf]
      %v187 = vld [vmem:[%s166 + $0x30] sm:$0xf]
      %v188 = vld [vmem:[%s166 + $0x34] sm:$0xf]
      %v189 = vld [vmem:[%s166 + $0x38] sm:$0xf]
      %v190 = vld [vmem:[%s166 + $0x3c] sm:$0xf]
      %v191 = vld [vmem:[%s166 + $0x40] sm:$0xf]
      %v192 = vld [vmem:[%s166 + $0x44] sm:$0xf]
      %v193 = vld [vmem:[%s166 + $0x48] sm:$0xf]
      %v194 = vld [vmem:[%s166 + $0x4c] sm:$0xf]
      %v195 = vld [vmem:[%s166 + $0x50] sm:$0xf]
      %v196 = vld [vmem:[%s166 + $0x54] sm:$0xf]
      %v197 = vld [vmem:[%s1] sm:$0xf]
      %v198 = vld [vmem:[%s1 + $0x4] sm:$0xf]
      %v199 = vld [vmem:[%s1 + $0x8] sm:$0x1]
      %v200 = vld [vmem:[%s2] sm:$0x1]
      %v202 = vlaneseq
      %v203 = vshrl.u32 %v202, 7
      %v204 = vsub.s32 0, %v203
      %v205 = vrot.slane %v200, %v204
      %v229 = vunpack.c.l.b16 %v175
      %v230 = vunpack.c.l.b16 %v176
      %v231 = vunpack.c.l.b16 %v177
      %v232 = vunpack.c.l.b16 %v178
      %v233 = vunpack.c.l.b16 %v179
      %v234 = vunpack.c.l.b16 %v180
      %v235 = vunpack.c.l.b16 %v181
      %v236 = vunpack.c.l.b16 %v182
      %v237 = vunpack.c.l.b16 %v183
      %v238 = vunpack.c.l.b16 %v184
      %v239 = vunpack.c.l.b16 %v185
      %v240 = vunpack.c.l.b16 %v186
      %v241 = vunpack.c.l.b16 %v187
      %v242 = vunpack.c.l.b16 %v188
      %v243 = vunpack.c.l.b16 %v189
      %v244 = vunpack.c.l.b16 %v190
      %v245 = vunpack.c.l.b16 %v191
      %v246 = vunpack.c.l.b16 %v192
      %v247 = vunpack.c.l.b16 %v193
      %v248 = vunpack.c.l.b16 %v194
      %v249 = vunpack.c.l.b16 %v195
      %v250 = vunpack.c.l.b16 %v196
      %v251 = vpack.c.b16 %v230, %v229
      %v252 = vpack.c.b16 %v232, %v231
      %v253 = vpack.c.b16 %v234, %v233
      %v254 = vpack.c.b16 %v236, %v235
      %v255 = vpack.c.b16 %v238, %v237
      %v256 = vpack.c.b16 %v240, %v239
      %v257 = vpack.c.b16 %v242, %v241
      %v258 = vpack.c.b16 %v244, %v243
      %v259 = vpack.c.b16 %v246, %v245
      %v260 = vpack.c.b16 %v248, %v247
      %v261 = vpack.c.b16 %v250, %v249
      %v265 = vunpack.c.l.b16 %v197
      %v266 = vunpack.c.l.b16 %v198
      %v267 = vunpack.c.l.b16 %v199
      %v268 = vpack.c.b16 %v266, %v265
      %v269 = vpack.c.b16 %v267, %v267
      %vm271 = vcmask 146432
      %v273 = vsel %vm271, %v251, 0
      %v276 = vsel %vm271, %v252, 0
      %v279 = vsel %vm271, %v253, 0
      %v282 = vsel %vm271, %v254, 0
      %v285 = vsel %vm271, %v255, 0
      %v288 = vsel %vm271, %v256, 0
      %v291 = vsel %vm271, %v257, 0
      %v294 = vsel %vm271, %v258, 0
      %v297 = vsel %vm271, %v259, 0
      %v300 = vsel %vm271, %v260, 0
      %v303 = vsel %vm271, %v261, 0
      %vm305 = vcmask 1040384
      %v307 = vsel %vm305, %v269, 0
      %309 = vmatprep.subr.bf16.mxu0 0
      %310 = vmatpush1.bf16.msra.mxu0 0
      %311 = vmatprep.subr.bf16.mxu0 0
      %312 = vmatpush1.bf16.msra.mxu0 0
      %313 = vmatprep.subr.bf16.mxu0 0
      %314 = vmatpush1.bf16.msra.mxu0 0
      %315 = vmatprep.subr.bf16.mxu0 0
      %316 = vmatpush1.bf16.msra.mxu0 0
      %317 = vmatprep.subr.bf16.mxu0 0
      %318 = vmatpush1.bf16.msra.mxu0 0
      %319 = vmatprep.subr.bf16.mxu0 0
      %320 = vmatpush1.bf16.msra.mxu0 0
      %321 = vmatprep.subr.bf16.mxu0 0
      %322 = vmatpush1.bf16.msra.mxu0 %v307
      %323 = vmatprep.subr.bf16.mxu0 0
      %324 = vmatpush1.bf16.msra.mxu0 %v268
      %325 = vmatprep.subr.bf16.mxu0 0
      %326 = vmatpush2.bf16.msra.mxu0 0
      %327 = vmatprep.subr.bf16.mxu0 0
      %328 = vmatpush2.bf16.msra.mxu0 0
      %329 = vmatprep.subr.bf16.mxu0 0
      %330 = vmatpush2.bf16.msra.mxu0 0
      %331 = vmatprep.subr.bf16.mxu0 0
      %332 = vmatpush2.bf16.msra.mxu0 0
      %333 = vmatprep.subr.bf16.mxu0 0
      %334 = vmatpush2.bf16.msra.mxu0 0
      %335 = vmatprep.subr.bf16.mxu0 0
      %336 = vmatpush2.bf16.msra.mxu0 0
      %337 = vmatprep.subr.bf16.mxu0 0
      %338 = vmatpush2.bf16.msra.mxu0 0
      %339 = vmatprep.subr.bf16.mxu0 0
      %340 = vmatpush2.bf16.msra.mxu0 0
      %341 = vmatprep.mubr.bf16.mxu0 0
      %342 = vmatmul.mubr.bf16.gmra.mxu0 %v273
      %v343 = vpop.f32.mrf.mxu0
      %v344 = vadd.f32 %v205, %v343
      %v345 = vpop.f32.mrf.mxu0
      %v346 = vpop.f32.mrf.mxu0
      %v347 = vadd.f32 %v205, %v346
      %v348 = vpop.f32.mrf.mxu0
      %349 = vmatprep.mubr.bf16.mxu0 0
      %350 = vmatmul.mubr.bf16.gmra.mxu0 %v276
      %v351 = vpop.f32.mrf.mxu0
      %v352 = vadd.f32 %v205, %v351
      %v353 = vpop.f32.mrf.mxu0
      %v354 = vpop.f32.mrf.mxu0
      %v355 = vadd.f32 %v205, %v354
      %v356 = vpop.f32.mrf.mxu0
      %357 = vmatprep.mubr.bf16.mxu0 0
      %358 = vmatmul.mubr.bf16.gmra.mxu0 %v279
      %v359 = vpop.f32.mrf.mxu0
      %v360 = vadd.f32 %v205, %v359
      %v361 = vpop.f32.mrf.mxu0
      %v362 = vpop.f32.mrf.mxu0
      %v363 = vadd.f32 %v205, %v362
      %v364 = vpop.f32.mrf.mxu0
      %365 = vmatprep.mubr.bf16.mxu0 0
      %366 = vmatmul.mubr.bf16.gmra.mxu0 %v282
      %v367 = vpop.f32.mrf.mxu0
      %v368 = vadd.f32 %v205, %v367
      %v369 = vpop.f32.mrf.mxu0
      %v370 = vpop.f32.mrf.mxu0
      %v371 = vadd.f32 %v205, %v370
      %v372 = vpop.f32.mrf.mxu0
      %373 = vmatprep.mubr.bf16.mxu0 0
      %374 = vmatmul.mubr.bf16.gmra.mxu0 %v285
      %v375 = vpop.f32.mrf.mxu0
      %v376 = vadd.f32 %v205, %v375
      %v377 = vpop.f32.mrf.mxu0
      %v378 = vpop.f32.mrf.mxu0
      %v379 = vadd.f32 %v205, %v378
      %v380 = vpop.f32.mrf.mxu0
      %381 = vmatprep.mubr.bf16.mxu0 0
      %382 = vmatmul.mubr.bf16.gmra.mxu0 %v288
      %v383 = vpop.f32.mrf.mxu0
      %v384 = vadd.f32 %v205, %v383
      %v385 = vpop.f32.mrf.mxu0
      %v386 = vpop.f32.mrf.mxu0
      %v387 = vadd.f32 %v205, %v386
      %v388 = vpop.f32.mrf.mxu0
      %389 = vmatprep.mubr.bf16.mxu0 0
      %390 = vmatmul.mubr.bf16.gmra.mxu0 %v291
      %v391 = vpop.f32.mrf.mxu0
      %v392 = vadd.f32 %v205, %v391
      %v393 = vpop.f32.mrf.mxu0
      %v394 = vpop.f32.mrf.mxu0
      %v395 = vadd.f32 %v205, %v394
      %v396 = vpop.f32.mrf.mxu0
      %397 = vmatprep.mubr.bf16.mxu0 0
      %398 = vmatmul.mubr.bf16.gmra.mxu0 %v294
      %v399 = vpop.f32.mrf.mxu0
      %v400 = vadd.f32 %v205, %v399
      %v401 = vpop.f32.mrf.mxu0
      %v402 = vpop.f32.mrf.mxu0
      %v403 = vadd.f32 %v205, %v402
      %v404 = vpop.f32.mrf.mxu0
      %405 = vmatprep.mubr.bf16.mxu0 0
      %406 = vmatmul.mubr.bf16.gmra.mxu0 %v297
      %v407 = vpop.f32.mrf.mxu0
      %v408 = vadd.f32 %v205, %v407
      %v409 = vpop.f32.mrf.mxu0
      %v410 = vpop.f32.mrf.mxu0
      %v411 = vadd.f32 %v205, %v410
      %v412 = vpop.f32.mrf.mxu0
      %413 = vmatprep.mubr.bf16.mxu0 0
      %414 = vmatmul.mubr.bf16.gmra.mxu0 %v300
      %v415 = vpop.f32.mrf.mxu0
      %v416 = vadd.f32 %v205, %v415
      %v417 = vpop.f32.mrf.mxu0
      %v418 = vpop.f32.mrf.mxu0
      %v419 = vadd.f32 %v205, %v418
      %v420 = vpop.f32.mrf.mxu0
      %421 = vmatprep.mubr.bf16.mxu0 0
      %422 = vmatmul.mubr.bf16.gmra.mxu0 %v303
      %v423 = vpop.f32.mrf.mxu0
      %v424 = vadd.f32 %v205, %v423
      %v425 = vpop.f32.mrf.mxu0
      %v426 = vpop.f32.mrf.mxu0
      %v427 = vadd.f32 %v205, %v426
      %v428 = vpop.f32.mrf.mxu0
      %429 = vdwg.mxu0
      %v430 = vmax.f32 %v344, 0.0
      %v431 = vmax.f32 %v347, 0.0
      %v432 = vmax.f32 %v352, 0.0
      %v433 = vmax.f32 %v355, 0.0
      %v434 = vmax.f32 %v360, 0.0
      %v435 = vmax.f32 %v363, 0.0
      %v436 = vmax.f32 %v368, 0.0
      %v437 = vmax.f32 %v371, 0.0
      %v438 = vmax.f32 %v376, 0.0
      %v439 = vmax.f32 %v379, 0.0
      %v440 = vmax.f32 %v384, 0.0
      %v441 = vmax.f32 %v387, 0.0
      %v442 = vmax.f32 %v392, 0.0
      %v443 = vmax.f32 %v395, 0.0
      %v444 = vmax.f32 %v400, 0.0
      %v445 = vmax.f32 %v403, 0.0
      %v446 = vmax.f32 %v408, 0.0
      %v447 = vmax.f32 %v411, 0.0
      %v448 = vmax.f32 %v416, 0.0
      %v449 = vmax.f32 %v419, 0.0
      %v450 = vmax.f32 %v424, 0.0
      %v451 = vmax.f32 %v427, 0.0
      %vm452 = vcmask 261120
      %453 = vst.msk [vmem:[%s172] sm:$0xff] %vm452, %v430
      %454 = vst.msk [vmem:[%s172 + $0x8] sm:$0xff] %vm452, %v431
      %455 = vst.msk [vmem:[%s172 + $0x10] sm:$0xff] %vm452, %v432
      %456 = vst.msk [vmem:[%s172 + $0x18] sm:$0xff] %vm452, %v433
      %457 = vst.msk [vmem:[%s172 + $0x20] sm:$0xff] %vm452, %v434
      %458 = vst.msk [vmem:[%s172 + $0x28] sm:$0xff] %vm452, %v435
      %459 = vst.msk [vmem:[%s172 + $0x30] sm:$0xff] %vm452, %v436
      %460 = vst.msk [vmem:[%s172 + $0x38] sm:$0xff] %vm452, %v437
      %461 = vst.msk [vmem:[%s172 + $0x40] sm:$0xff] %vm452, %v438
      %462 = vst.msk [vmem:[%s172 + $0x48] sm:$0xff] %vm452, %v439
      %463 = vst.msk [vmem:[%s172 + $0x50] sm:$0xff] %vm452, %v440
      %464 = vst.msk [vmem:[%s172 + $0x58] sm:$0xff] %vm452, %v441
      %465 = vst.msk [vmem:[%s172 + $0x60] sm:$0xff] %vm452, %v442
      %466 = vst.msk [vmem:[%s172 + $0x68] sm:$0xff] %vm452, %v443
      %467 = vst.msk [vmem:[%s172 + $0x70] sm:$0xff] %vm452, %v444
      %468 = vst.msk [vmem:[%s172 + $0x78] sm:$0xff] %vm452, %v445
      %469 = vst.msk [vmem:[%s172 + $0x80] sm:$0xff] %vm452, %v446
      %470 = vst.msk [vmem:[%s172 + $0x88] sm:$0xff] %vm452, %v447
      %471 = vst.msk [vmem:[%s172 + $0x90] sm:$0xff] %vm452, %v448
      %472 = vst.msk [vmem:[%s172 + $0x98] sm:$0xff] %vm452, %v449
      %473 = vst.msk [vmem:[%s172 + $0xa0] sm:$0xff] %vm452, %v450
      %474 = vst.msk [vmem:[%s172 + $0xa8] sm:$0xff] %vm452, %v451
      %s475 = smul.u32 22, %s14
      %p476 = scmp.lt.s32.totalorder %s475, 43
      %s477 = scalar_select %p476, %s475, 43
      %s478 = smul.addr %s477, 8
      %s479 = scalar_lea.vmem %s3, %s478
      // Predicated region
      $region33: #{stem_forward.12} parent=31 // pred_check
        %p480 = pneg %p100
      $region34: #{stem_forward.12} parent=31 // pred_check_branch
        %482 = sbr.rel (%p480) target = $region36
      $region35: #{stem_forward.12} parent=31 // pred_region
        %s483 = smul.u32 22, %s14
      $region36: #{stem_forward.12} parent=31 // pred_fallthru
        _
    $region32: #{stem_forward.12} parent=5 // pred_fallthru
      _
    %p484 = scmp.le.s32.totalorder 2, %s9
    // Predicated region
    $region37: #{stem_forward.12} parent=5 // pred_check
      %p485 = pneg %p484
    $region38: #{stem_forward.12} parent=5 // pred_check_branch
      %487 = sbr.rel (%p485) target = $region40
    $region39: #{stem_forward.12} parent=5 // pred_region
      %s488 = ssub.s32 %s9, 2
      // Predicated region
      $region41: #{stem_forward.12} parent=39 // pred_check
        %p489 = pneg %p106
      $region42: #{stem_forward.12} parent=39 // pred_check_branch
        %491 = sbr.rel (%p489) target = $region44
      $region43: #{stem_forward.12} parent=39 // pred_region
        %s492 = smul.u32 22, %s15
        %p493 = scmp.lt.s32.totalorder %s492, 43
        %s494 = scalar_select %p493, %s492, 43
        %s495 = smul.addr %s494, 8
        %s496 = scalar_lea.vmem %s3, %s495
      $region44: #{stem_forward.12} parent=39 // pred_fallthru
        _
    $region40: #{stem_forward.12} parent=5 // pred_fallthru
      _
  $region6: #{stem_forward.12} parent=0 // loop_footer
    %s13 = sadd.s32 1, %s9
  $region7: #{stem_forward.12} parent=0 // loop_footer_branch
    %8 = sbr.rel target = $region3
  $region8: #{stem_forward.12} parent=0 // loop_exit
    _

// kernel: stem_forward.13
$region0: #{stem_forward.13}
  #allocation0 [shape = 'u32[]', space=smem, size = 0x4, offset = 0x4, fixed_abs, tag = 'smem constant byte address 0x4 - core index']
  #allocation1 [shape = 'u32[144,128]{1,0:T(1,128)}', space=vmem, size = 0x12000, scoped, tag = 'internal scratch']
  %s0 = inlined_call_operand.vmem [shape: bf16[256,288], index: 0, kind: input, shape index: {}]
  %s1 = inlined_call_operand.vmem [shape: bf16[288,32], index: 1, kind: input, shape index: {}]
  %s2 = inlined_call_operand.vmem [shape: f32[1,32], index: 2, kind: input, shape index: {}]
  %s3 = inlined_call_operand.vmem [shape: f32[256,32], index: 3, kind: output, shape index: {}]
  %s4 = sld [smem:[#allocation0]]
  $region45: #{stem_forward.13} parent=0
    _
  %s6 = ssub.s32 1, %s4
  %s7 = scalar_select 0, %s6, %s4
  loop: start=0, step=1, limit=4
  $region2: #{stem_forward.13} parent=0 // loop_pre_header
    _
  $region3: #{stem_forward.13} parent=0 // loop_header
    %s9 = sphi 0, %s13
    %p10 = scmp.ge.s32.totalorder %s9, 4
    %s19 = sphi 0, %s21
    %s22 = sphi 0, %s19
    %s23 = sphi 0, %s22
    %s39 = sphi 0, %s23
    %s43 = sphi 0, %s43
    %s45 = sphi 0, %s43
    %s46 = sphi 0, %s45
    %s60 = sphi 0, %s46
    %s64 = sphi 0, %s64
    %s66 = sphi 0, %s64
    %s67 = sphi 0, %s66
    %s81 = sphi 0, %s67
    %s87 = sphi 0, %s89
    %s90 = sphi 0, %s87
    %s91 = sphi 0, %s90
    %s107 = sphi 0, %s91
  $region4: #{stem_forward.13} parent=0 // loop_header_branch
    %12 = sbr.rel (%p10) target = $region8
  $region5: #{stem_forward.13} parent=0 // loop_body
    %s14 = ssub.s32 %s9, 1
    %s15 = ssub.s32 %s9, 2
    %s16 = sadd.s32 %s9, 1
    %s17 = ssub.s32 %s9, %s16
    %p18 = scmp.eq.s32.totalorder %s17, 0
    %s20 = sadd.s32 %s19, 1
    %s21 = scalar_select %p18, %s19, %s20
    %p24 = pneg %p18
    %p25 = scmp.eq.s32.totalorder %s9, 1
    %p26 = por %p24, %p25
    %p27 = scmp.ne.s32.totalorder %s19, %s22
    %p28 = scmp.eq.s32.totalorder %s9, 0
    %p29 = por %p27, %p28
    %p30 = scmp.ne.s32.totalorder %s19, %s22
    %p31 = scmp.eq.s32.totalorder %s14, 1
    %p32 = por %p30, %p31
    %p33 = scmp.ne.s32.totalorder %s22, %s23
    %p34 = scmp.eq.s32.totalorder %s14, 0
    %p35 = por %p33, %p34
    %p36 = scmp.ne.s32.totalorder %s22, %s23
    %p37 = scmp.eq.s32.totalorder %s15, 1
    %p38 = por %p36, %p37
    %p40 = scmp.ne.s32.totalorder %s23, %s39
    %p41 = scmp.eq.s32.totalorder %s15, 0
    %p42 = por %p40, %p41
    %s44 = sadd.s32 %s43, 1
    %p47 = scmp.eq.s32.totalorder %s9, 1
    %p48 = scmp.ne.s32.totalorder %s43, %s45
    %p49 = scmp.eq.s32.totalorder %s9, 0
    %p50 = por %p48, %p49
    %p51 = scmp.ne.s32.totalorder %s43, %s45
    %p52 = scmp.eq.s32.totalorder %s14, 1
    %p53 = por %p51, %p52
    %p54 = scmp.ne.s32.totalorder %s45, %s46
    %p55 = scmp.eq.s32.totalorder %s14, 0
    %p56 = por %p54, %p55
    %p57 = scmp.ne.s32.totalorder %s45, %s46
    %p58 = scmp.eq.s32.totalorder %s15, 1
    %p59 = por %p57, %p58
    %p61 = scmp.ne.s32.totalorder %s46, %s60
    %p62 = scmp.eq.s32.totalorder %s15, 0
    %p63 = por %p61, %p62
    %s65 = sadd.s32 %s64, 1
    %p68 = scmp.eq.s32.totalorder %s9, 1
    %p69 = scmp.ne.s32.totalorder %s64, %s66
    %p70 = scmp.eq.s32.totalorder %s9, 0
    %p71 = por %p69, %p70
    %p72 = scmp.ne.s32.totalorder %s64, %s66
    %p73 = scmp.eq.s32.totalorder %s14, 1
    %p74 = por %p72, %p73
    %p75 = scmp.ne.s32.totalorder %s66, %s67
    %p76 = scmp.eq.s32.totalorder %s14, 0
    %p77 = por %p75, %p76
    %p78 = scmp.ne.s32.totalorder %s66, %s67
    %p79 = scmp.eq.s32.totalorder %s15, 1
    %p80 = por %p78, %p79
    %p82 = scmp.ne.s32.totalorder %s67, %s81
    %p83 = scmp.eq.s32.totalorder %s15, 0
    %p84 = por %p82, %p83
    %s85 = ssub.s32 %s9, %s16
    %p86 = scmp.eq.s32.totalorder %s85, 0
    %s88 = sadd.s32 %s87, 1
    %s89 = scalar_select %p86, %s87, %s88
    %p92 = pneg %p86
    %p93 = scmp.eq.s32.totalorder %s9, 1
    %p94 = por %p92, %p93
    %p95 = scmp.ne.s32.totalorder %s87, %s90
    %p96 = scmp.eq.s32.totalorder %s9, 0
    %p97 = por %p95, %p96
    %p98 = scmp.ne.s32.totalorder %s87, %s90
    %p99 = scmp.eq.s32.totalorder %s14, 1
    %p100 = por %p98, %p99
    %p101 = scmp.ne.s32.totalorder %s90, %s91
    %p102 = scmp.eq.s32.totalorder %s14, 0
    %p103 = por %p101, %p102
    %p104 = scmp.ne.s32.totalorder %s90, %s91
    %p105 = scmp.eq.s32.totalorder %s15, 1
    %p106 = por %p104, %p105
    %p108 = scmp.ne.s32.totalorder %s91, %s107
    %p109 = scmp.eq.s32.totalorder %s15, 0
    %p110 = por %p108, %p109
    %p111 = scmp.le.s32.totalorder 1, %s9
    %p112 = scmp.lt.s32.totalorder %s9, 3
    %p113 = pnand %p111, %p112
    %p114 = pneg %p113
    // Predicated region
    $region9: #{stem_forward.13} parent=5 // pred_check
      _
    $region10: #{stem_forward.13} parent=5 // pred_check_branch
      %116 = sbr.rel (%p113) target = $region12
    $region11: #{stem_forward.13} parent=5 // pred_region
      %s117 = ssub.s32 %s9, 1
      // Predicated region
      $region13: #{stem_forward.13} parent=11 // pred_check
        %p118 = pneg %p56
      $region14: #{stem_forward.13} parent=11 // pred_check_branch
        %120 = sbr.rel (%p118) target = $region16
      $region15: #{stem_forward.13} parent=11 // pred_region
        _
      $region16: #{stem_forward.13} parent=11 // pred_fallthru
        _
      // Predicated region
      $region17: #{stem_forward.13} parent=11 // pred_check
        %p121 = pneg %p77
      $region18: #{stem_forward.13} parent=11 // pred_check_branch
        %123 = sbr.rel (%p121) target = $region20
      $region19: #{stem_forward.13} parent=11 // pred_region
        _
      $region20: #{stem_forward.13} parent=11 // pred_fallthru
        _
    $region12: #{stem_forward.13} parent=5 // pred_fallthru
      _
    %p124 = scmp.lt.s32.totalorder %s9, 2
    // Predicated region
    $region21: #{stem_forward.13} parent=5 // pred_check
      %p125 = pneg %p124
    $region22: #{stem_forward.13} parent=5 // pred_check_branch
      %127 = sbr.rel (%p125) target = $region24
    $region23: #{stem_forward.13} parent=5 // pred_region
      // Predicated region
      $region25: #{stem_forward.13} parent=23 // pred_check
        %p128 = pneg %p29
      $region26: #{stem_forward.13} parent=23 // pred_check_branch
        %130 = sbr.rel (%p128) target = $region28
      $region27: #{stem_forward.13} parent=23 // pred_region
        %s131 = smul.u32 16, %s9
        %p132 = scmp.lt.s32.totalorder %s131, 31
        %s133 = scalar_select %p132, %s131, 31
        %s134 = smul.addr %s133, 3
        %s135 = smul.addr %s134, 4
        %s136 = scalar_lea.vmem %s0, %s135
        %s137 = smul.u32 16, %s9
      $region28: #{stem_forward.13} parent=23 // pred_fallthru
        _
    $region24: #{stem_forward.13} parent=5 // pred_fallthru
      _
    %p138 = scmp.le.s32.totalorder 1, %s9
    %p139 = scmp.lt.s32.totalorder %s9, 3
    %p140 = pnand %p138, %p139
    %p141 = pneg %p140
    // Predicated region
    $region29: #{stem_forward.13} parent=5 // pred_check
      _
    $region30: #{stem_forward.13} parent=5 // pred_check_branch
      %143 = sbr.rel (%p140) target = $region32
    $region31: #{stem_forward.13} parent=5 // pred_region
      %s144 = ssub.s32 %s9, 1
      %s145 = smul.u32 16, %s14
      %p146 = scmp.lt.s32.totalorder %s145, 31
      %s147 = scalar_select %p146, %s145, 31
      %s148 = smul.addr %s147, 3
      %s149 = smul.addr %s148, 4
      %s150 = scalar_lea.vmem %s0, %s149
      %p151 = pneg %p35
      %p152 = pneg %p32
      %p153 = pneg %p56
      %p154 = pneg %p53
      %p155 = pneg %p77
      %p156 = pneg %p74
      %p157 = pneg %p103
      %p158 = pneg %p100
      %s159 = smul.u32 16, %s14
      %p160 = scmp.lt.s32.totalorder %s159, 31
      %s161 = scalar_select %p160, %s159, 31
      %s162 = smul.addr %s161, 8
      %s163 = scalar_lea.vmem %s3, %s162
      %s164 = smul.u32 16, %s14
      %p165 = scmp.lt.s32.totalorder %s164, 31
      %s166 = scalar_select %p165, %s164, 31
      %s167 = smul.addr %s166, 3
      %s168 = smul.addr %s167, 4
      %s169 = scalar_lea.vmem %s0, %s168
      %s170 = smul.u32 16, %s14
      %s171 = smul.u32 16, %s14
      %p172 = scmp.lt.s32.totalorder %s171, 31
      %s173 = scalar_select %p172, %s171, 31
      %s174 = smul.addr %s173, 8
      %s175 = scalar_lea.vmem %s3, %s174
      %s176 = smul.u32 16, %s14
      %v178 = vld [vmem:[%s169] sm:$0xff]
      %v179 = vld [vmem:[%s169 + $0x8] sm:$0xf]
      %v180 = vld [vmem:[%s169 + $0xc] sm:$0xff]
      %v181 = vld [vmem:[%s169 + $0x14] sm:$0xf]
      %v182 = vld [vmem:[%s169 + $0x18] sm:$0xff]
      %v183 = vld [vmem:[%s169 + $0x20] sm:$0xf]
      %v184 = vld [vmem:[%s169 + $0x24] sm:$0xff]
      %v185 = vld [vmem:[%s169 + $0x2c] sm:$0xf]
      %v186 = vld [vmem:[%s169 + $0x30] sm:$0xff]
      %v187 = vld [vmem:[%s169 + $0x38] sm:$0xf]
      %v188 = vld [vmem:[%s169 + $0x3c] sm:$0xff]
      %v189 = vld [vmem:[%s169 + $0x44] sm:$0xf]
      %v190 = vld [vmem:[%s169 + $0x48] sm:$0xff]
      %v191 = vld [vmem:[%s169 + $0x50] sm:$0xf]
      %v192 = vld [vmem:[%s169 + $0x54] sm:$0xff]
      %v193 = vld [vmem:[%s169 + $0x5c] sm:$0xf]
      %v194 = vld [vmem:[%s169 + $0x60] sm:$0xff]
      %v195 = vld [vmem:[%s169 + $0x68] sm:$0xf]
      %v196 = vld [vmem:[%s169 + $0x6c] sm:$0xff]
      %v197 = vld [vmem:[%s169 + $0x74] sm:$0xf]
      %v198 = vld [vmem:[%s169 + $0x78] sm:$0xff]
      %v199 = vld [vmem:[%s169 + $0x80] sm:$0xf]
      %v200 = vld [vmem:[%s169 + $0x84] sm:$0xff]
      %v201 = vld [vmem:[%s169 + $0x8c] sm:$0xf]
      %v202 = vld [vmem:[%s169 + $0x90] sm:$0xff]
      %v203 = vld [vmem:[%s169 + $0x98] sm:$0xf]
      %v204 = vld [vmem:[%s169 + $0x9c] sm:$0xff]
      %v205 = vld [vmem:[%s169 + $0xa4] sm:$0xf]
      %v206 = vld [vmem:[%s169 + $0xa8] sm:$0xff]
      %v207 = vld [vmem:[%s169 + $0xb0] sm:$0xf]
      %v208 = vld [vmem:[%s169 + $0xb4] sm:$0xff]
      %v209 = vld [vmem:[%s169 + $0xbc] sm:$0xf]
      %v210 = vld [vmem:[%s1] sm:$0xf]
      %v211 = vld [vmem:[%s1 + $0x4] sm:$0xf]
      %v212 = vld [vmem:[%s1 + $0x8] sm:$0xf]
      %v213 = vld [vmem:[%s1 + $0xc] sm:$0xf]
      %v214 = vld [vmem:[%s1 + $0x10] sm:$0xf]
      %v215 = vld [vmem:[%s1 + $0x14] sm:$0xf]
      %v216 = vld [vmem:[%s1 + $0x18] sm:$0xf]
      %v217 = vld [vmem:[%s1 + $0x1c] sm:$0xf]
      %v218 = vld [vmem:[%s1 + $0x20] sm:$0xf]
      %v219 = vld [vmem:[%s1 + $0x24] sm:$0xf]
      %v220 = vld [vmem:[%s1 + $0x28] sm:$0xf]
      %v221 = vld [vmem:[%s1 + $0x2c] sm:$0xf]
      %v222 = vld [vmem:[%s1 + $0x30] sm:$0xf]
      %v223 = vld [vmem:[%s1 + $0x34] sm:$0xf]
      %v224 = vld [vmem:[%s1 + $0x38] sm:$0xf]
      %v225 = vld [vmem:[%s1 + $0x3c] sm:$0xf]
      %v226 = vld [vmem:[%s1 + $0x40] sm:$0xf]
      %v227 = vld [vmem:[%s1 + $0x44] sm:$0xf]
      %v228 = vld [vmem:[%s1 + $0x48] sm:$0xf]
      %v229 = vld [vmem:[%s1 + $0x4c] sm:$0xf]
      %v230 = vld [vmem:[%s1 + $0x50] sm:$0xf]
      %v231 = vld [vmem:[%s1 + $0x54] sm:$0xf]
      %v232 = vld [vmem:[%s1 + $0x58] sm:$0xf]
      %v233 = vld [vmem:[%s1 + $0x5c] sm:$0xf]
      %v234 = vld [vmem:[%s1 + $0x60] sm:$0xf]
      %v235 = vld [vmem:[%s1 + $0x64] sm:$0xf]
      %v236 = vld [vmem:[%s1 + $0x68] sm:$0xf]
      %v237 = vld [vmem:[%s1 + $0x6c] sm:$0xf]
      %v238 = vld [vmem:[%s1 + $0x70] sm:$0xf]
      %v239 = vld [vmem:[%s1 + $0x74] sm:$0xf]
      %v240 = vld [vmem:[%s1 + $0x78] sm:$0xf]
      %v241 = vld [vmem:[%s1 + $0x7c] sm:$0xf]
      %v242 = vld [vmem:[%s1 + $0x80] sm:$0xf]
      %v243 = vld [vmem:[%s1 + $0x84] sm:$0xf]
      %v244 = vld [vmem:[%s1 + $0x88] sm:$0xf]
      %v245 = vld [vmem:[%s1 + $0x8c] sm:$0xf]
      %v246 = vld [vmem:[%s2] sm:$0x1]
      %v248 = vlaneseq
      %v249 = vshrl.u32 %v248, 7
      %v250 = vsub.s32 0, %v249
      %v251 = vrot.slane %v246, %v250
      %v285 = vunpack.c.l.b16 %v178
      %v286 = vunpack.c.h.b16 %v178
      %v287 = vunpack.c.l.b16 %v179
      %v288 = vunpack.c.l.b16 %v180
      %v289 = vunpack.c.h.b16 %v180
      %v290 = vunpack.c.l.b16 %v181
      %v291 = vunpack.c.l.b16 %v182
      %v292 = vunpack.c.h.b16 %v182
      %v293 = vunpack.c.l.b16 %v183
      %v294 = vunpack.c.l.b16 %v184
      %v295 = vunpack.c.h.b16 %v184
      %v296 = vunpack.c.l.b16 %v185
      %v297 = vunpack.c.l.b16 %v186
      %v298 = vunpack.c.h.b16 %v186
      %v299 = vunpack.c.l.b16 %v187
      %v300 = vunpack.c.l.b16 %v188
      %v301 = vunpack.c.h.b16 %v188
      %v302 = vunpack.c.l.b16 %v189
      %v303 = vunpack.c.l.b16 %v190
      %v304 = vunpack.c.h.b16 %v190
      %v305 = vunpack.c.l.b16 %v191
      %v306 = vunpack.c.l.b16 %v192
      %v307 = vunpack.c.h.b16 %v192
      %v308 = vunpack.c.l.b16 %v193
      %v309 = vunpack.c.l.b16 %v194
      %v310 = vunpack.c.h.b16 %v194
      %v311 = vunpack.c.l.b16 %v195
      %v312 = vunpack.c.l.b16 %v196
      %v313 = vunpack.c.h.b16 %v196
      %v314 = vunpack.c.l.b16 %v197
      %v315 = vunpack.c.l.b16 %v198
      %v316 = vunpack.c.h.b16 %v198
      %v317 = vunpack.c.l.b16 %v199
      %v318 = vunpack.c.l.b16 %v200
      %v319 = vunpack.c.h.b16 %v200
      %v320 = vunpack.c.l.b16 %v201
      %v321 = vunpack.c.l.b16 %v202
      %v322 = vunpack.c.h.b16 %v202
      %v323 = vunpack.c.l.b16 %v203
      %v324 = vunpack.c.l.b16 %v204
      %v325 = vunpack.c.h.b16 %v204
      %v326 = vunpack.c.l.b16 %v205
      %v327 = vunpack.c.l.b16 %v206
      %v328 = vunpack.c.h.b16 %v206
      %v329 = vunpack.c.l.b16 %v207
      %v330 = vunpack.c.l.b16 %v208
      %v331 = vunpack.c.h.b16 %v208
      %v332 = vunpack.c.l.b16 %v209
      %v333 = vpack.c.b16 %v288, %v285
      %v334 = vpack.c.b16 %v289, %v286
      %v335 = vpack.c.b16 %v290, %v287
      %v336 = vpack.c.b16 %v294, %v291
      %v337 = vpack.c.b16 %v295, %v292
      %v338 = vpack.c.b16 %v296, %v293
      %v339 = vpack.c.b16 %v300, %v297
      %v340 = vpack.c.b16 %v301, %v298
      %v341 = vpack.c.b16 %v302, %v299
      %v342 = vpack.c.b16 %v306, %v303
      %v343 = vpack.c.b16 %v307, %v304
      %v344 = vpack.c.b16 %v308, %v305
      %v345 = vpack.c.b16 %v312, %v309
      %v346 = vpack.c.b16 %v313, %v310
      %v347 = vpack.c.b16 %v314, %v311
      %v348 = vpack.c.b16 %v318, %v315
      %v349 = vpack.c.b16 %v319, %v316
      %v350 = vpack.c.b16 %v320, %v317
      %v351 = vpack.c.b16 %v324, %v321
      %v352 = vpack.c.b16 %v325, %v322
      %v353 = vpack.c.b16 %v326, %v323
      %v354 = vpack.c.b16 %v330, %v327
      %v355 = vpack.c.b16 %v331, %v328
      %v356 = vpack.c.b16 %v332, %v329
      %v409 = vunpack.c.l.b16 %v210
      %v410 = vunpack.c.l.b16 %v211
      %v411 = vunpack.c.l.b16 %v212
      %v412 = vunpack.c.l.b16 %v213
      %v413 = vunpack.c.l.b16 %v214
      %v414 = vunpack.c.l.b16 %v215
      %v415 = vunpack.c.l.b16 %v216
      %v416 = vunpack.c.l.b16 %v217
      %v417 = vunpack.c.l.b16 %v218
      %v418 = vunpack.c.l.b16 %v219
      %v419 = vunpack.c.l.b16 %v220
      %v420 = vunpack.c.l.b16 %v221
      %v421 = vunpack.c.l.b16 %v222
      %v422 = vunpack.c.l.b16 %v223
      %v423 = vunpack.c.l.b16 %v224
      %v424 = vunpack.c.l.b16 %v225
      %v425 = vunpack.c.l.b16 %v226
      %v426 = vunpack.c.l.b16 %v227
      %v427 = vunpack.c.l.b16 %v228
      %v428 = vunpack.c.l.b16 %v229
      %v429 = vunpack.c.l.b16 %v230
      %v430 = vunpack.c.l.b16 %v231
      %v431 = vunpack.c.l.b16 %v232
      %v432 = vunpack.c.l.b16 %v233
      %v433 = vunpack.c.l.b16 %v234
      %v434 = vunpack.c.l.b16 %v235
      %v435 = vunpack.c.l.b16 %v236
      %v436 = vunpack.c.l.b16 %v237
      %v437 = vunpack.c.l.b16 %v238
      %v438 = vunpack.c.l.b16 %v239
      %v439 = vunpack.c.l.b16 %v240
      %v440 = vunpack.c.l.b16 %v241
      %v441 = vunpack.c.l.b16 %v242
      %v442 = vunpack.c.l.b16 %v243
      %v443 = vunpack.c.l.b16 %v244
      %v444 = vunpack.c.l.b16 %v245
      %v445 = vpack.c.b16 %v410, %v409
      %v446 = vpack.c.b16 %v412, %v411
      %v447 = vpack.c.b16 %v414, %v413
      %v448 = vpack.c.b16 %v416, %v415
      %v449 = vpack.c.b16 %v418, %v417
      %v450 = vpack.c.b16 %v420, %v419
      %v451 = vpack.c.b16 %v422, %v421
      %v452 = vpack.c.b16 %v424, %v423
      %v453 = vpack.c.b16 %v426, %v425
      %v454 = vpack.c.b16 %v428, %v427
      %v455 = vpack.c.b16 %v430, %v429
      %v456 = vpack.c.b16 %v432, %v431
      %v457 = vpack.c.b16 %v434, %v433
      %v458 = vpack.c.b16 %v436, %v435
      %v459 = vpack.c.b16 %v438, %v437
      %v460 = vpack.c.b16 %v440, %v439
      %v461 = vpack.c.b16 %v442, %v441
      %v462 = vpack.c.b16 %v444, %v443
      %vm481 = vcmask 261120
      %v483 = vsel %vm481, %v335, 0
      %v486 = vsel %vm481, %v338, 0
      %v489 = vsel %vm481, %v341, 0
      %v492 = vsel %vm481, %v344, 0
      %v495 = vsel %vm481, %v347, 0
      %v498 = vsel %vm481, %v350, 0
      %v501 = vsel %vm481, %v353, 0
      %v504 = vsel %vm481, %v356, 0
      %506 = vmatprep.subr.bf16.mxu0 0
      %507 = vmatpush1.bf16.msra.mxu0 %v452
      %508 = vmatprep.subr.bf16.mxu0 0
      %509 = vmatpush1.bf16.msra.mxu0 %v451
      %510 = vmatprep.subr.bf16.mxu0 0
      %511 = vmatpush1.bf16.msra.mxu0 %v450
      %512 = vmatprep.subr.bf16.mxu0 0
      %513 = vmatpush1.bf16.msra.mxu0 %v449
      %514 = vmatprep.subr.bf16.mxu0 0
      %515 = vmatpush1.bf16.msra.mxu0 %v448
      %516 = vmatprep.subr.bf16.mxu0 0
      %517 = vmatpush1.bf16.msra.mxu0 %v447
      %518 = vmatprep.subr.bf16.mxu0 0
      %519 = vmatpush1.bf16.msra.mxu0 %v446
      %520 = vmatprep.subr.bf16.mxu0 0
      %521 = vmatpush1.bf16.msra.mxu0 %v445
      %522 = vmatprep.subr.bf16.mxu0 0
      %523 = vmatpush2.bf16.msra.mxu0 %v460
      %524 = vmatprep.subr.bf16.mxu0 0
      %525 = vmatpush2.bf16.msra.mxu0 %v459
      %526 = vmatprep.subr.bf16.mxu0 0
      %527 = vmatpush2.bf16.msra.mxu0 %v458
      %528 = vmatprep.subr.bf16.mxu0 0
      %529 = vmatpush2.bf16.msra.mxu0 %v457
      %530 = vmatprep.subr.bf16.mxu0 0
      %531 = vmatpush2.bf16.msra.mxu0 %v456
      %532 = vmatprep.subr.bf16.mxu0 0
      %533 = vmatpush2.bf16.msra.mxu0 %v455
      %534 = vmatprep.subr.bf16.mxu0 0
      %535 = vmatpush2.bf16.msra.mxu0 %v454
      %536 = vmatprep.subr.bf16.mxu0 0
      %537 = vmatpush2.bf16.msra.mxu0 %v453
      %538 = vmatprep.mubr.bf16.mxu0 %v334
      %539 = vmatmul.mubr.bf16.gmra.mxu0 %v333
      %v540 = vpop.f32.mrf.mxu0
      %v541 = vadd.f32 %v251, %v540
      %v542 = vpop.f32.mrf.mxu0
      %v543 = vpop.f32.mrf.mxu0
      %v544 = vadd.f32 %v251, %v543
      %v545 = vpop.f32.mrf.mxu0
      %546 = vmatprep.mubr.bf16.mxu0 %v337
      %547 = vmatmul.mubr.bf16.gmra.mxu0 %v336
      %v548 = vpop.f32.mrf.mxu0
      %v549 = vadd.f32 %v251, %v548
      %v550 = vpop.f32.mrf.mxu0
      %v551 = vpop.f32.mrf.mxu0
      %v552 = vadd.f32 %v251, %v551
      %v553 = vpop.f32.mrf.mxu0
      %554 = vmatprep.mubr.bf16.mxu0 %v340
      %555 = vmatmul.mubr.bf16.gmra.mxu0 %v339
      %v556 = vpop.f32.mrf.mxu0
      %v557 = vadd.f32 %v251, %v556
      %v558 = vpop.f32.mrf.mxu0
      %v559 = vpop.f32.mrf.mxu0
      %v560 = vadd.f32 %v251, %v559
      %v561 = vpop.f32.mrf.mxu0
      %562 = vmatprep.mubr.bf16.mxu0 %v343
      %563 = vmatmul.mubr.bf16.gmra.mxu0 %v342
      %v564 = vpop.f32.mrf.mxu0
      %v565 = vadd.f32 %v251, %v564
      %v566 = vpop.f32.mrf.mxu0
      %v567 = vpop.f32.mrf.mxu0
      %v568 = vadd.f32 %v251, %v567
      %v569 = vpop.f32.mrf.mxu0
      %570 = vmatprep.mubr.bf16.mxu0 %v346
      %571 = vmatmul.mubr.bf16.gmra.mxu0 %v345
      %v572 = vpop.f32.mrf.mxu0
      %v573 = vadd.f32 %v251, %v572
      %v574 = vpop.f32.mrf.mxu0
      %v575 = vpop.f32.mrf.mxu0
      %v576 = vadd.f32 %v251, %v575
      %v577 = vpop.f32.mrf.mxu0
      %578 = vmatprep.mubr.bf16.mxu0 %v349
      %579 = vmatmul.mubr.bf16.gmra.mxu0 %v348
      %v580 = vpop.f32.mrf.mxu0
      %v581 = vadd.f32 %v251, %v580
      %v582 = vpop.f32.mrf.mxu0
      %v583 = vpop.f32.mrf.mxu0
      %v584 = vadd.f32 %v251, %v583
      %v585 = vpop.f32.mrf.mxu0
      %586 = vmatprep.mubr.bf16.mxu0 %v352
      %587 = vmatmul.mubr.bf16.gmra.mxu0 %v351
      %v588 = vpop.f32.mrf.mxu0
      %v589 = vadd.f32 %v251, %v588
      %v590 = vpop.f32.mrf.mxu0
      %v591 = vpop.f32.mrf.mxu0
      %v592 = vadd.f32 %v251, %v591
      %v593 = vpop.f32.mrf.mxu0
      %594 = vmatprep.mubr.bf16.mxu0 %v355
      %595 = vmatmul.mubr.bf16.gmra.mxu0 %v354
      %v596 = vpop.f32.mrf.mxu0
      %v597 = vadd.f32 %v251, %v596
      %v598 = vpop.f32.mrf.mxu0
      %v599 = vpop.f32.mrf.mxu0
      %v600 = vadd.f32 %v251, %v599
      %v601 = vpop.f32.mrf.mxu0
      %602 = vdwg.mxu0
      %603 = vmatprep.subr.bf16.mxu0 0
      %604 = vmatpush1.bf16.msra.mxu0 0
      %605 = vmatprep.subr.bf16.mxu0 0
      %606 = vmatpush1.bf16.msra.mxu0 0
      %607 = vmatprep.subr.bf16.mxu0 0
      %608 = vmatpush1.bf16.msra.mxu0 0
      %609 = vmatprep.subr.bf16.mxu0 0
      %610 = vmatpush1.bf16.msra.mxu0 0
      %611 = vmatprep.subr.bf16.mxu0 0
      %612 = vmatpush1.bf16.msra.mxu0 0
      %613 = vmatprep.subr.bf16.mxu0 0
      %614 = vmatpush1.bf16.msra.mxu0 0
      %615 = vmatprep.subr.bf16.mxu0 0
      %616 = vmatpush1.bf16.msra.mxu0 %v462
      %617 = vmatprep.subr.bf16.mxu0 0
      %618 = vmatpush1.bf16.msra.mxu0 %v461
      %619 = vmatprep.subr.bf16.mxu0 0
      %620 = vmatpush2.bf16.msra.mxu0 0
      %621 = vmatprep.subr.bf16.mxu0 0
      %622 = vmatpush2.bf16.msra.mxu0 0
      %623 = vmatprep.subr.bf16.mxu0 0
      %624 = vmatpush2.bf16.msra.mxu0 0
      %625 = vmatprep.subr.bf16.mxu0 0
      %626 = vmatpush2.bf16.msra.mxu0 0
      %627 = vmatprep.subr.bf16.mxu0 0
      %628 = vmatpush2.bf16.msra.mxu0 0
      %629 = vmatprep.subr.bf16.mxu0 0
      %630 = vmatpush2.bf16.msra.mxu0 0
      %631 = vmatprep.subr.bf16.mxu0 0
      %632 = vmatpush2.bf16.msra.mxu0 0
      %633 = vmatprep.subr.bf16.mxu0 0
      %634 = vmatpush2.bf16.msra.mxu0 0
      %635 = vmatprep.mubr.bf16.mxu0 0
      %636 = vmatmul.mubr.bf16.gmra.mxu0 %v483
      %v637 = vpop.f32.mrf.mxu0
      %v638 = vadd.f32 %v541, %v637
      %v639 = vpop.f32.mrf.mxu0
      %v640 = vpop.f32.mrf.mxu0
      %v641 = vadd.f32 %v544, %v640
      %v642 = vpop.f32.mrf.mxu0
      %643 = vmatprep.mubr.bf16.mxu0 0
      %644 = vmatmul.mubr.bf16.gmra.mxu0 %v486
      %v645 = vpop.f32.mrf.mxu0
      %v646 = vadd.f32 %v549, %v645
      %v647 = vpop.f32.mrf.mxu0
      %v648 = vpop.f32.mrf.mxu0
      %v649 = vadd.f32 %v552, %v648
      %v650 = vpop.f32.mrf.mxu0
      %651 = vmatprep.mubr.bf16.mxu0 0
      %652 = vmatmul.mubr.bf16.gmra.mxu0 %v489
      %v653 = vpop.f32.mrf.mxu0
      %v654 = vadd.f32 %v557, %v653
      %v655 = vpop.f32.mrf.mxu0
      %v656 = vpop.f32.mrf.mxu0
      %v657 = vadd.f32 %v560, %v656
      %v658 = vpop.f32.mrf.mxu0
      %659 = vmatprep.mubr.bf16.mxu0 0
      %660 = vmatmul.mubr.bf16.gmra.mxu0 %v492
      %v661 = vpop.f32.mrf.mxu0
      %v662 = vadd.f32 %v565, %v661
      %v663 = vpop.f32.mrf.mxu0
      %v664 = vpop.f32.mrf.mxu0
      %v665 = vadd.f32 %v568, %v664
      %v666 = vpop.f32.mrf.mxu0
      %667 = vmatprep.mubr.bf16.mxu0 0
      %668 = vmatmul.mubr.bf16.gmra.mxu0 %v495
      %v669 = vpop.f32.mrf.mxu0
      %v670 = vadd.f32 %v573, %v669
      %v671 = vpop.f32.mrf.mxu0
      %v672 = vpop.f32.mrf.mxu0
      %v673 = vadd.f32 %v576, %v672
      %v674 = vpop.f32.mrf.mxu0
      %675 = vmatprep.mubr.bf16.mxu0 0
      %676 = vmatmul.mubr.bf16.gmra.mxu0 %v498
      %v677 = vpop.f32.mrf.mxu0
      %v678 = vadd.f32 %v581, %v677
      %v679 = vpop.f32.mrf.mxu0
      %v680 = vpop.f32.mrf.mxu0
      %v681 = vadd.f32 %v584, %v680
      %v682 = vpop.f32.mrf.mxu0
      %683 = vmatprep.mubr.bf16.mxu0 0
      %684 = vmatmul.mubr.bf16.gmra.mxu0 %v501
      %v685 = vpop.f32.mrf.mxu0
      %v686 = vadd.f32 %v589, %v685
      %v687 = vpop.f32.mrf.mxu0
      %v688 = vpop.f32.mrf.mxu0
      %v689 = vadd.f32 %v592, %v688
      %v690 = vpop.f32.mrf.mxu0
      %691 = vmatprep.mubr.bf16.mxu0 0
      %692 = vmatmul.mubr.bf16.gmra.mxu0 %v504
      %v693 = vpop.f32.mrf.mxu0
      %v694 = vadd.f32 %v597, %v693
      %v695 = vpop.f32.mrf.mxu0
      %v696 = vpop.f32.mrf.mxu0
      %v697 = vadd.f32 %v600, %v696
      %v698 = vpop.f32.mrf.mxu0
      %699 = vdwg.mxu0
      %v700 = vmax.f32 %v638, 0.0
      %v701 = vmax.f32 %v641, 0.0
      %v702 = vmax.f32 %v646, 0.0
      %v703 = vmax.f32 %v649, 0.0
      %v704 = vmax.f32 %v654, 0.0
      %v705 = vmax.f32 %v657, 0.0
      %v706 = vmax.f32 %v662, 0.0
      %v707 = vmax.f32 %v665, 0.0
      %v708 = vmax.f32 %v670, 0.0
      %v709 = vmax.f32 %v673, 0.0
      %v710 = vmax.f32 %v678, 0.0
      %v711 = vmax.f32 %v681, 0.0
      %v712 = vmax.f32 %v686, 0.0
      %v713 = vmax.f32 %v689, 0.0
      %v714 = vmax.f32 %v694, 0.0
      %v715 = vmax.f32 %v697, 0.0
      %716 = vst.msk [vmem:[%s175] sm:$0xff] %vm481, %v700
      %717 = vst.msk [vmem:[%s175 + $0x8] sm:$0xff] %vm481, %v701
      %718 = vst.msk [vmem:[%s175 + $0x10] sm:$0xff] %vm481, %v702
      %719 = vst.msk [vmem:[%s175 + $0x18] sm:$0xff] %vm481, %v703
      %720 = vst.msk [vmem:[%s175 + $0x20] sm:$0xff] %vm481, %v704
      %721 = vst.msk [vmem:[%s175 + $0x28] sm:$0xff] %vm481, %v705
      %722 = vst.msk [vmem:[%s175 + $0x30] sm:$0xff] %vm481, %v706
      %723 = vst.msk [vmem:[%s175 + $0x38] sm:$0xff] %vm481, %v707
      %724 = vst.msk [vmem:[%s175 + $0x40] sm:$0xff] %vm481, %v708
      %725 = vst.msk [vmem:[%s175 + $0x48] sm:$0xff] %vm481, %v709
      %726 = vst.msk [vmem:[%s175 + $0x50] sm:$0xff] %vm481, %v710
      %727 = vst.msk [vmem:[%s175 + $0x58] sm:$0xff] %vm481, %v711
      %728 = vst.msk [vmem:[%s175 + $0x60] sm:$0xff] %vm481, %v712
      %729 = vst.msk [vmem:[%s175 + $0x68] sm:$0xff] %vm481, %v713
      %730 = vst.msk [vmem:[%s175 + $0x70] sm:$0xff] %vm481, %v714
      %731 = vst.msk [vmem:[%s175 + $0x78] sm:$0xff] %vm481, %v715
      %s732 = smul.u32 16, %s14
      %p733 = scmp.lt.s32.totalorder %s732, 31
      %s734 = scalar_select %p733, %s732, 31
      %s735 = smul.addr %s734, 8
      %s736 = scalar_lea.vmem %s3, %s735
      // Predicated region
      $region33: #{stem_forward.13} parent=31 // pred_check
        %p737 = pneg %p100
      $region34: #{stem_forward.13} parent=31 // pred_check_branch
        %739 = sbr.rel (%p737) target = $region36
      $region35: #{stem_forward.13} parent=31 // pred_region
        %s740 = smul.u32 16, %s14
      $region36: #{stem_forward.13} parent=31 // pred_fallthru
        _
    $region32: #{stem_forward.13} parent=5 // pred_fallthru
      _
    %p741 = scmp.le.s32.totalorder 2, %s9
    // Predicated region
    $region37: #{stem_forward.13} parent=5 // pred_check
      %p742 = pneg %p741
    $region38: #{stem_forward.13} parent=5 // pred_check_branch
      %744 = sbr.rel (%p742) target = $region40
    $region39: #{stem_forward.13} parent=5 // pred_region
      %s745 = ssub.s32 %s9, 2
      // Predicated region
      $region41: #{stem_forward.13} parent=39 // pred_check
        %p746 = pneg %p106
      $region42: #{stem_forward.13} parent=39 // pred_check_branch
        %748 = sbr.rel (%p746) target = $region44
      $region43: #{stem_forward.13} parent=39 // pred_region
        %s749 = smul.u32 16, %s15
        %p750 = scmp.lt.s32.totalorder %s749, 31
        %s751 = scalar_select %p750, %s749, 31
        %s752 = smul.addr %s751, 8
        %s753 = scalar_lea.vmem %s3, %s752
      $region44: #{stem_forward.13} parent=39 // pred_fallthru
        _
    $region40: #{stem_forward.13} parent=5 // pred_fallthru
      _
  $region6: #{stem_forward.13} parent=0 // loop_footer
    %s13 = sadd.s32 1, %s9
  $region7: #{stem_forward.13} parent=0 // loop_footer_branch
    %8 = sbr.rel target = $region3
  $region8: #{stem_forward.13} parent=0 // loop_exit
    _

// kernel: stem_forward.14
$region0: #{stem_forward.14}
  #allocation0 [shape = 'u32[]', space=smem, size = 0x4, offset = 0x4, fixed_abs, tag = 'smem constant byte address 0x4 - core index']
  #allocation1 [shape = 'u32[144,128]{1,0:T(1,128)}', space=vmem, size = 0x12000, scoped, tag = 'internal scratch']
  %s0 = inlined_call_operand.vmem [shape: bf16[256,288], index: 0, kind: input, shape index: {}]
  %s1 = inlined_call_operand.vmem [shape: bf16[288,64], index: 1, kind: input, shape index: {}]
  %s2 = inlined_call_operand.vmem [shape: f32[1,64], index: 2, kind: input, shape index: {}]
  %s3 = inlined_call_operand.vmem [shape: f32[256,64], index: 3, kind: output, shape index: {}]
  %s4 = sld [smem:[#allocation0]]
  $region45: #{stem_forward.14} parent=0
    _
  %s6 = ssub.s32 1, %s4
  %s7 = scalar_select 0, %s6, %s4
  loop: start=0, step=1, limit=4
  $region2: #{stem_forward.14} parent=0 // loop_pre_header
    _
  $region3: #{stem_forward.14} parent=0 // loop_header
    %s9 = sphi 0, %s13
    %p10 = scmp.ge.s32.totalorder %s9, 4
    %s19 = sphi 0, %s21
    %s22 = sphi 0, %s19
    %s23 = sphi 0, %s22
    %s39 = sphi 0, %s23
    %s43 = sphi 0, %s43
    %s45 = sphi 0, %s43
    %s46 = sphi 0, %s45
    %s60 = sphi 0, %s46
    %s64 = sphi 0, %s64
    %s66 = sphi 0, %s64
    %s67 = sphi 0, %s66
    %s81 = sphi 0, %s67
    %s87 = sphi 0, %s89
    %s90 = sphi 0, %s87
    %s91 = sphi 0, %s90
    %s107 = sphi 0, %s91
  $region4: #{stem_forward.14} parent=0 // loop_header_branch
    %12 = sbr.rel (%p10) target = $region8
  $region5: #{stem_forward.14} parent=0 // loop_body
    %s14 = ssub.s32 %s9, 1
    %s15 = ssub.s32 %s9, 2
    %s16 = sadd.s32 %s9, 1
    %s17 = ssub.s32 %s9, %s16
    %p18 = scmp.eq.s32.totalorder %s17, 0
    %s20 = sadd.s32 %s19, 1
    %s21 = scalar_select %p18, %s19, %s20
    %p24 = pneg %p18
    %p25 = scmp.eq.s32.totalorder %s9, 1
    %p26 = por %p24, %p25
    %p27 = scmp.ne.s32.totalorder %s19, %s22
    %p28 = scmp.eq.s32.totalorder %s9, 0
    %p29 = por %p27, %p28
    %p30 = scmp.ne.s32.totalorder %s19, %s22
    %p31 = scmp.eq.s32.totalorder %s14, 1
    %p32 = por %p30, %p31
    %p33 = scmp.ne.s32.totalorder %s22, %s23
    %p34 = scmp.eq.s32.totalorder %s14, 0
    %p35 = por %p33, %p34
    %p36 = scmp.ne.s32.totalorder %s22, %s23
    %p37 = scmp.eq.s32.totalorder %s15, 1
    %p38 = por %p36, %p37
    %p40 = scmp.ne.s32.totalorder %s23, %s39
    %p41 = scmp.eq.s32.totalorder %s15, 0
    %p42 = por %p40, %p41
    %s44 = sadd.s32 %s43, 1
    %p47 = scmp.eq.s32.totalorder %s9, 1
    %p48 = scmp.ne.s32.totalorder %s43, %s45
    %p49 = scmp.eq.s32.totalorder %s9, 0
    %p50 = por %p48, %p49
    %p51 = scmp.ne.s32.totalorder %s43, %s45
    %p52 = scmp.eq.s32.totalorder %s14, 1
    %p53 = por %p51, %p52
    %p54 = scmp.ne.s32.totalorder %s45, %s46
    %p55 = scmp.eq.s32.totalorder %s14, 0
    %p56 = por %p54, %p55
    %p57 = scmp.ne.s32.totalorder %s45, %s46
    %p58 = scmp.eq.s32.totalorder %s15, 1
    %p59 = por %p57, %p58
    %p61 = scmp.ne.s32.totalorder %s46, %s60
    %p62 = scmp.eq.s32.totalorder %s15, 0
    %p63 = por %p61, %p62
    %s65 = sadd.s32 %s64, 1
    %p68 = scmp.eq.s32.totalorder %s9, 1
    %p69 = scmp.ne.s32.totalorder %s64, %s66
    %p70 = scmp.eq.s32.totalorder %s9, 0
    %p71 = por %p69, %p70
    %p72 = scmp.ne.s32.totalorder %s64, %s66
    %p73 = scmp.eq.s32.totalorder %s14, 1
    %p74 = por %p72, %p73
    %p75 = scmp.ne.s32.totalorder %s66, %s67
    %p76 = scmp.eq.s32.totalorder %s14, 0
    %p77 = por %p75, %p76
    %p78 = scmp.ne.s32.totalorder %s66, %s67
    %p79 = scmp.eq.s32.totalorder %s15, 1
    %p80 = por %p78, %p79
    %p82 = scmp.ne.s32.totalorder %s67, %s81
    %p83 = scmp.eq.s32.totalorder %s15, 0
    %p84 = por %p82, %p83
    %s85 = ssub.s32 %s9, %s16
    %p86 = scmp.eq.s32.totalorder %s85, 0
    %s88 = sadd.s32 %s87, 1
    %s89 = scalar_select %p86, %s87, %s88
    %p92 = pneg %p86
    %p93 = scmp.eq.s32.totalorder %s9, 1
    %p94 = por %p92, %p93
    %p95 = scmp.ne.s32.totalorder %s87, %s90
    %p96 = scmp.eq.s32.totalorder %s9, 0
    %p97 = por %p95, %p96
    %p98 = scmp.ne.s32.totalorder %s87, %s90
    %p99 = scmp.eq.s32.totalorder %s14, 1
    %p100 = por %p98, %p99
    %p101 = scmp.ne.s32.totalorder %s90, %s91
    %p102 = scmp.eq.s32.totalorder %s14, 0
    %p103 = por %p101, %p102
    %p104 = scmp.ne.s32.totalorder %s90, %s91
    %p105 = scmp.eq.s32.totalorder %s15, 1
    %p106 = por %p104, %p105
    %p108 = scmp.ne.s32.totalorder %s91, %s107
    %p109 = scmp.eq.s32.totalorder %s15, 0
    %p110 = por %p108, %p109
    %p111 = scmp.le.s32.totalorder 1, %s9
    %p112 = scmp.lt.s32.totalorder %s9, 3
    %p113 = pnand %p111, %p112
    %p114 = pneg %p113
    // Predicated region
    $region9: #{stem_forward.14} parent=5 // pred_check
      _
    $region10: #{stem_forward.14} parent=5 // pred_check_branch
      %116 = sbr.rel (%p113) target = $region12
    $region11: #{stem_forward.14} parent=5 // pred_region
      %s117 = ssub.s32 %s9, 1
      // Predicated region
      $region13: #{stem_forward.14} parent=11 // pred_check
        %p118 = pneg %p56
      $region14: #{stem_forward.14} parent=11 // pred_check_branch
        %120 = sbr.rel (%p118) target = $region16
      $region15: #{stem_forward.14} parent=11 // pred_region
        _
      $region16: #{stem_forward.14} parent=11 // pred_fallthru
        _
      // Predicated region
      $region17: #{stem_forward.14} parent=11 // pred_check
        %p121 = pneg %p77
      $region18: #{stem_forward.14} parent=11 // pred_check_branch
        %123 = sbr.rel (%p121) target = $region20
      $region19: #{stem_forward.14} parent=11 // pred_region
        _
      $region20: #{stem_forward.14} parent=11 // pred_fallthru
        _
    $region12: #{stem_forward.14} parent=5 // pred_fallthru
      _
    %p124 = scmp.lt.s32.totalorder %s9, 2
    // Predicated region
    $region21: #{stem_forward.14} parent=5 // pred_check
      %p125 = pneg %p124
    $region22: #{stem_forward.14} parent=5 // pred_check_branch
      %127 = sbr.rel (%p125) target = $region24
    $region23: #{stem_forward.14} parent=5 // pred_region
      // Predicated region
      $region25: #{stem_forward.14} parent=23 // pred_check
        %p128 = pneg %p29
      $region26: #{stem_forward.14} parent=23 // pred_check_branch
        %130 = sbr.rel (%p128) target = $region28
      $region27: #{stem_forward.14} parent=23 // pred_region
        %s131 = smul.u32 16, %s9
        %p132 = scmp.lt.s32.totalorder %s131, 31
        %s133 = scalar_select %p132, %s131, 31
        %s134 = smul.addr %s133, 3
        %s135 = smul.addr %s134, 4
        %s136 = scalar_lea.vmem %s0, %s135
        %s137 = smul.u32 16, %s9
      $region28: #{stem_forward.14} parent=23 // pred_fallthru
        _
    $region24: #{stem_forward.14} parent=5 // pred_fallthru
      _
    %p138 = scmp.le.s32.totalorder 1, %s9
    %p139 = scmp.lt.s32.totalorder %s9, 3
    %p140 = pnand %p138, %p139
    %p141 = pneg %p140
    // Predicated region
    $region29: #{stem_forward.14} parent=5 // pred_check
      _
    $region30: #{stem_forward.14} parent=5 // pred_check_branch
      %143 = sbr.rel (%p140) target = $region32
    $region31: #{stem_forward.14} parent=5 // pred_region
      %s144 = ssub.s32 %s9, 1
      %s145 = smul.u32 16, %s14
      %p146 = scmp.lt.s32.totalorder %s145, 31
      %s147 = scalar_select %p146, %s145, 31
      %s148 = smul.addr %s147, 3
      %s149 = smul.addr %s148, 4
      %s150 = scalar_lea.vmem %s0, %s149
      %p151 = pneg %p35
      %p152 = pneg %p32
      %p153 = pneg %p56
      %p154 = pneg %p53
      %p155 = pneg %p77
      %p156 = pneg %p74
      %p157 = pneg %p103
      %p158 = pneg %p100
      %s159 = smul.u32 16, %s14
      %p160 = scmp.lt.s32.totalorder %s159, 31
      %s161 = scalar_select %p160, %s159, 31
      %s162 = smul.addr %s161, 8
      %s163 = scalar_lea.vmem %s3, %s162
      %s164 = smul.u32 16, %s14
      %p165 = scmp.lt.s32.totalorder %s164, 31
      %s166 = scalar_select %p165, %s164, 31
      %s167 = smul.addr %s166, 3
      %s168 = smul.addr %s167, 4
      %s169 = scalar_lea.vmem %s0, %s168
      %s170 = smul.u32 16, %s14
      %s171 = smul.u32 16, %s14
      %p172 = scmp.lt.s32.totalorder %s171, 31
      %s173 = scalar_select %p172, %s171, 31
      %s174 = smul.addr %s173, 8
      %s175 = scalar_lea.vmem %s3, %s174
      %s176 = smul.u32 16, %s14
      %v178 = vld [vmem:[%s169] sm:$0xff]
      %v179 = vld [vmem:[%s169 + $0x8] sm:$0xf]
      %v180 = vld [vmem:[%s169 + $0xc] sm:$0xff]
      %v181 = vld [vmem:[%s169 + $0x14] sm:$0xf]
      %v182 = vld [vmem:[%s169 + $0x18] sm:$0xff]
      %v183 = vld [vmem:[%s169 + $0x20] sm:$0xf]
      %v184 = vld [vmem:[%s169 + $0x24] sm:$0xff]
      %v185 = vld [vmem:[%s169 + $0x2c] sm:$0xf]
      %v186 = vld [vmem:[%s169 + $0x30] sm:$0xff]
      %v187 = vld [vmem:[%s169 + $0x38] sm:$0xf]
      %v188 = vld [vmem:[%s169 + $0x3c] sm:$0xff]
      %v189 = vld [vmem:[%s169 + $0x44] sm:$0xf]
      %v190 = vld [vmem:[%s169 + $0x48] sm:$0xff]
      %v191 = vld [vmem:[%s169 + $0x50] sm:$0xf]
      %v192 = vld [vmem:[%s169 + $0x54] sm:$0xff]
      %v193 = vld [vmem:[%s169 + $0x5c] sm:$0xf]
      %v194 = vld [vmem:[%s169 + $0x60] sm:$0xff]
      %v195 = vld [vmem:[%s169 + $0x68] sm:$0xf]
      %v196 = vld [vmem:[%s169 + $0x6c] sm:$0xff]
      %v197 = vld [vmem:[%s169 + $0x74] sm:$0xf]
      %v198 = vld [vmem:[%s169 + $0x78] sm:$0xff]
      %v199 = vld [vmem:[%s169 + $0x80] sm:$0xf]
      %v200 = vld [vmem:[%s169 + $0x84] sm:$0xff]
      %v201 = vld [vmem:[%s169 + $0x8c] sm:$0xf]
      %v202 = vld [vmem:[%s169 + $0x90] sm:$0xff]
      %v203 = vld [vmem:[%s169 + $0x98] sm:$0xf]
      %v204 = vld [vmem:[%s169 + $0x9c] sm:$0xff]
      %v205 = vld [vmem:[%s169 + $0xa4] sm:$0xf]
      %v206 = vld [vmem:[%s169 + $0xa8] sm:$0xff]
      %v207 = vld [vmem:[%s169 + $0xb0] sm:$0xf]
      %v208 = vld [vmem:[%s169 + $0xb4] sm:$0xff]
      %v209 = vld [vmem:[%s169 + $0xbc] sm:$0xf]
      %v210 = vld [vmem:[%s1] sm:$0xf]
      %v211 = vld [vmem:[%s1 + $0x4] sm:$0xf]
      %v212 = vld [vmem:[%s1 + $0x8] sm:$0xf]
      %v213 = vld [vmem:[%s1 + $0xc] sm:$0xf]
      %v214 = vld [vmem:[%s1 + $0x10] sm:$0xf]
      %v215 = vld [vmem:[%s1 + $0x14] sm:$0xf]
      %v216 = vld [vmem:[%s1 + $0x18] sm:$0xf]
      %v217 = vld [vmem:[%s1 + $0x1c] sm:$0xf]
      %v218 = vld [vmem:[%s1 + $0x20] sm:$0xf]
      %v219 = vld [vmem:[%s1 + $0x24] sm:$0xf]
      %v220 = vld [vmem:[%s1 + $0x28] sm:$0xf]
      %v221 = vld [vmem:[%s1 + $0x2c] sm:$0xf]
      %v222 = vld [vmem:[%s1 + $0x30] sm:$0xf]
      %v223 = vld [vmem:[%s1 + $0x34] sm:$0xf]
      %v224 = vld [vmem:[%s1 + $0x38] sm:$0xf]
      %v225 = vld [vmem:[%s1 + $0x3c] sm:$0xf]
      %v226 = vld [vmem:[%s1 + $0x40] sm:$0xf]
      %v227 = vld [vmem:[%s1 + $0x44] sm:$0xf]
      %v228 = vld [vmem:[%s1 + $0x48] sm:$0xf]
      %v229 = vld [vmem:[%s1 + $0x4c] sm:$0xf]
      %v230 = vld [vmem:[%s1 + $0x50] sm:$0xf]
      %v231 = vld [vmem:[%s1 + $0x54] sm:$0xf]
      %v232 = vld [vmem:[%s1 + $0x58] sm:$0xf]
      %v233 = vld [vmem:[%s1 + $0x5c] sm:$0xf]
      %v234 = vld [vmem:[%s1 + $0x60] sm:$0xf]
      %v235 = vld [vmem:[%s1 + $0x64] sm:$0xf]
      %v236 = vld [vmem:[%s1 + $0x68] sm:$0xf]
      %v237 = vld [vmem:[%s1 + $0x6c] sm:$0xf]
      %v238 = vld [vmem:[%s1 + $0x70] sm:$0xf]
      %v239 = vld [vmem:[%s1 + $0x74] sm:$0xf]
      %v240 = vld [vmem:[%s1 + $0x78] sm:$0xf]
      %v241 = vld [vmem:[%s1 + $0x7c] sm:$0xf]
      %v242 = vld [vmem:[%s1 + $0x80] sm:$0xf]
      %v243 = vld [vmem:[%s1 + $0x84] sm:$0xf]
      %v244 = vld [vmem:[%s1 + $0x88] sm:$0xf]
      %v245 = vld [vmem:[%s1 + $0x8c] sm:$0xf]
      %v246 = vld [vmem:[%s2] sm:$0x1]
      %v248 = vlaneseq
      %v249 = vshrl.u32 %v248, 7
      %v250 = vsub.s32 0, %v249
      %v251 = vrot.slane %v246, %v250
      %v285 = vunpack.c.l.b16 %v178
      %v286 = vunpack.c.h.b16 %v178
      %v287 = vunpack.c.l.b16 %v179
      %v288 = vunpack.c.l.b16 %v180
      %v289 = vunpack.c.h.b16 %v180
      %v290 = vunpack.c.l.b16 %v181
      %v291 = vunpack.c.l.b16 %v182
      %v292 = vunpack.c.h.b16 %v182
      %v293 = vunpack.c.l.b16 %v183
      %v294 = vunpack.c.l.b16 %v184
      %v295 = vunpack.c.h.b16 %v184
      %v296 = vunpack.c.l.b16 %v185
      %v297 = vunpack.c.l.b16 %v186
      %v298 = vunpack.c.h.b16 %v186
      %v299 = vunpack.c.l.b16 %v187
      %v300 = vunpack.c.l.b16 %v188
      %v301 = vunpack.c.h.b16 %v188
      %v302 = vunpack.c.l.b16 %v189
      %v303 = vunpack.c.l.b16 %v190
      %v304 = vunpack.c.h.b16 %v190
      %v305 = vunpack.c.l.b16 %v191
      %v306 = vunpack.c.l.b16 %v192
      %v307 = vunpack.c.h.b16 %v192
      %v308 = vunpack.c.l.b16 %v193
      %v309 = vunpack.c.l.b16 %v194
      %v310 = vunpack.c.h.b16 %v194
      %v311 = vunpack.c.l.b16 %v195
      %v312 = vunpack.c.l.b16 %v196
      %v313 = vunpack.c.h.b16 %v196
      %v314 = vunpack.c.l.b16 %v197
      %v315 = vunpack.c.l.b16 %v198
      %v316 = vunpack.c.h.b16 %v198
      %v317 = vunpack.c.l.b16 %v199
      %v318 = vunpack.c.l.b16 %v200
      %v319 = vunpack.c.h.b16 %v200
      %v320 = vunpack.c.l.b16 %v201
      %v321 = vunpack.c.l.b16 %v202
      %v322 = vunpack.c.h.b16 %v202
      %v323 = vunpack.c.l.b16 %v203
      %v324 = vunpack.c.l.b16 %v204
      %v325 = vunpack.c.h.b16 %v204
      %v326 = vunpack.c.l.b16 %v205
      %v327 = vunpack.c.l.b16 %v206
      %v328 = vunpack.c.h.b16 %v206
      %v329 = vunpack.c.l.b16 %v207
      %v330 = vunpack.c.l.b16 %v208
      %v331 = vunpack.c.h.b16 %v208
      %v332 = vunpack.c.l.b16 %v209
      %v333 = vpack.c.b16 %v288, %v285
      %v334 = vpack.c.b16 %v289, %v286
      %v335 = vpack.c.b16 %v290, %v287
      %v336 = vpack.c.b16 %v294, %v291
      %v337 = vpack.c.b16 %v295, %v292
      %v338 = vpack.c.b16 %v296, %v293
      %v339 = vpack.c.b16 %v300, %v297
      %v340 = vpack.c.b16 %v301, %v298
      %v341 = vpack.c.b16 %v302, %v299
      %v342 = vpack.c.b16 %v306, %v303
      %v343 = vpack.c.b16 %v307, %v304
      %v344 = vpack.c.b16 %v308, %v305
      %v345 = vpack.c.b16 %v312, %v309
      %v346 = vpack.c.b16 %v313, %v310
      %v347 = vpack.c.b16 %v314, %v311
      %v348 = vpack.c.b16 %v318, %v315
      %v349 = vpack.c.b16 %v319, %v316
      %v350 = vpack.c.b16 %v320, %v317
      %v351 = vpack.c.b16 %v324, %v321
      %v352 = vpack.c.b16 %v325, %v322
      %v353 = vpack.c.b16 %v326, %v323
      %v354 = vpack.c.b16 %v330, %v327
      %v355 = vpack.c.b16 %v331, %v328
      %v356 = vpack.c.b16 %v332, %v329
      %v409 = vunpack.c.l.b16 %v210
      %v410 = vunpack.c.l.b16 %v211
      %v411 = vunpack.c.l.b16 %v212
      %v412 = vunpack.c.l.b16 %v213
      %v413 = vunpack.c.l.b16 %v214
      %v414 = vunpack.c.l.b16 %v215
      %v415 = vunpack.c.l.b16 %v216
      %v416 = vunpack.c.l.b16 %v217
      %v417 = vunpack.c.l.b16 %v218
      %v418 = vunpack.c.l.b16 %v219
      %v419 = vunpack.c.l.b16 %v220
      %v420 = vunpack.c.l.b16 %v221
      %v421 = vunpack.c.l.b16 %v222
      %v422 = vunpack.c.l.b16 %v223
      %v423 = vunpack.c.l.b16 %v224
      %v424 = vunpack.c.l.b16 %v225
      %v425 = vunpack.c.l.b16 %v226
      %v426 = vunpack.c.l.b16 %v227
      %v427 = vunpack.c.l.b16 %v228
      %v428 = vunpack.c.l.b16 %v229
      %v429 = vunpack.c.l.b16 %v230
      %v430 = vunpack.c.l.b16 %v231
      %v431 = vunpack.c.l.b16 %v232
      %v432 = vunpack.c.l.b16 %v233
      %v433 = vunpack.c.l.b16 %v234
      %v434 = vunpack.c.l.b16 %v235
      %v435 = vunpack.c.l.b16 %v236
      %v436 = vunpack.c.l.b16 %v237
      %v437 = vunpack.c.l.b16 %v238
      %v438 = vunpack.c.l.b16 %v239
      %v439 = vunpack.c.l.b16 %v240
      %v440 = vunpack.c.l.b16 %v241
      %v441 = vunpack.c.l.b16 %v242
      %v442 = vunpack.c.l.b16 %v243
      %v443 = vunpack.c.l.b16 %v244
      %v444 = vunpack.c.l.b16 %v245
      %v445 = vpack.c.b16 %v410, %v409
      %v446 = vpack.c.b16 %v412, %v411
      %v447 = vpack.c.b16 %v414, %v413
      %v448 = vpack.c.b16 %v416, %v415
      %v449 = vpack.c.b16 %v418, %v417
      %v450 = vpack.c.b16 %v420, %v419
      %v451 = vpack.c.b16 %v422, %v421
      %v452 = vpack.c.b16 %v424, %v423
      %v453 = vpack.c.b16 %v426, %v425
      %v454 = vpack.c.b16 %v428, %v427
      %v455 = vpack.c.b16 %v430, %v429
      %v456 = vpack.c.b16 %v432, %v431
      %v457 = vpack.c.b16 %v434, %v433
      %v458 = vpack.c.b16 %v436, %v435
      %v459 = vpack.c.b16 %v438, %v437
      %v460 = vpack.c.b16 %v440, %v439
      %v461 = vpack.c.b16 %v442, %v441
      %v462 = vpack.c.b16 %v444, %v443
      %vm481 = vcmask 261120
      %v483 = vsel %vm481, %v335, 0
      %v486 = vsel %vm481, %v338, 0
      %v489 = vsel %vm481, %v341, 0
      %v492 = vsel %vm481, %v344, 0
      %v495 = vsel %vm481, %v347, 0
      %v498 = vsel %vm481, %v350, 0
      %v501 = vsel %vm481, %v353, 0
      %v504 = vsel %vm481, %v356, 0
      %506 = vmatprep.subr.bf16.mxu0 0
      %507 = vmatpush1.bf16.msra.mxu0 %v452
      %508 = vmatprep.subr.bf16.mxu0 0
      %509 = vmatpush1.bf16.msra.mxu0 %v451
      %510 = vmatprep.subr.bf16.mxu0 0
      %511 = vmatpush1.bf16.msra.mxu0 %v450
      %512 = vmatprep.subr.bf16.mxu0 0
      %513 = vmatpush1.bf16.msra.mxu0 %v449
      %514 = vmatprep.subr.bf16.mxu0 0
      %515 = vmatpush1.bf16.msra.mxu0 %v448
      %516 = vmatprep.subr.bf16.mxu0 0
      %517 = vmatpush1.bf16.msra.mxu0 %v447
      %518 = vmatprep.subr.bf16.mxu0 0
      %519 = vmatpush1.bf16.msra.mxu0 %v446
      %520 = vmatprep.subr.bf16.mxu0 0
      %521 = vmatpush1.bf16.msra.mxu0 %v445
      %522 = vmatprep.subr.bf16.mxu0 0
      %523 = vmatpush2.bf16.msra.mxu0 %v460
      %524 = vmatprep.subr.bf16.mxu0 0
      %525 = vmatpush2.bf16.msra.mxu0 %v459
      %526 = vmatprep.subr.bf16.mxu0 0
      %527 = vmatpush2.bf16.msra.mxu0 %v458
      %528 = vmatprep.subr.bf16.mxu0 0
      %529 = vmatpush2.bf16.msra.mxu0 %v457
      %530 = vmatprep.subr.bf16.mxu0 0
      %531 = vmatpush2.bf16.msra.mxu0 %v456
      %532 = vmatprep.subr.bf16.mxu0 0
      %533 = vmatpush2.bf16.msra.mxu0 %v455
      %534 = vmatprep.subr.bf16.mxu0 0
      %535 = vmatpush2.bf16.msra.mxu0 %v454
      %536 = vmatprep.subr.bf16.mxu0 0
      %537 = vmatpush2.bf16.msra.mxu0 %v453
      %538 = vmatprep.mubr.bf16.mxu0 %v334
      %539 = vmatmul.mubr.bf16.gmra.mxu0 %v333
      %v540 = vpop.f32.mrf.mxu0
      %v541 = vadd.f32 %v251, %v540
      %v542 = vpop.f32.mrf.mxu0
      %v543 = vpop.f32.mrf.mxu0
      %v544 = vadd.f32 %v251, %v543
      %v545 = vpop.f32.mrf.mxu0
      %546 = vmatprep.mubr.bf16.mxu0 %v337
      %547 = vmatmul.mubr.bf16.gmra.mxu0 %v336
      %v548 = vpop.f32.mrf.mxu0
      %v549 = vadd.f32 %v251, %v548
      %v550 = vpop.f32.mrf.mxu0
      %v551 = vpop.f32.mrf.mxu0
      %v552 = vadd.f32 %v251, %v551
      %v553 = vpop.f32.mrf.mxu0
      %554 = vmatprep.mubr.bf16.mxu0 %v340
      %555 = vmatmul.mubr.bf16.gmra.mxu0 %v339
      %v556 = vpop.f32.mrf.mxu0
      %v557 = vadd.f32 %v251, %v556
      %v558 = vpop.f32.mrf.mxu0
      %v559 = vpop.f32.mrf.mxu0
      %v560 = vadd.f32 %v251, %v559
      %v561 = vpop.f32.mrf.mxu0
      %562 = vmatprep.mubr.bf16.mxu0 %v343
      %563 = vmatmul.mubr.bf16.gmra.mxu0 %v342
      %v564 = vpop.f32.mrf.mxu0
      %v565 = vadd.f32 %v251, %v564
      %v566 = vpop.f32.mrf.mxu0
      %v567 = vpop.f32.mrf.mxu0
      %v568 = vadd.f32 %v251, %v567
      %v569 = vpop.f32.mrf.mxu0
      %570 = vmatprep.mubr.bf16.mxu0 %v346
      %571 = vmatmul.mubr.bf16.gmra.mxu0 %v345
      %v572 = vpop.f32.mrf.mxu0
      %v573 = vadd.f32 %v251, %v572
      %v574 = vpop.f32.mrf.mxu0
      %v575 = vpop.f32.mrf.mxu0
      %v576 = vadd.f32 %v251, %v575
      %v577 = vpop.f32.mrf.mxu0
      %578 = vmatprep.mubr.bf16.mxu0 %v349
      %579 = vmatmul.mubr.bf16.gmra.mxu0 %v348
      %v580 = vpop.f32.mrf.mxu0
      %v581 = vadd.f32 %v251, %v580
      %v582 = vpop.f32.mrf.mxu0
      %v583 = vpop.f32.mrf.mxu0
      %v584 = vadd.f32 %v251, %v583
      %v585 = vpop.f32.mrf.mxu0
      %586 = vmatprep.mubr.bf16.mxu0 %v352
      %587 = vmatmul.mubr.bf16.gmra.mxu0 %v351
      %v588 = vpop.f32.mrf.mxu0
      %v589 = vadd.f32 %v251, %v588
      %v590 = vpop.f32.mrf.mxu0
      %v591 = vpop.f32.mrf.mxu0
      %v592 = vadd.f32 %v251, %v591
      %v593 = vpop.f32.mrf.mxu0
      %594 = vmatprep.mubr.bf16.mxu0 %v355
      %595 = vmatmul.mubr.bf16.gmra.mxu0 %v354
      %v596 = vpop.f32.mrf.mxu0
      %v597 = vadd.f32 %v251, %v596
      %v598 = vpop.f32.mrf.mxu0
      %v599 = vpop.f32.mrf.mxu0
      %v600 = vadd.f32 %v251, %v599
      %v601 = vpop.f32.mrf.mxu0
      %602 = vdwg.mxu0
      %603 = vmatprep.subr.bf16.mxu0 0
      %604 = vmatpush1.bf16.msra.mxu0 0
      %605 = vmatprep.subr.bf16.mxu0 0
      %606 = vmatpush1.bf16.msra.mxu0 0
      %607 = vmatprep.subr.bf16.mxu0 0
      %608 = vmatpush1.bf16.msra.mxu0 0
      %609 = vmatprep.subr.bf16.mxu0 0
      %610 = vmatpush1.bf16.msra.mxu0 0
      %611 = vmatprep.subr.bf16.mxu0 0
      %612 = vmatpush1.bf16.msra.mxu0 0
      %613 = vmatprep.subr.bf16.mxu0 0
      %614 = vmatpush1.bf16.msra.mxu0 0
      %615 = vmatprep.subr.bf16.mxu0 0
      %616 = vmatpush1.bf16.msra.mxu0 %v462
      %617 = vmatprep.subr.bf16.mxu0 0
      %618 = vmatpush1.bf16.msra.mxu0 %v461
      %619 = vmatprep.subr.bf16.mxu0 0
      %620 = vmatpush2.bf16.msra.mxu0 0
      %621 = vmatprep.subr.bf16.mxu0 0
      %622 = vmatpush2.bf16.msra.mxu0 0
      %623 = vmatprep.subr.bf16.mxu0 0
      %624 = vmatpush2.bf16.msra.mxu0 0
      %625 = vmatprep.subr.bf16.mxu0 0
      %626 = vmatpush2.bf16.msra.mxu0 0
      %627 = vmatprep.subr.bf16.mxu0 0
      %628 = vmatpush2.bf16.msra.mxu0 0
      %629 = vmatprep.subr.bf16.mxu0 0
      %630 = vmatpush2.bf16.msra.mxu0 0
      %631 = vmatprep.subr.bf16.mxu0 0
      %632 = vmatpush2.bf16.msra.mxu0 0
      %633 = vmatprep.subr.bf16.mxu0 0
      %634 = vmatpush2.bf16.msra.mxu0 0
      %635 = vmatprep.mubr.bf16.mxu0 0
      %636 = vmatmul.mubr.bf16.gmra.mxu0 %v483
      %v637 = vpop.f32.mrf.mxu0
      %v638 = vadd.f32 %v541, %v637
      %v639 = vpop.f32.mrf.mxu0
      %v640 = vpop.f32.mrf.mxu0
      %v641 = vadd.f32 %v544, %v640
      %v642 = vpop.f32.mrf.mxu0
      %643 = vmatprep.mubr.bf16.mxu0 0
      %644 = vmatmul.mubr.bf16.gmra.mxu0 %v486
      %v645 = vpop.f32.mrf.mxu0
      %v646 = vadd.f32 %v549, %v645
      %v647 = vpop.f32.mrf.mxu0
      %v648 = vpop.f32.mrf.mxu0
      %v649 = vadd.f32 %v552, %v648
      %v650 = vpop.f32.mrf.mxu0
      %651 = vmatprep.mubr.bf16.mxu0 0
      %652 = vmatmul.mubr.bf16.gmra.mxu0 %v489
      %v653 = vpop.f32.mrf.mxu0
      %v654 = vadd.f32 %v557, %v653
      %v655 = vpop.f32.mrf.mxu0
      %v656 = vpop.f32.mrf.mxu0
      %v657 = vadd.f32 %v560, %v656
      %v658 = vpop.f32.mrf.mxu0
      %659 = vmatprep.mubr.bf16.mxu0 0
      %660 = vmatmul.mubr.bf16.gmra.mxu0 %v492
      %v661 = vpop.f32.mrf.mxu0
      %v662 = vadd.f32 %v565, %v661
      %v663 = vpop.f32.mrf.mxu0
      %v664 = vpop.f32.mrf.mxu0
      %v665 = vadd.f32 %v568, %v664
      %v666 = vpop.f32.mrf.mxu0
      %667 = vmatprep.mubr.bf16.mxu0 0
      %668 = vmatmul.mubr.bf16.gmra.mxu0 %v495
      %v669 = vpop.f32.mrf.mxu0
      %v670 = vadd.f32 %v573, %v669
      %v671 = vpop.f32.mrf.mxu0
      %v672 = vpop.f32.mrf.mxu0
      %v673 = vadd.f32 %v576, %v672
      %v674 = vpop.f32.mrf.mxu0
      %675 = vmatprep.mubr.bf16.mxu0 0
      %676 = vmatmul.mubr.bf16.gmra.mxu0 %v498
      %v677 = vpop.f32.mrf.mxu0
      %v678 = vadd.f32 %v581, %v677
      %v679 = vpop.f32.mrf.mxu0
      %v680 = vpop.f32.mrf.mxu0
      %v681 = vadd.f32 %v584, %v680
      %v682 = vpop.f32.mrf.mxu0
      %683 = vmatprep.mubr.bf16.mxu0 0
      %684 = vmatmul.mubr.bf16.gmra.mxu0 %v501
      %v685 = vpop.f32.mrf.mxu0
      %v686 = vadd.f32 %v589, %v685
      %v687 = vpop.f32.mrf.mxu0
      %v688 = vpop.f32.mrf.mxu0
      %v689 = vadd.f32 %v592, %v688
      %v690 = vpop.f32.mrf.mxu0
      %691 = vmatprep.mubr.bf16.mxu0 0
      %692 = vmatmul.mubr.bf16.gmra.mxu0 %v504
      %v693 = vpop.f32.mrf.mxu0
      %v694 = vadd.f32 %v597, %v693
      %v695 = vpop.f32.mrf.mxu0
      %v696 = vpop.f32.mrf.mxu0
      %v697 = vadd.f32 %v600, %v696
      %v698 = vpop.f32.mrf.mxu0
      %699 = vdwg.mxu0
      %v700 = vmax.f32 %v638, 0.0
      %v701 = vmax.f32 %v641, 0.0
      %v702 = vmax.f32 %v646, 0.0
      %v703 = vmax.f32 %v649, 0.0
      %v704 = vmax.f32 %v654, 0.0
      %v705 = vmax.f32 %v657, 0.0
      %v706 = vmax.f32 %v662, 0.0
      %v707 = vmax.f32 %v665, 0.0
      %v708 = vmax.f32 %v670, 0.0
      %v709 = vmax.f32 %v673, 0.0
      %v710 = vmax.f32 %v678, 0.0
      %v711 = vmax.f32 %v681, 0.0
      %v712 = vmax.f32 %v686, 0.0
      %v713 = vmax.f32 %v689, 0.0
      %v714 = vmax.f32 %v694, 0.0
      %v715 = vmax.f32 %v697, 0.0
      %vm716 = vcmask 523264
      %717 = vst.msk [vmem:[%s175] sm:$0xff] %vm716, %v700
      %718 = vst.msk [vmem:[%s175 + $0x8] sm:$0xff] %vm716, %v701
      %719 = vst.msk [vmem:[%s175 + $0x10] sm:$0xff] %vm716, %v702
      %720 = vst.msk [vmem:[%s175 + $0x18] sm:$0xff] %vm716, %v703
      %721 = vst.msk [vmem:[%s175 + $0x20] sm:$0xff] %vm716, %v704
      %722 = vst.msk [vmem:[%s175 + $0x28] sm:$0xff] %vm716, %v705
      %723 = vst.msk [vmem:[%s175 + $0x30] sm:$0xff] %vm716, %v706
      %724 = vst.msk [vmem:[%s175 + $0x38] sm:$0xff] %vm716, %v707
      %725 = vst.msk [vmem:[%s175 + $0x40] sm:$0xff] %vm716, %v708
      %726 = vst.msk [vmem:[%s175 + $0x48] sm:$0xff] %vm716, %v709
      %727 = vst.msk [vmem:[%s175 + $0x50] sm:$0xff] %vm716, %v710
      %728 = vst.msk [vmem:[%s175 + $0x58] sm:$0xff] %vm716, %v711
      %729 = vst.msk [vmem:[%s175 + $0x60] sm:$0xff] %vm716, %v712
      %730 = vst.msk [vmem:[%s175 + $0x68] sm:$0xff] %vm716, %v713
      %731 = vst.msk [vmem:[%s175 + $0x70] sm:$0xff] %vm716, %v714
      %732 = vst.msk [vmem:[%s175 + $0x78] sm:$0xff] %vm716, %v715
      %s733 = smul.u32 16, %s14
      %p734 = scmp.lt.s32.totalorder %s733, 31
      %s735 = scalar_select %p734, %s733, 31
      %s736 = smul.addr %s735, 8
      %s737 = scalar_lea.vmem %s3, %s736
      // Predicated region
      $region33: #{stem_forward.14} parent=31 // pred_check
        %p738 = pneg %p100
      $region34: #{stem_forward.14} parent=31 // pred_check_branch
        %740 = sbr.rel (%p738) target = $region36
      $region35: #{stem_forward.14} parent=31 // pred_region
        %s741 = smul.u32 16, %s14
      $region36: #{stem_forward.14} parent=31 // pred_fallthru
        _
    $region32: #{stem_forward.14} parent=5 // pred_fallthru
      _
    %p742 = scmp.le.s32.totalorder 2, %s9
    // Predicated region
    $region37: #{stem_forward.14} parent=5 // pred_check
      %p743 = pneg %p742
    $region38: #{stem_forward.14} parent=5 // pred_check_branch
      %745 = sbr.rel (%p743) target = $region40
    $region39: #{stem_forward.14} parent=5 // pred_region
      %s746 = ssub.s32 %s9, 2
      // Predicated region
      $region41: #{stem_forward.14} parent=39 // pred_check
        %p747 = pneg %p106
      $region42: #{stem_forward.14} parent=39 // pred_check_branch
        %749 = sbr.rel (%p747) target = $region44
      $region43: #{stem_forward.14} parent=39 // pred_region
        %s750 = smul.u32 16, %s15
        %p751 = scmp.lt.s32.totalorder %s750, 31
        %s752 = scalar_select %p751, %s750, 31
        %s753 = smul.addr %s752, 8
        %s754 = scalar_lea.vmem %s3, %s753
      $region44: #{stem_forward.14} parent=39 // pred_fallthru
        _
    $region40: #{stem_forward.14} parent=5 // pred_fallthru
      _
  $region6: #{stem_forward.14} parent=0 // loop_footer
    %s13 = sadd.s32 1, %s9
  $region7: #{stem_forward.14} parent=0 // loop_footer_branch
    %8 = sbr.rel target = $region3
  $region8: #{stem_forward.14} parent=0 // loop_exit
    _

// kernel: stem_forward.15
$region0: #{stem_forward.15}
  #allocation0 [shape = 'u32[]', space=smem, size = 0x4, offset = 0x4, fixed_abs, tag = 'smem constant byte address 0x4 - core index']
  #allocation1 [shape = 'u32[144,128]{1,0:T(1,128)}', space=vmem, size = 0x12000, scoped, tag = 'internal scratch']
  %s0 = inlined_call_operand.vmem [shape: f32[64,64], index: 0, kind: input, shape index: {}]
  %s1 = inlined_call_operand.vmem [shape: f32[64,64], index: 1, kind: input, shape index: {}]
  %s2 = inlined_call_operand.vmem [shape: f32[64,64], index: 2, kind: input, shape index: {}]
  %s3 = inlined_call_operand.vmem [shape: f32[64,64], index: 3, kind: output, shape index: {}]
  %s4 = sld [smem:[#allocation0]]
  $region45: #{stem_forward.15} parent=0
    _
  %s6 = ssub.s32 1, %s4
  %s7 = scalar_select 0, %s6, %s4
  loop: start=0, step=1, limit=4
  $region2: #{stem_forward.15} parent=0 // loop_pre_header
    _
  $region3: #{stem_forward.15} parent=0 // loop_header
    %s9 = sphi 0, %s13
    %p10 = scmp.ge.s32.totalorder %s9, 4
    %s19 = sphi 0, %s21
    %s22 = sphi 0, %s19
    %s23 = sphi 0, %s22
    %s39 = sphi 0, %s23
    %s45 = sphi 0, %s47
    %s48 = sphi 0, %s45
    %s49 = sphi 0, %s48
    %s65 = sphi 0, %s49
    %s71 = sphi 0, %s73
    %s74 = sphi 0, %s71
    %s75 = sphi 0, %s74
    %s91 = sphi 0, %s75
    %s97 = sphi 0, %s99
    %s100 = sphi 0, %s97
    %s101 = sphi 0, %s100
    %s117 = sphi 0, %s101
  $region4: #{stem_forward.15} parent=0 // loop_header_branch
    %12 = sbr.rel (%p10) target = $region8
  $region5: #{stem_forward.15} parent=0 // loop_body
    %s14 = ssub.s32 %s9, 1
    %s15 = ssub.s32 %s9, 2
    %s16 = sadd.s32 %s9, 1
    %s17 = ssub.s32 %s9, %s16
    %p18 = scmp.eq.s32.totalorder %s17, 0
    %s20 = sadd.s32 %s19, 1
    %s21 = scalar_select %p18, %s19, %s20
    %p24 = pneg %p18
    %p25 = scmp.eq.s32.totalorder %s9, 1
    %p26 = por %p24, %p25
    %p27 = scmp.ne.s32.totalorder %s19, %s22
    %p28 = scmp.eq.s32.totalorder %s9, 0
    %p29 = por %p27, %p28
    %p30 = scmp.ne.s32.totalorder %s19, %s22
    %p31 = scmp.eq.s32.totalorder %s14, 1
    %p32 = por %p30, %p31
    %p33 = scmp.ne.s32.totalorder %s22, %s23
    %p34 = scmp.eq.s32.totalorder %s14, 0
    %p35 = por %p33, %p34
    %p36 = scmp.ne.s32.totalorder %s22, %s23
    %p37 = scmp.eq.s32.totalorder %s15, 1
    %p38 = por %p36, %p37
    %p40 = scmp.ne.s32.totalorder %s23, %s39
    %p41 = scmp.eq.s32.totalorder %s15, 0
    %p42 = por %p40, %p41
    %s43 = ssub.s32 %s9, %s16
    %p44 = scmp.eq.s32.totalorder %s43, 0
    %s46 = sadd.s32 %s45, 1
    %s47 = scalar_select %p44, %s45, %s46
    %p50 = pneg %p44
    %p51 = scmp.eq.s32.totalorder %s9, 1
    %p52 = por %p50, %p51
    %p53 = scmp.ne.s32.totalorder %s45, %s48
    %p54 = scmp.eq.s32.totalorder %s9, 0
    %p55 = por %p53, %p54
    %p56 = scmp.ne.s32.totalorder %s45, %s48
    %p57 = scmp.eq.s32.totalorder %s14, 1
    %p58 = por %p56, %p57
    %p59 = scmp.ne.s32.totalorder %s48, %s49
    %p60 = scmp.eq.s32.totalorder %s14, 0
    %p61 = por %p59, %p60
    %p62 = scmp.ne.s32.totalorder %s48, %s49
    %p63 = scmp.eq.s32.totalorder %s15, 1
    %p64 = por %p62, %p63
    %p66 = scmp.ne.s32.totalorder %s49, %s65
    %p67 = scmp.eq.s32.totalorder %s15, 0
    %p68 = por %p66, %p67
    %s69 = ssub.s32 %s9, %s16
    %p70 = scmp.eq.s32.totalorder %s69, 0
    %s72 = sadd.s32 %s71, 1
    %s73 = scalar_select %p70, %s71, %s72
    %p76 = pneg %p70
    %p77 = scmp.eq.s32.totalorder %s9, 1
    %p78 = por %p76, %p77
    %p79 = scmp.ne.s32.totalorder %s71, %s74
    %p80 = scmp.eq.s32.totalorder %s9, 0
    %p81 = por %p79, %p80
    %p82 = scmp.ne.s32.totalorder %s71, %s74
    %p83 = scmp.eq.s32.totalorder %s14, 1
    %p84 = por %p82, %p83
    %p85 = scmp.ne.s32.totalorder %s74, %s75
    %p86 = scmp.eq.s32.totalorder %s14, 0
    %p87 = por %p85, %p86
    %p88 = scmp.ne.s32.totalorder %s74, %s75
    %p89 = scmp.eq.s32.totalorder %s15, 1
    %p90 = por %p88, %p89
    %p92 = scmp.ne.s32.totalorder %s75, %s91
    %p93 = scmp.eq.s32.totalorder %s15, 0
    %p94 = por %p92, %p93
    %s95 = ssub.s32 %s9, %s16
    %p96 = scmp.eq.s32.totalorder %s95, 0
    %s98 = sadd.s32 %s97, 1
    %s99 = scalar_select %p96, %s97, %s98
    %p102 = pneg %p96
    %p103 = scmp.eq.s32.totalorder %s9, 1
    %p104 = por %p102, %p103
    %p105 = scmp.ne.s32.totalorder %s97, %s100
    %p106 = scmp.eq.s32.totalorder %s9, 0
    %p107 = por %p105, %p106
    %p108 = scmp.ne.s32.totalorder %s97, %s100
    %p109 = scmp.eq.s32.totalorder %s14, 1
    %p110 = por %p108, %p109
    %p111 = scmp.ne.s32.totalorder %s100, %s101
    %p112 = scmp.eq.s32.totalorder %s14, 0
    %p113 = por %p111, %p112
    %p114 = scmp.ne.s32.totalorder %s100, %s101
    %p115 = scmp.eq.s32.totalorder %s15, 1
    %p116 = por %p114, %p115
    %p118 = scmp.ne.s32.totalorder %s101, %s117
    %p119 = scmp.eq.s32.totalorder %s15, 0
    %p120 = por %p118, %p119
    %p121 = scmp.le.s32.totalorder 1, %s9
    %p122 = scmp.lt.s32.totalorder %s9, 3
    %p123 = pnand %p121, %p122
    %p124 = pneg %p123
    // Predicated region
    $region9: #{stem_forward.15} parent=5 // pred_check
      _
    $region10: #{stem_forward.15} parent=5 // pred_check_branch
      %126 = sbr.rel (%p123) target = $region12
    $region11: #{stem_forward.15} parent=5 // pred_region
      %s127 = ssub.s32 %s9, 1
    $region12: #{stem_forward.15} parent=5 // pred_fallthru
      _
    %p128 = scmp.lt.s32.totalorder %s9, 2
    // Predicated region
    $region13: #{stem_forward.15} parent=5 // pred_check
      %p129 = pneg %p128
    $region14: #{stem_forward.15} parent=5 // pred_check_branch
      %131 = sbr.rel (%p129) target = $region16
    $region15: #{stem_forward.15} parent=5 // pred_region
      // Predicated region
      $region17: #{stem_forward.15} parent=15 // pred_check
        %p132 = pneg %p29
      $region18: #{stem_forward.15} parent=15 // pred_check_branch
        %134 = sbr.rel (%p132) target = $region20
      $region19: #{stem_forward.15} parent=15 // pred_region
        %s135 = smul.u32 4, %s9
        %p136 = scmp.lt.s32.totalorder %s135, 7
        %s137 = scalar_select %p136, %s135, 7
        %s138 = smul.addr %s137, 8
        %s139 = scalar_lea.vmem %s0, %s138
        %s140 = smul.u32 4, %s9
      $region20: #{stem_forward.15} parent=15 // pred_fallthru
        _
      // Predicated region
      $region21: #{stem_forward.15} parent=15 // pred_check
        %p141 = pneg %p55
      $region22: #{stem_forward.15} parent=15 // pred_check_branch
        %143 = sbr.rel (%p141) target = $region24
      $region23: #{stem_forward.15} parent=15 // pred_region
        %s144 = smul.u32 4, %s9
        %p145 = scmp.lt.s32.totalorder %s144, 7
        %s146 = scalar_select %p145, %s144, 7
        %s147 = smul.addr %s146, 8
        %s148 = scalar_lea.vmem %s1, %s147
        %s149 = smul.u32 4, %s9
      $region24: #{stem_forward.15} parent=15 // pred_fallthru
        _
      // Predicated region
      $region25: #{stem_forward.15} parent=15 // pred_check
        %p150 = pneg %p81
      $region26: #{stem_forward.15} parent=15 // pred_check_branch
        %152 = sbr.rel (%p150) target = $region28
      $region27: #{stem_forward.15} parent=15 // pred_region
        %s153 = smul.u32 4, %s9
        %p154 = scmp.lt.s32.totalorder %s153, 7
        %s155 = scalar_select %p154, %s153, 7
        %s156 = smul.addr %s155, 8
        %s157 = scalar_lea.vmem %s2, %s156
        %s158 = smul.u32 4, %s9
      $region28: #{stem_forward.15} parent=15 // pred_fallthru
        _
    $region16: #{stem_forward.15} parent=5 // pred_fallthru
      _
    %p159 = scmp.le.s32.totalorder 1, %s9
    %p160 = scmp.lt.s32.totalorder %s9, 3
    %p161 = pnand %p159, %p160
    %p162 = pneg %p161
    // Predicated region
    $region29: #{stem_forward.15} parent=5 // pred_check
      _
    $region30: #{stem_forward.15} parent=5 // pred_check_branch
      %164 = sbr.rel (%p161) target = $region32
    $region31: #{stem_forward.15} parent=5 // pred_region
      %s165 = ssub.s32 %s9, 1
      %s166 = smul.u32 4, %s14
      %p167 = scmp.lt.s32.totalorder %s166, 7
      %s168 = scalar_select %p167, %s166, 7
      %s169 = smul.addr %s168, 8
      %s170 = scalar_lea.vmem %s0, %s169
      %p171 = pneg %p35
      %p172 = pneg %p32
      %s173 = smul.u32 4, %s14
      %p174 = scmp.lt.s32.totalorder %s173, 7
      %s175 = scalar_select %p174, %s173, 7
      %s176 = smul.addr %s175, 8
      %s177 = scalar_lea.vmem %s1, %s176
      %p178 = pneg %p61
      %p179 = pneg %p58
      %s180 = smul.u32 4, %s14
      %p181 = scmp.lt.s32.totalorder %s180, 7
      %s182 = scalar_select %p181, %s180, 7
      %s183 = smul.addr %s182, 8
      %s184 = scalar_lea.vmem %s2, %s183
      %p185 = pneg %p87
      %p186 = pneg %p84
      %p187 = pneg %p113
      %p188 = pneg %p110
      %s189 = smul.u32 4, %s14
      %p190 = scmp.lt.s32.totalorder %s189, 7
      %s191 = scalar_select %p190, %s189, 7
      %s192 = smul.addr %s191, 8
      %s193 = scalar_lea.vmem %s3, %s192
      %s194 = smul.u32 4, %s14
      %p195 = scmp.lt.s32.totalorder %s194, 7
      %s196 = scalar_select %p195, %s194, 7
      %s197 = smul.addr %s196, 8
      %s198 = scalar_lea.vmem %s0, %s197
      %s199 = smul.u32 4, %s14
      %s200 = smul.u32 4, %s14
      %p201 = scmp.lt.s32.totalorder %s200, 7
      %s202 = scalar_select %p201, %s200, 7
      %s203 = smul.addr %s202, 8
      %s204 = scalar_lea.vmem %s1, %s203
      %s205 = smul.u32 4, %s14
      %s206 = smul.u32 4, %s14
      %p207 = scmp.lt.s32.totalorder %s206, 7
      %s208 = scalar_select %p207, %s206, 7
      %s209 = smul.addr %s208, 8
      %s210 = scalar_lea.vmem %s2, %s209
      %s211 = smul.u32 4, %s14
      %s212 = smul.u32 4, %s14
      %p213 = scmp.lt.s32.totalorder %s212, 7
      %s214 = scalar_select %p213, %s212, 7
      %s215 = smul.addr %s214, 8
      %s216 = scalar_lea.vmem %s3, %s215
      %s217 = smul.u32 4, %s14
      %v218 = vld [vmem:[%s198] sm:$0xff]
      %v219 = vld [vmem:[%s198 + $0x8] sm:$0xff]
      %v220 = vld [vmem:[%s198 + $0x10] sm:$0xff]
      %v221 = vld [vmem:[%s198 + $0x18] sm:$0xff]
      %v222 = vld [vmem:[%s204] sm:$0xff]
      %v223 = vld [vmem:[%s204 + $0x8] sm:$0xff]
      %v224 = vld [vmem:[%s204 + $0x10] sm:$0xff]
      %v225 = vld [vmem:[%s204 + $0x18] sm:$0xff]
      %v226 = vmax.f32 %v218, %v222
      %v227 = vmax.f32 %v219, %v223
      %v228 = vmax.f32 %v220, %v224
      %v229 = vmax.f32 %v221, %v225
      %v230 = vld [vmem:[%s210] sm:$0xff]
      %v231 = vld [vmem:[%s210 + $0x8] sm:$0xff]
      %v232 = vld [vmem:[%s210 + $0x10] sm:$0xff]
      %v233 = vld [vmem:[%s210 + $0x18] sm:$0xff]
      %v234 = vmax.f32 %v226, %v230
      %v235 = vmax.f32 %v227, %v231
      %v236 = vmax.f32 %v228, %v232
      %v237 = vmax.f32 %v229, %v233
      %vm238 = vcmask 523264
      %239 = vst.msk [vmem:[%s216] sm:$0xff] %vm238, %v234
      %240 = vst.msk [vmem:[%s216 + $0x8] sm:$0xff] %vm238, %v235
      %241 = vst.msk [vmem:[%s216 + $0x10] sm:$0xff] %vm238, %v236
      %242 = vst.msk [vmem:[%s216 + $0x18] sm:$0xff] %vm238, %v237
      %s243 = smul.u32 4, %s14
      %p244 = scmp.lt.s32.totalorder %s243, 7
      %s245 = scalar_select %p244, %s243, 7
      %s246 = smul.addr %s245, 8
      %s247 = scalar_lea.vmem %s3, %s246
      // Predicated region
      $region33: #{stem_forward.15} parent=31 // pred_check
        %p248 = pneg %p110
      $region34: #{stem_forward.15} parent=31 // pred_check_branch
        %250 = sbr.rel (%p248) target = $region36
      $region35: #{stem_forward.15} parent=31 // pred_region
        %s251 = smul.u32 4, %s14
      $region36: #{stem_forward.15} parent=31 // pred_fallthru
        _
    $region32: #{stem_forward.15} parent=5 // pred_fallthru
      _
    %p252 = scmp.le.s32.totalorder 2, %s9
    // Predicated region
    $region37: #{stem_forward.15} parent=5 // pred_check
      %p253 = pneg %p252
    $region38: #{stem_forward.15} parent=5 // pred_check_branch
      %255 = sbr.rel (%p253) target = $region40
    $region39: #{stem_forward.15} parent=5 // pred_region
      %s256 = ssub.s32 %s9, 2
      // Predicated region
      $region41: #{stem_forward.15} parent=39 // pred_check
        %p257 = pneg %p116
      $region42: #{stem_forward.15} parent=39 // pred_check_branch
        %259 = sbr.rel (%p257) target = $region44
      $region43: #{stem_forward.15} parent=39 // pred_region
        %s260 = smul.u32 4, %s15
        %p261 = scmp.lt.s32.totalorder %s260, 7
        %s262 = scalar_select %p261, %s260, 7
        %s263 = smul.addr %s262, 8
        %s264 = scalar_lea.vmem %s3, %s263
      $region44: #{stem_forward.15} parent=39 // pred_fallthru
        _
    $region40: #{stem_forward.15} parent=5 // pred_fallthru
      _
  $region6: #{stem_forward.15} parent=0 // loop_footer
    %s13 = sadd.s32 1, %s9
  $region7: #{stem_forward.15} parent=0 // loop_footer_branch
    %8 = sbr.rel target = $region3
  $region8: #{stem_forward.15} parent=0 // loop_exit
    _

// kernel: stem_forward.17
$region0: #{stem_forward.17}
  #allocation0 [shape = 'u32[]', space=smem, size = 0x4, offset = 0x4, fixed_abs, tag = 'smem constant byte address 0x4 - core index']
  #allocation1 [shape = 'u32[144,128]{1,0:T(1,128)}', space=vmem, size = 0x12000, scoped, tag = 'internal scratch']
  %s0 = inlined_call_operand.vmem [shape: bf16[64,160], index: 0, kind: input, shape index: {}]
  %s1 = inlined_call_operand.vmem [shape: bf16[160,128], index: 1, kind: input, shape index: {}]
  %s2 = inlined_call_operand.vmem [shape: f32[1,128], index: 2, kind: input, shape index: {}]
  %s3 = inlined_call_operand.vmem [shape: f32[64,128], index: 3, kind: output, shape index: {}]
  %s4 = sld [smem:[#allocation0]]
  $region45: #{stem_forward.17} parent=0
    _
  %s6 = ssub.s32 1, %s4
  %s7 = scalar_select 0, %s6, %s4
  loop: start=0, step=1, limit=4
  $region2: #{stem_forward.17} parent=0 // loop_pre_header
    _
  $region3: #{stem_forward.17} parent=0 // loop_header
    %s9 = sphi 0, %s13
    %p10 = scmp.ge.s32.totalorder %s9, 4
    %s19 = sphi 0, %s21
    %s22 = sphi 0, %s19
    %s23 = sphi 0, %s22
    %s39 = sphi 0, %s23
    %s43 = sphi 0, %s43
    %s45 = sphi 0, %s43
    %s46 = sphi 0, %s45
    %s60 = sphi 0, %s46
    %s64 = sphi 0, %s64
    %s66 = sphi 0, %s64
    %s67 = sphi 0, %s66
    %s81 = sphi 0, %s67
    %s87 = sphi 0, %s89
    %s90 = sphi 0, %s87
    %s91 = sphi 0, %s90
    %s107 = sphi 0, %s91
  $region4: #{stem_forward.17} parent=0 // loop_header_branch
    %12 = sbr.rel (%p10) target = $region8
  $region5: #{stem_forward.17} parent=0 // loop_body
    %s14 = ssub.s32 %s9, 1
    %s15 = ssub.s32 %s9, 2
    %s16 = sadd.s32 %s9, 1
    %s17 = ssub.s32 %s9, %s16
    %p18 = scmp.eq.s32.totalorder %s17, 0
    %s20 = sadd.s32 %s19, 1
    %s21 = scalar_select %p18, %s19, %s20
    %p24 = pneg %p18
    %p25 = scmp.eq.s32.totalorder %s9, 1
    %p26 = por %p24, %p25
    %p27 = scmp.ne.s32.totalorder %s19, %s22
    %p28 = scmp.eq.s32.totalorder %s9, 0
    %p29 = por %p27, %p28
    %p30 = scmp.ne.s32.totalorder %s19, %s22
    %p31 = scmp.eq.s32.totalorder %s14, 1
    %p32 = por %p30, %p31
    %p33 = scmp.ne.s32.totalorder %s22, %s23
    %p34 = scmp.eq.s32.totalorder %s14, 0
    %p35 = por %p33, %p34
    %p36 = scmp.ne.s32.totalorder %s22, %s23
    %p37 = scmp.eq.s32.totalorder %s15, 1
    %p38 = por %p36, %p37
    %p40 = scmp.ne.s32.totalorder %s23, %s39
    %p41 = scmp.eq.s32.totalorder %s15, 0
    %p42 = por %p40, %p41
    %s44 = sadd.s32 %s43, 1
    %p47 = scmp.eq.s32.totalorder %s9, 1
    %p48 = scmp.ne.s32.totalorder %s43, %s45
    %p49 = scmp.eq.s32.totalorder %s9, 0
    %p50 = por %p48, %p49
    %p51 = scmp.ne.s32.totalorder %s43, %s45
    %p52 = scmp.eq.s32.totalorder %s14, 1
    %p53 = por %p51, %p52
    %p54 = scmp.ne.s32.totalorder %s45, %s46
    %p55 = scmp.eq.s32.totalorder %s14, 0
    %p56 = por %p54, %p55
    %p57 = scmp.ne.s32.totalorder %s45, %s46
    %p58 = scmp.eq.s32.totalorder %s15, 1
    %p59 = por %p57, %p58
    %p61 = scmp.ne.s32.totalorder %s46, %s60
    %p62 = scmp.eq.s32.totalorder %s15, 0
    %p63 = por %p61, %p62
    %s65 = sadd.s32 %s64, 1
    %p68 = scmp.eq.s32.totalorder %s9, 1
    %p69 = scmp.ne.s32.totalorder %s64, %s66
    %p70 = scmp.eq.s32.totalorder %s9, 0
    %p71 = por %p69, %p70
    %p72 = scmp.ne.s32.totalorder %s64, %s66
    %p73 = scmp.eq.s32.totalorder %s14, 1
    %p74 = por %p72, %p73
    %p75 = scmp.ne.s32.totalorder %s66, %s67
    %p76 = scmp.eq.s32.totalorder %s14, 0
    %p77 = por %p75, %p76
    %p78 = scmp.ne.s32.totalorder %s66, %s67
    %p79 = scmp.eq.s32.totalorder %s15, 1
    %p80 = por %p78, %p79
    %p82 = scmp.ne.s32.totalorder %s67, %s81
    %p83 = scmp.eq.s32.totalorder %s15, 0
    %p84 = por %p82, %p83
    %s85 = ssub.s32 %s9, %s16
    %p86 = scmp.eq.s32.totalorder %s85, 0
    %s88 = sadd.s32 %s87, 1
    %s89 = scalar_select %p86, %s87, %s88
    %p92 = pneg %p86
    %p93 = scmp.eq.s32.totalorder %s9, 1
    %p94 = por %p92, %p93
    %p95 = scmp.ne.s32.totalorder %s87, %s90
    %p96 = scmp.eq.s32.totalorder %s9, 0
    %p97 = por %p95, %p96
    %p98 = scmp.ne.s32.totalorder %s87, %s90
    %p99 = scmp.eq.s32.totalorder %s14, 1
    %p100 = por %p98, %p99
    %p101 = scmp.ne.s32.totalorder %s90, %s91
    %p102 = scmp.eq.s32.totalorder %s14, 0
    %p103 = por %p101, %p102
    %p104 = scmp.ne.s32.totalorder %s90, %s91
    %p105 = scmp.eq.s32.totalorder %s15, 1
    %p106 = por %p104, %p105
    %p108 = scmp.ne.s32.totalorder %s91, %s107
    %p109 = scmp.eq.s32.totalorder %s15, 0
    %p110 = por %p108, %p109
    %p111 = scmp.le.s32.totalorder 1, %s9
    %p112 = scmp.lt.s32.totalorder %s9, 3
    %p113 = pnand %p111, %p112
    %p114 = pneg %p113
    // Predicated region
    $region9: #{stem_forward.17} parent=5 // pred_check
      _
    $region10: #{stem_forward.17} parent=5 // pred_check_branch
      %116 = sbr.rel (%p113) target = $region12
    $region11: #{stem_forward.17} parent=5 // pred_region
      %s117 = ssub.s32 %s9, 1
      // Predicated region
      $region13: #{stem_forward.17} parent=11 // pred_check
        %p118 = pneg %p56
      $region14: #{stem_forward.17} parent=11 // pred_check_branch
        %120 = sbr.rel (%p118) target = $region16
      $region15: #{stem_forward.17} parent=11 // pred_region
        _
      $region16: #{stem_forward.17} parent=11 // pred_fallthru
        _
      // Predicated region
      $region17: #{stem_forward.17} parent=11 // pred_check
        %p121 = pneg %p77
      $region18: #{stem_forward.17} parent=11 // pred_check_branch
        %123 = sbr.rel (%p121) target = $region20
      $region19: #{stem_forward.17} parent=11 // pred_region
        _
      $region20: #{stem_forward.17} parent=11 // pred_fallthru
        _
    $region12: #{stem_forward.17} parent=5 // pred_fallthru
      _
    %p124 = scmp.lt.s32.totalorder %s9, 2
    // Predicated region
    $region21: #{stem_forward.17} parent=5 // pred_check
      %p125 = pneg %p124
    $region22: #{stem_forward.17} parent=5 // pred_check_branch
      %127 = sbr.rel (%p125) target = $region24
    $region23: #{stem_forward.17} parent=5 // pred_region
      // Predicated region
      $region25: #{stem_forward.17} parent=23 // pred_check
        %p128 = pneg %p29
      $region26: #{stem_forward.17} parent=23 // pred_check_branch
        %130 = sbr.rel (%p128) target = $region28
      $region27: #{stem_forward.17} parent=23 // pred_region
        %s131 = smul.u32 4, %s9
        %p132 = scmp.lt.s32.totalorder %s131, 7
        %s133 = scalar_select %p132, %s131, 7
        %s134 = smul.addr %s133, 2
        %s135 = smul.addr %s134, 4
        %s136 = scalar_lea.vmem %s0, %s135
        %s137 = smul.u32 4, %s9
      $region28: #{stem_forward.17} parent=23 // pred_fallthru
        _
    $region24: #{stem_forward.17} parent=5 // pred_fallthru
      _
    %p138 = scmp.le.s32.totalorder 1, %s9
    %p139 = scmp.lt.s32.totalorder %s9, 3
    %p140 = pnand %p138, %p139
    %p141 = pneg %p140
    // Predicated region
    $region29: #{stem_forward.17} parent=5 // pred_check
      _
    $region30: #{stem_forward.17} parent=5 // pred_check_branch
      %143 = sbr.rel (%p140) target = $region32
    $region31: #{stem_forward.17} parent=5 // pred_region
      %s144 = ssub.s32 %s9, 1
      %s145 = smul.u32 4, %s14
      %p146 = scmp.lt.s32.totalorder %s145, 7
      %s147 = scalar_select %p146, %s145, 7
      %s148 = smul.addr %s147, 2
      %s149 = smul.addr %s148, 4
      %s150 = scalar_lea.vmem %s0, %s149
      %p151 = pneg %p35
      %p152 = pneg %p32
      %p153 = pneg %p56
      %p154 = pneg %p53
      %p155 = pneg %p77
      %p156 = pneg %p74
      %p157 = pneg %p103
      %p158 = pneg %p100
      %s159 = smul.u32 4, %s14
      %p160 = scmp.lt.s32.totalorder %s159, 7
      %s161 = scalar_select %p160, %s159, 7
      %s162 = smul.addr %s161, 8
      %s163 = scalar_lea.vmem %s3, %s162
      %s164 = smul.u32 4, %s14
      %p165 = scmp.lt.s32.totalorder %s164, 7
      %s166 = scalar_select %p165, %s164, 7
      %s167 = smul.addr %s166, 2
      %s168 = smul.addr %s167, 4
      %s169 = scalar_lea.vmem %s0, %s168
      %s170 = smul.u32 4, %s14
      %s171 = smul.u32 4, %s14
      %p172 = scmp.lt.s32.totalorder %s171, 7
      %s173 = scalar_select %p172, %s171, 7
      %s174 = smul.addr %s173, 8
      %s175 = scalar_lea.vmem %s3, %s174
      %s176 = smul.u32 4, %s14
      %v178 = vld [vmem:[%s169] sm:$0xff]
      %v179 = vld [vmem:[%s169 + $0x8] sm:$0xff]
      %v180 = vld [vmem:[%s169 + $0x10] sm:$0xff]
      %v181 = vld [vmem:[%s169 + $0x18] sm:$0xff]
      %v182 = vld [vmem:[%s1] sm:$0xf]
      %v183 = vld [vmem:[%s1 + $0x4] sm:$0xf]
      %v184 = vld [vmem:[%s1 + $0x8] sm:$0xf]
      %v185 = vld [vmem:[%s1 + $0xc] sm:$0xf]
      %v186 = vld [vmem:[%s1 + $0x10] sm:$0xf]
      %v187 = vld [vmem:[%s1 + $0x14] sm:$0xf]
      %v188 = vld [vmem:[%s1 + $0x18] sm:$0xf]
      %v189 = vld [vmem:[%s1 + $0x1c] sm:$0xf]
      %v190 = vld [vmem:[%s1 + $0x20] sm:$0xf]
      %v191 = vld [vmem:[%s1 + $0x24] sm:$0xf]
      %v192 = vld [vmem:[%s1 + $0x28] sm:$0xf]
      %v193 = vld [vmem:[%s1 + $0x2c] sm:$0xf]
      %v194 = vld [vmem:[%s1 + $0x30] sm:$0xf]
      %v195 = vld [vmem:[%s1 + $0x34] sm:$0xf]
      %v196 = vld [vmem:[%s1 + $0x38] sm:$0xf]
      %v197 = vld [vmem:[%s1 + $0x3c] sm:$0xf]
      %v198 = vld [vmem:[%s1 + $0x40] sm:$0xf]
      %v199 = vld [vmem:[%s1 + $0x44] sm:$0xf]
      %v200 = vld [vmem:[%s1 + $0x48] sm:$0xf]
      %v201 = vld [vmem:[%s1 + $0x4c] sm:$0xf]
      %v202 = vld [vmem:[%s2] sm:$0x1]
      %v204 = vlaneseq
      %v205 = vshrl.u32 %v204, 7
      %v206 = vsub.s32 0, %v205
      %v207 = vrot.slane %v202, %v206
      %v213 = vunpack.c.l.b16 %v178
      %v214 = vunpack.c.h.b16 %v178
      %v215 = vunpack.c.l.b16 %v179
      %v216 = vunpack.c.h.b16 %v179
      %v217 = vunpack.c.l.b16 %v180
      %v218 = vunpack.c.h.b16 %v180
      %v219 = vunpack.c.l.b16 %v181
      %v220 = vunpack.c.h.b16 %v181
      %v221 = vpack.c.b16 %v215, %v213
      %v222 = vpack.c.b16 %v216, %v214
      %v223 = vpack.c.b16 %v219, %v217
      %v224 = vpack.c.b16 %v220, %v218
      %v247 = vunpack.c.l.b16 %v182
      %v248 = vunpack.c.l.b16 %v183
      %v249 = vunpack.c.l.b16 %v184
      %v250 = vunpack.c.l.b16 %v185
      %v251 = vunpack.c.l.b16 %v186
      %v252 = vunpack.c.l.b16 %v187
      %v253 = vunpack.c.l.b16 %v188
      %v254 = vunpack.c.l.b16 %v189
      %v255 = vunpack.c.l.b16 %v190
      %v256 = vunpack.c.l.b16 %v191
      %v257 = vunpack.c.l.b16 %v192
      %v258 = vunpack.c.l.b16 %v193
      %v259 = vunpack.c.l.b16 %v194
      %v260 = vunpack.c.l.b16 %v195
      %v261 = vunpack.c.l.b16 %v196
      %v262 = vunpack.c.l.b16 %v197
      %v263 = vunpack.c.l.b16 %v198
      %v264 = vunpack.c.l.b16 %v199
      %v265 = vunpack.c.l.b16 %v200
      %v266 = vunpack.c.l.b16 %v201
      %v267 = vpack.c.b16 %v248, %v247
      %v268 = vpack.c.b16 %v250, %v249
      %v269 = vpack.c.b16 %v252, %v251
      %v270 = vpack.c.b16 %v254, %v253
      %v271 = vpack.c.b16 %v256, %v255
      %v272 = vpack.c.b16 %v258, %v257
      %v273 = vpack.c.b16 %v260, %v259
      %v274 = vpack.c.b16 %v262, %v261
      %v275 = vpack.c.b16 %v264, %v263
      %v276 = vpack.c.b16 %v266, %v265
      %vm287 = vcmask 261120
      %v289 = vsel %vm287, %v222, 0
      %v292 = vsel %vm287, %v224, 0
      %294 = vmatprep.subr.bf16.mxu0 0
      %295 = vmatpush1.bf16.msra.mxu0 %v274
      %296 = vmatprep.subr.bf16.mxu0 0
      %297 = vmatpush1.bf16.msra.mxu0 %v273
      %298 = vmatprep.subr.bf16.mxu0 0
      %299 = vmatpush1.bf16.msra.mxu0 %v272
      %300 = vmatprep.subr.bf16.mxu0 0
      %301 = vmatpush1.bf16.msra.mxu0 %v271
      %302 = vmatprep.subr.bf16.mxu0 0
      %303 = vmatpush1.bf16.msra.mxu0 %v270
      %304 = vmatprep.subr.bf16.mxu0 0
      %305 = vmatpush1.bf16.msra.mxu0 %v269
      %306 = vmatprep.subr.bf16.mxu0 0
      %307 = vmatpush1.bf16.msra.mxu0 %v268
      %308 = vmatprep.subr.bf16.mxu0 0
      %309 = vmatpush1.bf16.msra.mxu0 %v267
      %310 = vmatprep.subr.bf16.mxu0 0
      %311 = vmatpush2.bf16.msra.mxu0 0
      %312 = vmatprep.subr.bf16.mxu0 0
      %313 = vmatpush2.bf16.msra.mxu0 0
      %314 = vmatprep.subr.bf16.mxu0 0
      %315 = vmatpush2.bf16.msra.mxu0 0
      %316 = vmatprep.subr.bf16.mxu0 0
      %317 = vmatpush2.bf16.msra.mxu0 0
      %318 = vmatprep.subr.bf16.mxu0 0
      %319 = vmatpush2.bf16.msra.mxu0 0
      %320 = vmatprep.subr.bf16.mxu0 0
      %321 = vmatpush2.bf16.msra.mxu0 0
      %322 = vmatprep.subr.bf16.mxu0 0
      %323 = vmatpush2.bf16.msra.mxu0 %v276
      %324 = vmatprep.subr.bf16.mxu0 0
      %325 = vmatpush2.bf16.msra.mxu0 %v275
      %326 = vmatprep.mubr.bf16.mxu0 %v289
      %327 = vmatmul.mubr.bf16.gmra.mxu0 %v221
      %v328 = vpop.f32.mrf.mxu0
      %v329 = vadd.f32 %v207, %v328
      %v330 = vpop.f32.mrf.mxu0
      %v331 = vpop.f32.mrf.mxu0
      %v332 = vadd.f32 %v207, %v331
      %v333 = vpop.f32.mrf.mxu0
      %334 = vmatprep.mubr.bf16.mxu0 %v292
      %335 = vmatmul.mubr.bf16.gmra.mxu0 %v223
      %v336 = vpop.f32.mrf.mxu0
      %v337 = vadd.f32 %v207, %v336
      %v338 = vpop.f32.mrf.mxu0
      %v339 = vpop.f32.mrf.mxu0
      %v340 = vadd.f32 %v207, %v339
      %v341 = vpop.f32.mrf.mxu0
      %342 = vdwg.mxu0
      %v343 = vmax.f32 %v329, 0.0
      %v344 = vmax.f32 %v332, 0.0
      %v345 = vmax.f32 %v337, 0.0
      %v346 = vmax.f32 %v340, 0.0
      %347 = vst [vmem:[%s175] sm:$0xff] %v343
      %348 = vst [vmem:[%s175 + $0x8] sm:$0xff] %v344
      %349 = vst [vmem:[%s175 + $0x10] sm:$0xff] %v345
      %350 = vst [vmem:[%s175 + $0x18] sm:$0xff] %v346
      %s351 = smul.u32 4, %s14
      %p352 = scmp.lt.s32.totalorder %s351, 7
      %s353 = scalar_select %p352, %s351, 7
      %s354 = smul.addr %s353, 8
      %s355 = scalar_lea.vmem %s3, %s354
      // Predicated region
      $region33: #{stem_forward.17} parent=31 // pred_check
        %p356 = pneg %p100
      $region34: #{stem_forward.17} parent=31 // pred_check_branch
        %358 = sbr.rel (%p356) target = $region36
      $region35: #{stem_forward.17} parent=31 // pred_region
        %s359 = smul.u32 4, %s14
      $region36: #{stem_forward.17} parent=31 // pred_fallthru
        _
    $region32: #{stem_forward.17} parent=5 // pred_fallthru
      _
    %p360 = scmp.le.s32.totalorder 2, %s9
    // Predicated region
    $region37: #{stem_forward.17} parent=5 // pred_check
      %p361 = pneg %p360
    $region38: #{stem_forward.17} parent=5 // pred_check_branch
      %363 = sbr.rel (%p361) target = $region40
    $region39: #{stem_forward.17} parent=5 // pred_region
      %s364 = ssub.s32 %s9, 2
      // Predicated region
      $region41: #{stem_forward.17} parent=39 // pred_check
        %p365 = pneg %p106
      $region42: #{stem_forward.17} parent=39 // pred_check_branch
        %367 = sbr.rel (%p365) target = $region44
      $region43: #{stem_forward.17} parent=39 // pred_region
        %s368 = smul.u32 4, %s15
        %p369 = scmp.lt.s32.totalorder %s368, 7
        %s370 = scalar_select %p369, %s368, 7
        %s371 = smul.addr %s370, 8
        %s372 = scalar_lea.vmem %s3, %s371
      $region44: #{stem_forward.17} parent=39 // pred_fallthru
        _
    $region40: #{stem_forward.17} parent=5 // pred_fallthru
      _
  $region6: #{stem_forward.17} parent=0 // loop_footer
    %s13 = sadd.s32 1, %s9
  $region7: #{stem_forward.17} parent=0 // loop_footer_branch
    %8 = sbr.rel target = $region3
  $region8: #{stem_forward.17} parent=0 // loop_exit
    _

// kernel: stem_forward.16
$region0: #{stem_forward.16}
  #allocation0 [shape = 'u32[]', space=smem, size = 0x4, offset = 0x4, fixed_abs, tag = 'smem constant byte address 0x4 - core index']
  #allocation1 [shape = 'u32[144,128]{1,0:T(1,128)}', space=vmem, size = 0x12000, scoped, tag = 'internal scratch']
  %s0 = inlined_call_operand.vmem [shape: bf16[64,576], index: 0, kind: input, shape index: {}]
  %s1 = inlined_call_operand.vmem [shape: bf16[576,96], index: 1, kind: input, shape index: {}]
  %s2 = inlined_call_operand.vmem [shape: f32[1,96], index: 2, kind: input, shape index: {}]
  %s3 = inlined_call_operand.vmem [shape: f32[64,96], index: 3, kind: output, shape index: {}]
  %s4 = sld [smem:[#allocation0]]
  $region45: #{stem_forward.16} parent=0
    _
  %s6 = ssub.s32 1, %s4
  %s7 = scalar_select 0, %s6, %s4
  loop: start=0, step=1, limit=4
  $region2: #{stem_forward.16} parent=0 // loop_pre_header
    _
  $region3: #{stem_forward.16} parent=0 // loop_header
    %s9 = sphi 0, %s13
    %p10 = scmp.ge.s32.totalorder %s9, 4
    %s19 = sphi 0, %s21
    %s22 = sphi 0, %s19
    %s23 = sphi 0, %s22
    %s39 = sphi 0, %s23
    %s43 = sphi 0, %s43
    %s45 = sphi 0, %s43
    %s46 = sphi 0, %s45
    %s60 = sphi 0, %s46
    %s64 = sphi 0, %s64
    %s66 = sphi 0, %s64
    %s67 = sphi 0, %s66
    %s81 = sphi 0, %s67
    %s87 = sphi 0, %s89
    %s90 = sphi 0, %s87
    %s91 = sphi 0, %s90
    %s107 = sphi 0, %s91
  $region4: #{stem_forward.16} parent=0 // loop_header_branch
    %12 = sbr.rel (%p10) target = $region8
  $region5: #{stem_forward.16} parent=0 // loop_body
    %s14 = ssub.s32 %s9, 1
    %s15 = ssub.s32 %s9, 2
    %s16 = sadd.s32 %s9, 1
    %s17 = ssub.s32 %s9, %s16
    %p18 = scmp.eq.s32.totalorder %s17, 0
    %s20 = sadd.s32 %s19, 1
    %s21 = scalar_select %p18, %s19, %s20
    %p24 = pneg %p18
    %p25 = scmp.eq.s32.totalorder %s9, 1
    %p26 = por %p24, %p25
    %p27 = scmp.ne.s32.totalorder %s19, %s22
    %p28 = scmp.eq.s32.totalorder %s9, 0
    %p29 = por %p27, %p28
    %p30 = scmp.ne.s32.totalorder %s19, %s22
    %p31 = scmp.eq.s32.totalorder %s14, 1
    %p32 = por %p30, %p31
    %p33 = scmp.ne.s32.totalorder %s22, %s23
    %p34 = scmp.eq.s32.totalorder %s14, 0
    %p35 = por %p33, %p34
    %p36 = scmp.ne.s32.totalorder %s22, %s23
    %p37 = scmp.eq.s32.totalorder %s15, 1
    %p38 = por %p36, %p37
    %p40 = scmp.ne.s32.totalorder %s23, %s39
    %p41 = scmp.eq.s32.totalorder %s15, 0
    %p42 = por %p40, %p41
    %s44 = sadd.s32 %s43, 1
    %p47 = scmp.eq.s32.totalorder %s9, 1
    %p48 = scmp.ne.s32.totalorder %s43, %s45
    %p49 = scmp.eq.s32.totalorder %s9, 0
    %p50 = por %p48, %p49
    %p51 = scmp.ne.s32.totalorder %s43, %s45
    %p52 = scmp.eq.s32.totalorder %s14, 1
    %p53 = por %p51, %p52
    %p54 = scmp.ne.s32.totalorder %s45, %s46
    %p55 = scmp.eq.s32.totalorder %s14, 0
    %p56 = por %p54, %p55
    %p57 = scmp.ne.s32.totalorder %s45, %s46
    %p58 = scmp.eq.s32.totalorder %s15, 1
    %p59 = por %p57, %p58
    %p61 = scmp.ne.s32.totalorder %s46, %s60
    %p62 = scmp.eq.s32.totalorder %s15, 0
    %p63 = por %p61, %p62
    %s65 = sadd.s32 %s64, 1
    %p68 = scmp.eq.s32.totalorder %s9, 1
    %p69 = scmp.ne.s32.totalorder %s64, %s66
    %p70 = scmp.eq.s32.totalorder %s9, 0
    %p71 = por %p69, %p70
    %p72 = scmp.ne.s32.totalorder %s64, %s66
    %p73 = scmp.eq.s32.totalorder %s14, 1
    %p74 = por %p72, %p73
    %p75 = scmp.ne.s32.totalorder %s66, %s67
    %p76 = scmp.eq.s32.totalorder %s14, 0
    %p77 = por %p75, %p76
    %p78 = scmp.ne.s32.totalorder %s66, %s67
    %p79 = scmp.eq.s32.totalorder %s15, 1
    %p80 = por %p78, %p79
    %p82 = scmp.ne.s32.totalorder %s67, %s81
    %p83 = scmp.eq.s32.totalorder %s15, 0
    %p84 = por %p82, %p83
    %s85 = ssub.s32 %s9, %s16
    %p86 = scmp.eq.s32.totalorder %s85, 0
    %s88 = sadd.s32 %s87, 1
    %s89 = scalar_select %p86, %s87, %s88
    %p92 = pneg %p86
    %p93 = scmp.eq.s32.totalorder %s9, 1
    %p94 = por %p92, %p93
    %p95 = scmp.ne.s32.totalorder %s87, %s90
    %p96 = scmp.eq.s32.totalorder %s9, 0
    %p97 = por %p95, %p96
    %p98 = scmp.ne.s32.totalorder %s87, %s90
    %p99 = scmp.eq.s32.totalorder %s14, 1
    %p100 = por %p98, %p99
    %p101 = scmp.ne.s32.totalorder %s90, %s91
    %p102 = scmp.eq.s32.totalorder %s14, 0
    %p103 = por %p101, %p102
    %p104 = scmp.ne.s32.totalorder %s90, %s91
    %p105 = scmp.eq.s32.totalorder %s15, 1
    %p106 = por %p104, %p105
    %p108 = scmp.ne.s32.totalorder %s91, %s107
    %p109 = scmp.eq.s32.totalorder %s15, 0
    %p110 = por %p108, %p109
    %p111 = scmp.le.s32.totalorder 1, %s9
    %p112 = scmp.lt.s32.totalorder %s9, 3
    %p113 = pnand %p111, %p112
    %p114 = pneg %p113
    // Predicated region
    $region9: #{stem_forward.16} parent=5 // pred_check
      _
    $region10: #{stem_forward.16} parent=5 // pred_check_branch
      %116 = sbr.rel (%p113) target = $region12
    $region11: #{stem_forward.16} parent=5 // pred_region
      %s117 = ssub.s32 %s9, 1
      // Predicated region
      $region13: #{stem_forward.16} parent=11 // pred_check
        %p118 = pneg %p56
      $region14: #{stem_forward.16} parent=11 // pred_check_branch
        %120 = sbr.rel (%p118) target = $region16
      $region15: #{stem_forward.16} parent=11 // pred_region
        _
      $region16: #{stem_forward.16} parent=11 // pred_fallthru
        _
      // Predicated region
      $region17: #{stem_forward.16} parent=11 // pred_check
        %p121 = pneg %p77
      $region18: #{stem_forward.16} parent=11 // pred_check_branch
        %123 = sbr.rel (%p121) target = $region20
      $region19: #{stem_forward.16} parent=11 // pred_region
        _
      $region20: #{stem_forward.16} parent=11 // pred_fallthru
        _
    $region12: #{stem_forward.16} parent=5 // pred_fallthru
      _
    %p124 = scmp.lt.s32.totalorder %s9, 2
    // Predicated region
    $region21: #{stem_forward.16} parent=5 // pred_check
      %p125 = pneg %p124
    $region22: #{stem_forward.16} parent=5 // pred_check_branch
      %127 = sbr.rel (%p125) target = $region24
    $region23: #{stem_forward.16} parent=5 // pred_region
      // Predicated region
      $region25: #{stem_forward.16} parent=23 // pred_check
        %p128 = pneg %p29
      $region26: #{stem_forward.16} parent=23 // pred_check_branch
        %130 = sbr.rel (%p128) target = $region28
      $region27: #{stem_forward.16} parent=23 // pred_region
        %s131 = smul.u32 4, %s9
        %p132 = scmp.lt.s32.totalorder %s131, 7
        %s133 = scalar_select %p132, %s131, 7
        %s134 = smul.addr %s133, 5
        %s135 = smul.addr %s134, 4
        %s136 = scalar_lea.vmem %s0, %s135
        %s137 = smul.u32 4, %s9
      $region28: #{stem_forward.16} parent=23 // pred_fallthru
        _
    $region24: #{stem_forward.16} parent=5 // pred_fallthru
      _
    %p138 = scmp.le.s32.totalorder 1, %s9
    %p139 = scmp.lt.s32.totalorder %s9, 3
    %p140 = pnand %p138, %p139
    %p141 = pneg %p140
    // Predicated region
    $region29: #{stem_forward.16} parent=5 // pred_check
      _
    $region30: #{stem_forward.16} parent=5 // pred_check_branch
      %143 = sbr.rel (%p140) target = $region32
    $region31: #{stem_forward.16} parent=5 // pred_region
      %s144 = ssub.s32 %s9, 1
      %s145 = smul.u32 4, %s14
      %p146 = scmp.lt.s32.totalorder %s145, 7
      %s147 = scalar_select %p146, %s145, 7
      %s148 = smul.addr %s147, 5
      %s149 = smul.addr %s148, 4
      %s150 = scalar_lea.vmem %s0, %s149
      %p151 = pneg %p35
      %p152 = pneg %p32
      %p153 = pneg %p56
      %p154 = pneg %p53
      %p155 = pneg %p77
      %p156 = pneg %p74
      %p157 = pneg %p103
      %p158 = pneg %p100
      %s159 = smul.u32 4, %s14
      %p160 = scmp.lt.s32.totalorder %s159, 7
      %s161 = scalar_select %p160, %s159, 7
      %s162 = smul.addr %s161, 8
      %s163 = scalar_lea.vmem %s3, %s162
      %s164 = smul.u32 4, %s14
      %p165 = scmp.lt.s32.totalorder %s164, 7
      %s166 = scalar_select %p165, %s164, 7
      %s167 = smul.addr %s166, 5
      %s168 = smul.addr %s167, 4
      %s169 = scalar_lea.vmem %s0, %s168
      %s170 = smul.u32 4, %s14
      %s171 = smul.u32 4, %s14
      %p172 = scmp.lt.s32.totalorder %s171, 7
      %s173 = scalar_select %p172, %s171, 7
      %s174 = smul.addr %s173, 8
      %s175 = scalar_lea.vmem %s3, %s174
      %s176 = smul.u32 4, %s14
      %v178 = vld [vmem:[%s169] sm:$0xff]
      %v179 = vld [vmem:[%s169 + $0x8] sm:$0xff]
      %v180 = vld [vmem:[%s169 + $0x10] sm:$0xf]
      %v181 = vld [vmem:[%s169 + $0x14] sm:$0xff]
      %v182 = vld [vmem:[%s169 + $0x1c] sm:$0xff]
      %v183 = vld [vmem:[%s169 + $0x24] sm:$0xf]
      %v184 = vld [vmem:[%s169 + $0x28] sm:$0xff]
      %v185 = vld [vmem:[%s169 + $0x30] sm:$0xff]
      %v186 = vld [vmem:[%s169 + $0x38] sm:$0xf]
      %v187 = vld [vmem:[%s169 + $0x3c] sm:$0xff]
      %v188 = vld [vmem:[%s169 + $0x44] sm:$0xff]
      %v189 = vld [vmem:[%s169 + $0x4c] sm:$0xf]
      %v190 = vld [vmem:[%s1] sm:$0xf]
      %v191 = vld [vmem:[%s1 + $0x4] sm:$0xf]
      %v192 = vld [vmem:[%s1 + $0x8] sm:$0xf]
      %v193 = vld [vmem:[%s1 + $0xc] sm:$0xf]
      %v194 = vld [vmem:[%s1 + $0x10] sm:$0xf]
      %v195 = vld [vmem:[%s1 + $0x14] sm:$0xf]
      %v196 = vld [vmem:[%s1 + $0x18] sm:$0xf]
      %v197 = vld [vmem:[%s1 + $0x1c] sm:$0xf]
      %v198 = vld [vmem:[%s1 + $0x20] sm:$0xf]
      %v199 = vld [vmem:[%s1 + $0x24] sm:$0xf]
      %v200 = vld [vmem:[%s1 + $0x28] sm:$0xf]
      %v201 = vld [vmem:[%s1 + $0x2c] sm:$0xf]
      %v202 = vld [vmem:[%s1 + $0x30] sm:$0xf]
      %v203 = vld [vmem:[%s1 + $0x34] sm:$0xf]
      %v204 = vld [vmem:[%s1 + $0x38] sm:$0xf]
      %v205 = vld [vmem:[%s1 + $0x3c] sm:$0xf]
      %v206 = vld [vmem:[%s1 + $0x40] sm:$0xf]
      %v207 = vld [vmem:[%s1 + $0x44] sm:$0xf]
      %v208 = vld [vmem:[%s1 + $0x48] sm:$0xf]
      %v209 = vld [vmem:[%s1 + $0x4c] sm:$0xf]
      %v210 = vld [vmem:[%s1 + $0x50] sm:$0xf]
      %v211 = vld [vmem:[%s1 + $0x54] sm:$0xf]
      %v212 = vld [vmem:[%s1 + $0x58] sm:$0xf]
      %v213 = vld [vmem:[%s1 + $0x5c] sm:$0xf]
      %v214 = vld [vmem:[%s1 + $0x60] sm:$0xf]
      %v215 = vld [vmem:[%s1 + $0x64] sm:$0xf]
      %v216 = vld [vmem:[%s1 + $0x68] sm:$0xf]
      %v217 = vld [vmem:[%s1 + $0x6c] sm:$0xf]
      %v218 = vld [vmem:[%s1 + $0x70] sm:$0xf]
      %v219 = vld [vmem:[%s1 + $0x74] sm:$0xf]
      %v220 = vld [vmem:[%s1 + $0x78] sm:$0xf]
      %v221 = vld [vmem:[%s1 + $0x7c] sm:$0xf]
      %v222 = vld [vmem:[%s1 + $0x80] sm:$0xf]
      %v223 = vld [vmem:[%s1 + $0x84] sm:$0xf]
      %v224 = vld [vmem:[%s1 + $0x88] sm:$0xf]
      %v225 = vld [vmem:[%s1 + $0x8c] sm:$0xf]
      %v226 = vld [vmem:[%s1 + $0x90] sm:$0xf]
      %v227 = vld [vmem:[%s1 + $0x94] sm:$0xf]
      %v228 = vld [vmem:[%s1 + $0x98] sm:$0xf]
      %v229 = vld [vmem:[%s1 + $0x9c] sm:$0xf]
      %v230 = vld [vmem:[%s1 + $0xa0] sm:$0xf]
      %v231 = vld [vmem:[%s1 + $0xa4] sm:$0xf]
      %v232 = vld [vmem:[%s1 + $0xa8] sm:$0xf]
      %v233 = vld [vmem:[%s1 + $0xac] sm:$0xf]
      %v234 = vld [vmem:[%s1 + $0xb0] sm:$0xf]
      %v235 = vld [vmem:[%s1 + $0xb4] sm:$0xf]
      %v236 = vld [vmem:[%s1 + $0xb8] sm:$0xf]
      %v237 = vld [vmem:[%s1 + $0xbc] sm:$0xf]
      %v238 = vld [vmem:[%s1 + $0xc0] sm:$0xf]
      %v239 = vld [vmem:[%s1 + $0xc4] sm:$0xf]
      %v240 = vld [vmem:[%s1 + $0xc8] sm:$0xf]
      %v241 = vld [vmem:[%s1 + $0xcc] sm:$0xf]
      %v242 = vld [vmem:[%s1 + $0xd0] sm:$0xf]
      %v243 = vld [vmem:[%s1 + $0xd4] sm:$0xf]
      %v244 = vld [vmem:[%s1 + $0xd8] sm:$0xf]
      %v245 = vld [vmem:[%s1 + $0xdc] sm:$0xf]
      %v246 = vld [vmem:[%s1 + $0xe0] sm:$0xf]
      %v247 = vld [vmem:[%s1 + $0xe4] sm:$0xf]
      %v248 = vld [vmem:[%s1 + $0xe8] sm:$0xf]
      %v249 = vld [vmem:[%s1 + $0xec] sm:$0xf]
      %v250 = vld [vmem:[%s1 + $0xf0] sm:$0xf]
      %v251 = vld [vmem:[%s1 + $0xf4] sm:$0xf]
      %v252 = vld [vmem:[%s1 + $0xf8] sm:$0xf]
      %v253 = vld [vmem:[%s1 + $0xfc] sm:$0xf]
      %v254 = vld [vmem:[%s1 + $0x100] sm:$0xf]
      %v255 = vld [vmem:[%s1 + $0x104] sm:$0xf]
      %v256 = vld [vmem:[%s1 + $0x108] sm:$0xf]
      %v257 = vld [vmem:[%s1 + $0x10c] sm:$0xf]
      %v258 = vld [vmem:[%s1 + $0x110] sm:$0xf]
      %v259 = vld [vmem:[%s1 + $0x114] sm:$0xf]
      %v260 = vld [vmem:[%s1 + $0x118] sm:$0xf]
      %v261 = vld [vmem:[%s1 + $0x11c] sm:$0xf]
      %v262 = vld [vmem:[%s2] sm:$0x1]
      %v264 = vlaneseq
      %v265 = vshrl.u32 %v264, 7
      %v266 = vsub.s32 0, %v265
      %v267 = vrot.slane %v262, %v266
      %v281 = vunpack.c.l.b16 %v178
      %v282 = vunpack.c.h.b16 %v178
      %v283 = vunpack.c.l.b16 %v179
      %v284 = vunpack.c.h.b16 %v179
      %v285 = vunpack.c.l.b16 %v180
      %v286 = vunpack.c.l.b16 %v181
      %v287 = vunpack.c.h.b16 %v181
      %v288 = vunpack.c.l.b16 %v182
      %v289 = vunpack.c.h.b16 %v182
      %v290 = vunpack.c.l.b16 %v183
      %v291 = vunpack.c.l.b16 %v184
      %v292 = vunpack.c.h.b16 %v184
      %v293 = vunpack.c.l.b16 %v185
      %v294 = vunpack.c.h.b16 %v185
      %v295 = vunpack.c.l.b16 %v186
      %v296 = vunpack.c.l.b16 %v187
      %v297 = vunpack.c.h.b16 %v187
      %v298 = vunpack.c.l.b16 %v188
      %v299 = vunpack.c.h.b16 %v188
      %v300 = vunpack.c.l.b16 %v189
      %v301 = vpack.c.b16 %v286, %v281
      %v302 = vpack.c.b16 %v287, %v282
      %v303 = vpack.c.b16 %v288, %v283
      %v304 = vpack.c.b16 %v289, %v284
      %v305 = vpack.c.b16 %v290, %v285
      %v306 = vpack.c.b16 %v296, %v291
      %v307 = vpack.c.b16 %v297, %v292
      %v308 = vpack.c.b16 %v298, %v293
      %v309 = vpack.c.b16 %v299, %v294
      %v310 = vpack.c.b16 %v300, %v295
      %v391 = vunpack.c.l.b16 %v190
      %v392 = vunpack.c.l.b16 %v191
      %v393 = vunpack.c.l.b16 %v192
      %v394 = vunpack.c.l.b16 %v193
      %v395 = vunpack.c.l.b16 %v194
      %v396 = vunpack.c.l.b16 %v195
      %v397 = vunpack.c.l.b16 %v196
      %v398 = vunpack.c.l.b16 %v197
      %v399 = vunpack.c.l.b16 %v198
      %v400 = vunpack.c.l.b16 %v199
      %v401 = vunpack.c.l.b16 %v200
      %v402 = vunpack.c.l.b16 %v201
      %v403 = vunpack.c.l.b16 %v202
      %v404 = vunpack.c.l.b16 %v203
      %v405 = vunpack.c.l.b16 %v204
      %v406 = vunpack.c.l.b16 %v205
      %v407 = vunpack.c.l.b16 %v206
      %v408 = vunpack.c.l.b16 %v207
      %v409 = vunpack.c.l.b16 %v208
      %v410 = vunpack.c.l.b16 %v209
      %v411 = vunpack.c.l.b16 %v210
      %v412 = vunpack.c.l.b16 %v211
      %v413 = vunpack.c.l.b16 %v212
      %v414 = vunpack.c.l.b16 %v213
      %v415 = vunpack.c.l.b16 %v214
      %v416 = vunpack.c.l.b16 %v215
      %v417 = vunpack.c.l.b16 %v216
      %v418 = vunpack.c.l.b16 %v217
      %v419 = vunpack.c.l.b16 %v218
      %v420 = vunpack.c.l.b16 %v219
      %v421 = vunpack.c.l.b16 %v220
      %v422 = vunpack.c.l.b16 %v221
      %v423 = vunpack.c.l.b16 %v222
      %v424 = vunpack.c.l.b16 %v223
      %v425 = vunpack.c.l.b16 %v224
      %v426 = vunpack.c.l.b16 %v225
      %v427 = vunpack.c.l.b16 %v226
      %v428 = vunpack.c.l.b16 %v227
      %v429 = vunpack.c.l.b16 %v228
      %v430 = vunpack.c.l.b16 %v229
      %v431 = vunpack.c.l.b16 %v230
      %v432 = vunpack.c.l.b16 %v231
      %v433 = vunpack.c.l.b16 %v232
      %v434 = vunpack.c.l.b16 %v233
      %v435 = vunpack.c.l.b16 %v234
      %v436 = vunpack.c.l.b16 %v235
      %v437 = vunpack.c.l.b16 %v236
      %v438 = vunpack.c.l.b16 %v237
      %v439 = vunpack.c.l.b16 %v238
      %v440 = vunpack.c.l.b16 %v239
      %v441 = vunpack.c.l.b16 %v240
      %v442 = vunpack.c.l.b16 %v241
      %v443 = vunpack.c.l.b16 %v242
      %v444 = vunpack.c.l.b16 %v243
      %v445 = vunpack.c.l.b16 %v244
      %v446 = vunpack.c.l.b16 %v245
      %v447 = vunpack.c.l.b16 %v246
      %v448 = vunpack.c.l.b16 %v247
      %v449 = vunpack.c.l.b16 %v248
      %v450 = vunpack.c.l.b16 %v249
      %v451 = vunpack.c.l.b16 %v250
      %v452 = vunpack.c.l.b16 %v251
      %v453 = vunpack.c.l.b16 %v252
      %v454 = vunpack.c.l.b16 %v253
      %v455 = vunpack.c.l.b16 %v254
      %v456 = vunpack.c.l.b16 %v255
      %v457 = vunpack.c.l.b16 %v256
      %v458 = vunpack.c.l.b16 %v257
      %v459 = vunpack.c.l.b16 %v258
      %v460 = vunpack.c.l.b16 %v259
      %v461 = vunpack.c.l.b16 %v260
      %v462 = vunpack.c.l.b16 %v261
      %v463 = vpack.c.b16 %v392, %v391
      %v464 = vpack.c.b16 %v394, %v393
      %v465 = vpack.c.b16 %v396, %v395
      %v466 = vpack.c.b16 %v398, %v397
      %v467 = vpack.c.b16 %v400, %v399
      %v468 = vpack.c.b16 %v402, %v401
      %v469 = vpack.c.b16 %v404, %v403
      %v470 = vpack.c.b16 %v406, %v405
      %v471 = vpack.c.b16 %v408, %v407
      %v472 = vpack.c.b16 %v410, %v409
      %v473 = vpack.c.b16 %v412, %v411
      %v474 = vpack.c.b16 %v414, %v413
      %v475 = vpack.c.b16 %v416, %v415
      %v476 = vpack.c.b16 %v418, %v417
      %v477 = vpack.c.b16 %v420, %v419
      %v478 = vpack.c.b16 %v422, %v421
      %v479 = vpack.c.b16 %v424, %v423
      %v480 = vpack.c.b16 %v426, %v425
      %v481 = vpack.c.b16 %v428, %v427
      %v482 = vpack.c.b16 %v430, %v429
      %v483 = vpack.c.b16 %v432, %v431
      %v484 = vpack.c.b16 %v434, %v433
      %v485 = vpack.c.b16 %v436, %v435
      %v486 = vpack.c.b16 %v438, %v437
      %v487 = vpack.c.b16 %v440, %v439
      %v488 = vpack.c.b16 %v442, %v441
      %v489 = vpack.c.b16 %v444, %v443
      %v490 = vpack.c.b16 %v446, %v445
      %v491 = vpack.c.b16 %v448, %v447
      %v492 = vpack.c.b16 %v450, %v449
      %v493 = vpack.c.b16 %v452, %v451
      %v494 = vpack.c.b16 %v454, %v453
      %v495 = vpack.c.b16 %v456, %v455
      %v496 = vpack.c.b16 %v458, %v457
      %v497 = vpack.c.b16 %v460, %v459
      %v498 = vpack.c.b16 %v462, %v461
      %vm535 = vcmask 523264
      %v537 = vsel %vm535, %v305, 0
      %v540 = vsel %vm535, %v310, 0
      %542 = vmatprep.subr.bf16.mxu0 0
      %543 = vmatpush1.bf16.msra.mxu0 %v470
      %544 = vmatprep.subr.bf16.mxu0 0
      %545 = vmatpush1.bf16.msra.mxu0 %v469
      %546 = vmatprep.subr.bf16.mxu0 0
      %547 = vmatpush1.bf16.msra.mxu0 %v468
      %548 = vmatprep.subr.bf16.mxu0 0
      %549 = vmatpush1.bf16.msra.mxu0 %v467
      %550 = vmatprep.subr.bf16.mxu0 0
      %551 = vmatpush1.bf16.msra.mxu0 %v466
      %552 = vmatprep.subr.bf16.mxu0 0
      %553 = vmatpush1.bf16.msra.mxu0 %v465
      %554 = vmatprep.subr.bf16.mxu0 0
      %555 = vmatpush1.bf16.msra.mxu0 %v464
      %556 = vmatprep.subr.bf16.mxu0 0
      %557 = vmatpush1.bf16.msra.mxu0 %v463
      %558 = vmatprep.subr.bf16.mxu0 0
      %559 = vmatpush2.bf16.msra.mxu0 %v478
      %560 = vmatprep.subr.bf16.mxu0 0
      %561 = vmatpush2.bf16.msra.mxu0 %v477
      %562 = vmatprep.subr.bf16.mxu0 0
      %563 = vmatpush2.bf16.msra.mxu0 %v476
      %564 = vmatprep.subr.bf16.mxu0 0
      %565 = vmatpush2.bf16.msra.mxu0 %v475
      %566 = vmatprep.subr.bf16.mxu0 0
      %567 = vmatpush2.bf16.msra.mxu0 %v474
      %568 = vmatprep.subr.bf16.mxu0 0
      %569 = vmatpush2.bf16.msra.mxu0 %v473
      %570 = vmatprep.subr.bf16.mxu0 0
      %571 = vmatpush2.bf16.msra.mxu0 %v472
      %572 = vmatprep.subr.bf16.mxu0 0
      %573 = vmatpush2.bf16.msra.mxu0 %v471
      %574 = vmatprep.mubr.bf16.mxu0 %v302
      %575 = vmatmul.mubr.bf16.gmra.mxu0 %v301
      %v576 = vpop.f32.mrf.mxu0
      %v577 = vadd.f32 %v267, %v576
      %v578 = vpop.f32.mrf.mxu0
      %v579 = vpop.f32.mrf.mxu0
      %v580 = vadd.f32 %v267, %v579
      %v581 = vpop.f32.mrf.mxu0
      %582 = vmatprep.mubr.bf16.mxu0 %v307
      %583 = vmatmul.mubr.bf16.gmra.mxu0 %v306
      %v584 = vpop.f32.mrf.mxu0
      %v585 = vadd.f32 %v267, %v584
      %v586 = vpop.f32.mrf.mxu0
      %v587 = vpop.f32.mrf.mxu0
      %v588 = vadd.f32 %v267, %v587
      %v589 = vpop.f32.mrf.mxu0
      %590 = vdwg.mxu0
      %591 = vmatprep.subr.bf16.mxu0 0
      %592 = vmatpush1.bf16.msra.mxu0 %v486
      %593 = vmatprep.subr.bf16.mxu0 0
      %594 = vmatpush1.bf16.msra.mxu0 %v485
      %595 = vmatprep.subr.bf16.mxu0 0
      %596 = vmatpush1.bf16.msra.mxu0 %v484
      %597 = vmatprep.subr.bf16.mxu0 0
      %598 = vmatpush1.bf16.msra.mxu0 %v483
      %599 = vmatprep.subr.bf16.mxu0 0
      %600 = vmatpush1.bf16.msra.mxu0 %v482
      %601 = vmatprep.subr.bf16.mxu0 0
      %602 = vmatpush1.bf16.msra.mxu0 %v481
      %603 = vmatprep.subr.bf16.mxu0 0
      %604 = vmatpush1.bf16.msra.mxu0 %v480
      %605 = vmatprep.subr.bf16.mxu0 0
      %606 = vmatpush1.bf16.msra.mxu0 %v479
      %607 = vmatprep.subr.bf16.mxu0 0
      %608 = vmatpush2.bf16.msra.mxu0 %v494
      %609 = vmatprep.subr.bf16.mxu0 0
      %610 = vmatpush2.bf16.msra.mxu0 %v493
      %611 = vmatprep.subr.bf16.mxu0 0
      %612 = vmatpush2.bf16.msra.mxu0 %v492
      %613 = vmatprep.subr.bf16.mxu0 0
      %614 = vmatpush2.bf16.msra.mxu0 %v491
      %615 = vmatprep.subr.bf16.mxu0 0
      %616 = vmatpush2.bf16.msra.mxu0 %v490
      %617 = vmatprep.subr.bf16.mxu0 0
      %618 = vmatpush2.bf16.msra.mxu0 %v489
      %619 = vmatprep.subr.bf16.mxu0 0
      %620 = vmatpush2.bf16.msra.mxu0 %v488
      %621 = vmatprep.subr.bf16.mxu0 0
      %622 = vmatpush2.bf16.msra.mxu0 %v487
      %623 = vmatprep.mubr.bf16.mxu0 %v304
      %624 = vmatmul.mubr.bf16.gmra.mxu0 %v303
      %v625 = vpop.f32.mrf.mxu0
      %v626 = vadd.f32 %v577, %v625
      %v627 = vpop.f32.mrf.mxu0
      %v628 = vpop.f32.mrf.mxu0
      %v629 = vadd.f32 %v580, %v628
      %v630 = vpop.f32.mrf.mxu0
      %631 = vmatprep.mubr.bf16.mxu0 %v309
      %632 = vmatmul.mubr.bf16.gmra.mxu0 %v308
      %v633 = vpop.f32.mrf.mxu0
      %v634 = vadd.f32 %v585, %v633
      %v635 = vpop.f32.mrf.mxu0
      %v636 = vpop.f32.mrf.mxu0
      %v637 = vadd.f32 %v588, %v636
      %v638 = vpop.f32.mrf.mxu0
      %639 = vdwg.mxu0
      %640 = vmatprep.subr.bf16.mxu0 0
      %641 = vmatpush1.bf16.msra.mxu0 0
      %642 = vmatprep.subr.bf16.mxu0 0
      %643 = vmatpush1.bf16.msra.mxu0 0
      %644 = vmatprep.subr.bf16.mxu0 0
      %645 = vmatpush1.bf16.msra.mxu0 0
      %646 = vmatprep.subr.bf16.mxu0 0
      %647 = vmatpush1.bf16.msra.mxu0 0
      %648 = vmatprep.subr.bf16.mxu0 0
      %649 = vmatpush1.bf16.msra.mxu0 %v498
      %650 = vmatprep.subr.bf16.mxu0 0
      %651 = vmatpush1.bf16.msra.mxu0 %v497
      %652 = vmatprep.subr.bf16.mxu0 0
      %653 = vmatpush1.bf16.msra.mxu0 %v496
      %654 = vmatprep.subr.bf16.mxu0 0
      %655 = vmatpush1.bf16.msra.mxu0 %v495
      %656 = vmatprep.subr.bf16.mxu0 0
      %657 = vmatpush2.bf16.msra.mxu0 0
      %658 = vmatprep.subr.bf16.mxu0 0
      %659 = vmatpush2.bf16.msra.mxu0 0
      %660 = vmatprep.subr.bf16.mxu0 0
      %661 = vmatpush2.bf16.msra.mxu0 0
      %662 = vmatprep.subr.bf16.mxu0 0
      %663 = vmatpush2.bf16.msra.mxu0 0
      %664 = vmatprep.subr.bf16.mxu0 0
      %665 = vmatpush2.bf16.msra.mxu0 0
      %666 = vmatprep.subr.bf16.mxu0 0
      %667 = vmatpush2.bf16.msra.mxu0 0
      %668 = vmatprep.subr.bf16.mxu0 0
      %669 = vmatpush2.bf16.msra.mxu0 0
      %670 = vmatprep.subr.bf16.mxu0 0
      %671 = vmatpush2.bf16.msra.mxu0 0
      %672 = vmatprep.mubr.bf16.mxu0 0
      %673 = vmatmul.mubr.bf16.gmra.mxu0 %v537
      %v674 = vpop.f32.mrf.mxu0
      %v675 = vadd.f32 %v626, %v674
      %v676 = vpop.f32.mrf.mxu0
      %v677 = vpop.f32.mrf.mxu0
      %v678 = vadd.f32 %v629, %v677
      %v679 = vpop.f32.mrf.mxu0
      %680 = vmatprep.mubr.bf16.mxu0 0
      %681 = vmatmul.mubr.bf16.gmra.mxu0 %v540
      %v682 = vpop.f32.mrf.mxu0
      %v683 = vadd.f32 %v634, %v682
      %v684 = vpop.f32.mrf.mxu0
      %v685 = vpop.f32.mrf.mxu0
      %v686 = vadd.f32 %v637, %v685
      %v687 = vpop.f32.mrf.mxu0
      %688 = vdwg.mxu0
      %v689 = vmax.f32 %v675, 0.0
      %v690 = vmax.f32 %v678, 0.0
      %v691 = vmax.f32 %v683, 0.0
      %v692 = vmax.f32 %v686, 0.0
      %vm693 = vcmask 785408
      %694 = vst.msk [vmem:[%s175] sm:$0xff] %vm693, %v689
      %695 = vst.msk [vmem:[%s175 + $0x8] sm:$0xff] %vm693, %v690
      %696 = vst.msk [vmem:[%s175 + $0x10] sm:$0xff] %vm693, %v691
      %697 = vst.msk [vmem:[%s175 + $0x18] sm:$0xff] %vm693, %v692
      %s698 = smul.u32 4, %s14
      %p699 = scmp.lt.s32.totalorder %s698, 7
      %s700 = scalar_select %p699, %s698, 7
      %s701 = smul.addr %s700, 8
      %s702 = scalar_lea.vmem %s3, %s701
      // Predicated region
      $region33: #{stem_forward.16} parent=31 // pred_check
        %p703 = pneg %p100
      $region34: #{stem_forward.16} parent=31 // pred_check_branch
        %705 = sbr.rel (%p703) target = $region36
      $region35: #{stem_forward.16} parent=31 // pred_region
        %s706 = smul.u32 4, %s14
      $region36: #{stem_forward.16} parent=31 // pred_fallthru
        _
    $region32: #{stem_forward.16} parent=5 // pred_fallthru
      _
    %p707 = scmp.le.s32.totalorder 2, %s9
    // Predicated region
    $region37: #{stem_forward.16} parent=5 // pred_check
      %p708 = pneg %p707
    $region38: #{stem_forward.16} parent=5 // pred_check_branch
      %710 = sbr.rel (%p708) target = $region40
    $region39: #{stem_forward.16} parent=5 // pred_region
      %s711 = ssub.s32 %s9, 2
      // Predicated region
      $region41: #{stem_forward.16} parent=39 // pred_check
        %p712 = pneg %p106
      $region42: #{stem_forward.16} parent=39 // pred_check_branch
        %714 = sbr.rel (%p712) target = $region44
      $region43: #{stem_forward.16} parent=39 // pred_region
        %s715 = smul.u32 4, %s15
        %p716 = scmp.lt.s32.totalorder %s715, 7
        %s717 = scalar_select %p716, %s715, 7
        %s718 = smul.addr %s717, 8
        %s719 = scalar_lea.vmem %s3, %s718
      $region44: #{stem_forward.16} parent=39 // pred_fallthru
        _
    $region40: #{stem_forward.16} parent=5 // pred_fallthru
      _
  $region6: #{stem_forward.16} parent=0 // loop_footer
    %s13 = sadd.s32 1, %s9
  $region7: #{stem_forward.16} parent=0 // loop_footer_branch
    %8 = sbr.rel target = $region3
  $region8: #{stem_forward.16} parent=0 // loop_exit
    _

// kernel: stem_forward.18
$region0: #{stem_forward.18}
  #allocation0 [shape = 'u32[]', space=smem, size = 0x4, offset = 0x4, fixed_abs, tag = 'smem constant byte address 0x4 - core index']
  #allocation1 [shape = 'u32[144,128]{1,0:T(1,128)}', space=vmem, size = 0x12000, scoped, tag = 'internal scratch']
  %s0 = inlined_call_operand.vmem [shape: bf16[32,576], index: 0, kind: input, shape index: {}]
  %s1 = inlined_call_operand.vmem [shape: bf16[576,96], index: 1, kind: input, shape index: {}]
  %s2 = inlined_call_operand.vmem [shape: f32[1,96], index: 2, kind: input, shape index: {}]
  %s3 = inlined_call_operand.vmem [shape: f32[32,96], index: 3, kind: output, shape index: {}]
  %s4 = sld [smem:[#allocation0]]
  $region45: #{stem_forward.18} parent=0
    _
  %s6 = ssub.s32 1, %s4
  %s7 = scalar_select 0, %s6, %s4
  loop: start=0, step=1, limit=4
  $region2: #{stem_forward.18} parent=0 // loop_pre_header
    _
  $region3: #{stem_forward.18} parent=0 // loop_header
    %s9 = sphi 0, %s13
    %p10 = scmp.ge.s32.totalorder %s9, 4
    %s19 = sphi 0, %s21
    %s22 = sphi 0, %s19
    %s23 = sphi 0, %s22
    %s39 = sphi 0, %s23
    %s43 = sphi 0, %s43
    %s45 = sphi 0, %s43
    %s46 = sphi 0, %s45
    %s60 = sphi 0, %s46
    %s64 = sphi 0, %s64
    %s66 = sphi 0, %s64
    %s67 = sphi 0, %s66
    %s81 = sphi 0, %s67
    %s87 = sphi 0, %s89
    %s90 = sphi 0, %s87
    %s91 = sphi 0, %s90
    %s107 = sphi 0, %s91
  $region4: #{stem_forward.18} parent=0 // loop_header_branch
    %12 = sbr.rel (%p10) target = $region8
  $region5: #{stem_forward.18} parent=0 // loop_body
    %s14 = ssub.s32 %s9, 1
    %s15 = ssub.s32 %s9, 2
    %s16 = sadd.s32 %s9, 1
    %s17 = ssub.s32 %s9, %s16
    %p18 = scmp.eq.s32.totalorder %s17, 0
    %s20 = sadd.s32 %s19, 1
    %s21 = scalar_select %p18, %s19, %s20
    %p24 = pneg %p18
    %p25 = scmp.eq.s32.totalorder %s9, 1
    %p26 = por %p24, %p25
    %p27 = scmp.ne.s32.totalorder %s19, %s22
    %p28 = scmp.eq.s32.totalorder %s9, 0
    %p29 = por %p27, %p28
    %p30 = scmp.ne.s32.totalorder %s19, %s22
    %p31 = scmp.eq.s32.totalorder %s14, 1
    %p32 = por %p30, %p31
    %p33 = scmp.ne.s32.totalorder %s22, %s23
    %p34 = scmp.eq.s32.totalorder %s14, 0
    %p35 = por %p33, %p34
    %p36 = scmp.ne.s32.totalorder %s22, %s23
    %p37 = scmp.eq.s32.totalorder %s15, 1
    %p38 = por %p36, %p37
    %p40 = scmp.ne.s32.totalorder %s23, %s39
    %p41 = scmp.eq.s32.totalorder %s15, 0
    %p42 = por %p40, %p41
    %s44 = sadd.s32 %s43, 1
    %p47 = scmp.eq.s32.totalorder %s9, 1
    %p48 = scmp.ne.s32.totalorder %s43, %s45
    %p49 = scmp.eq.s32.totalorder %s9, 0
    %p50 = por %p48, %p49
    %p51 = scmp.ne.s32.totalorder %s43, %s45
    %p52 = scmp.eq.s32.totalorder %s14, 1
    %p53 = por %p51, %p52
    %p54 = scmp.ne.s32.totalorder %s45, %s46
    %p55 = scmp.eq.s32.totalorder %s14, 0
    %p56 = por %p54, %p55
    %p57 = scmp.ne.s32.totalorder %s45, %s46
    %p58 = scmp.eq.s32.totalorder %s15, 1
    %p59 = por %p57, %p58
    %p61 = scmp.ne.s32.totalorder %s46, %s60
    %p62 = scmp.eq.s32.totalorder %s15, 0
    %p63 = por %p61, %p62
    %s65 = sadd.s32 %s64, 1
    %p68 = scmp.eq.s32.totalorder %s9, 1
    %p69 = scmp.ne.s32.totalorder %s64, %s66
    %p70 = scmp.eq.s32.totalorder %s9, 0
    %p71 = por %p69, %p70
    %p72 = scmp.ne.s32.totalorder %s64, %s66
    %p73 = scmp.eq.s32.totalorder %s14, 1
    %p74 = por %p72, %p73
    %p75 = scmp.ne.s32.totalorder %s66, %s67
    %p76 = scmp.eq.s32.totalorder %s14, 0
    %p77 = por %p75, %p76
    %p78 = scmp.ne.s32.totalorder %s66, %s67
    %p79 = scmp.eq.s32.totalorder %s15, 1
    %p80 = por %p78, %p79
    %p82 = scmp.ne.s32.totalorder %s67, %s81
    %p83 = scmp.eq.s32.totalorder %s15, 0
    %p84 = por %p82, %p83
    %s85 = ssub.s32 %s9, %s16
    %p86 = scmp.eq.s32.totalorder %s85, 0
    %s88 = sadd.s32 %s87, 1
    %s89 = scalar_select %p86, %s87, %s88
    %p92 = pneg %p86
    %p93 = scmp.eq.s32.totalorder %s9, 1
    %p94 = por %p92, %p93
    %p95 = scmp.ne.s32.totalorder %s87, %s90
    %p96 = scmp.eq.s32.totalorder %s9, 0
    %p97 = por %p95, %p96
    %p98 = scmp.ne.s32.totalorder %s87, %s90
    %p99 = scmp.eq.s32.totalorder %s14, 1
    %p100 = por %p98, %p99
    %p101 = scmp.ne.s32.totalorder %s90, %s91
    %p102 = scmp.eq.s32.totalorder %s14, 0
    %p103 = por %p101, %p102
    %p104 = scmp.ne.s32.totalorder %s90, %s91
    %p105 = scmp.eq.s32.totalorder %s15, 1
    %p106 = por %p104, %p105
    %p108 = scmp.ne.s32.totalorder %s91, %s107
    %p109 = scmp.eq.s32.totalorder %s15, 0
    %p110 = por %p108, %p109
    %p111 = scmp.le.s32.totalorder 1, %s9
    %p112 = scmp.lt.s32.totalorder %s9, 3
    %p113 = pnand %p111, %p112
    %p114 = pneg %p113
    // Predicated region
    $region9: #{stem_forward.18} parent=5 // pred_check
      _
    $region10: #{stem_forward.18} parent=5 // pred_check_branch
      %116 = sbr.rel (%p113) target = $region12
    $region11: #{stem_forward.18} parent=5 // pred_region
      %s117 = ssub.s32 %s9, 1
      // Predicated region
      $region13: #{stem_forward.18} parent=11 // pred_check
        %p118 = pneg %p56
      $region14: #{stem_forward.18} parent=11 // pred_check_branch
        %120 = sbr.rel (%p118) target = $region16
      $region15: #{stem_forward.18} parent=11 // pred_region
        _
      $region16: #{stem_forward.18} parent=11 // pred_fallthru
        _
      // Predicated region
      $region17: #{stem_forward.18} parent=11 // pred_check
        %p121 = pneg %p77
      $region18: #{stem_forward.18} parent=11 // pred_check_branch
        %123 = sbr.rel (%p121) target = $region20
      $region19: #{stem_forward.18} parent=11 // pred_region
        _
      $region20: #{stem_forward.18} parent=11 // pred_fallthru
        _
    $region12: #{stem_forward.18} parent=5 // pred_fallthru
      _
    %p124 = scmp.lt.s32.totalorder %s9, 2
    // Predicated region
    $region21: #{stem_forward.18} parent=5 // pred_check
      %p125 = pneg %p124
    $region22: #{stem_forward.18} parent=5 // pred_check_branch
      %127 = sbr.rel (%p125) target = $region24
    $region23: #{stem_forward.18} parent=5 // pred_region
      // Predicated region
      $region25: #{stem_forward.18} parent=23 // pred_check
        %p128 = pneg %p29
      $region26: #{stem_forward.18} parent=23 // pred_check_branch
        %130 = sbr.rel (%p128) target = $region28
      $region27: #{stem_forward.18} parent=23 // pred_region
        %s131 = smul.u32 2, %s9
        %p132 = scmp.lt.s32.totalorder %s131, 3
        %s133 = scalar_select %p132, %s131, 3
        %s134 = smul.addr %s133, 5
        %s135 = smul.addr %s134, 4
        %s136 = scalar_lea.vmem %s0, %s135
        %s137 = smul.u32 2, %s9
      $region28: #{stem_forward.18} parent=23 // pred_fallthru
        _
    $region24: #{stem_forward.18} parent=5 // pred_fallthru
      _
    %p138 = scmp.le.s32.totalorder 1, %s9
    %p139 = scmp.lt.s32.totalorder %s9, 3
    %p140 = pnand %p138, %p139
    %p141 = pneg %p140
    // Predicated region
    $region29: #{stem_forward.18} parent=5 // pred_check
      _
    $region30: #{stem_forward.18} parent=5 // pred_check_branch
      %143 = sbr.rel (%p140) target = $region32
    $region31: #{stem_forward.18} parent=5 // pred_region
      %s144 = ssub.s32 %s9, 1
      %s145 = smul.u32 2, %s14
      %p146 = scmp.lt.s32.totalorder %s145, 3
      %s147 = scalar_select %p146, %s145, 3
      %s148 = smul.addr %s147, 5
      %s149 = smul.addr %s148, 4
      %s150 = scalar_lea.vmem %s0, %s149
      %p151 = pneg %p35
      %p152 = pneg %p32
      %p153 = pneg %p56
      %p154 = pneg %p53
      %p155 = pneg %p77
      %p156 = pneg %p74
      %p157 = pneg %p103
      %p158 = pneg %p100
      %s159 = smul.u32 2, %s14
      %p160 = scmp.lt.s32.totalorder %s159, 3
      %s161 = scalar_select %p160, %s159, 3
      %s162 = smul.addr %s161, 8
      %s163 = scalar_lea.vmem %s3, %s162
      %s164 = smul.u32 2, %s14
      %p165 = scmp.lt.s32.totalorder %s164, 3
      %s166 = scalar_select %p165, %s164, 3
      %s167 = smul.addr %s166, 5
      %s168 = smul.addr %s167, 4
      %s169 = scalar_lea.vmem %s0, %s168
      %s170 = smul.u32 2, %s14
      %s171 = smul.u32 2, %s14
      %p172 = scmp.lt.s32.totalorder %s171, 3
      %s173 = scalar_select %p172, %s171, 3
      %s174 = smul.addr %s173, 8
      %s175 = scalar_lea.vmem %s3, %s174
      %s176 = smul.u32 2, %s14
      %v178 = vld [vmem:[%s169] sm:$0xff]
      %v179 = vld [vmem:[%s169 + $0x8] sm:$0xff]
      %v180 = vld [vmem:[%s169 + $0x10] sm:$0xf]
      %v181 = vld [vmem:[%s169 + $0x14] sm:$0xff]
      %v182 = vld [vmem:[%s169 + $0x1c] sm:$0xff]
      %v183 = vld [vmem:[%s169 + $0x24] sm:$0xf]
      %v184 = vld [vmem:[%s1] sm:$0xf]
      %v185 = vld [vmem:[%s1 + $0x4] sm:$0xf]
      %v186 = vld [vmem:[%s1 + $0x8] sm:$0xf]
      %v187 = vld [vmem:[%s1 + $0xc] sm:$0xf]
      %v188 = vld [vmem:[%s1 + $0x10] sm:$0xf]
      %v189 = vld [vmem:[%s1 + $0x14] sm:$0xf]
      %v190 = vld [vmem:[%s1 + $0x18] sm:$0xf]
      %v191 = vld [vmem:[%s1 + $0x1c] sm:$0xf]
      %v192 = vld [vmem:[%s1 + $0x20] sm:$0xf]
      %v193 = vld [vmem:[%s1 + $0x24] sm:$0xf]
      %v194 = vld [vmem:[%s1 + $0x28] sm:$0xf]
      %v195 = vld [vmem:[%s1 + $0x2c] sm:$0xf]
      %v196 = vld [vmem:[%s1 + $0x30] sm:$0xf]
      %v197 = vld [vmem:[%s1 + $0x34] sm:$0xf]
      %v198 = vld [vmem:[%s1 + $0x38] sm:$0xf]
      %v199 = vld [vmem:[%s1 + $0x3c] sm:$0xf]
      %v200 = vld [vmem:[%s1 + $0x40] sm:$0xf]
      %v201 = vld [vmem:[%s1 + $0x44] sm:$0xf]
      %v202 = vld [vmem:[%s1 + $0x48] sm:$0xf]
      %v203 = vld [vmem:[%s1 + $0x4c] sm:$0xf]
      %v204 = vld [vmem:[%s1 + $0x50] sm:$0xf]
      %v205 = vld [vmem:[%s1 + $0x54] sm:$0xf]
      %v206 = vld [vmem:[%s1 + $0x58] sm:$0xf]
      %v207 = vld [vmem:[%s1 + $0x5c] sm:$0xf]
      %v208 = vld [vmem:[%s1 + $0x60] sm:$0xf]
      %v209 = vld [vmem:[%s1 + $0x64] sm:$0xf]
      %v210 = vld [vmem:[%s1 + $0x68] sm:$0xf]
      %v211 = vld [vmem:[%s1 + $0x6c] sm:$0xf]
      %v212 = vld [vmem:[%s1 + $0x70] sm:$0xf]
      %v213 = vld [vmem:[%s1 + $0x74] sm:$0xf]
      %v214 = vld [vmem:[%s1 + $0x78] sm:$0xf]
      %v215 = vld [vmem:[%s1 + $0x7c] sm:$0xf]
      %v216 = vld [vmem:[%s1 + $0x80] sm:$0xf]
      %v217 = vld [vmem:[%s1 + $0x84] sm:$0xf]
      %v218 = vld [vmem:[%s1 + $0x88] sm:$0xf]
      %v219 = vld [vmem:[%s1 + $0x8c] sm:$0xf]
      %v220 = vld [vmem:[%s1 + $0x90] sm:$0xf]
      %v221 = vld [vmem:[%s1 + $0x94] sm:$0xf]
      %v222 = vld [vmem:[%s1 + $0x98] sm:$0xf]
      %v223 = vld [vmem:[%s1 + $0x9c] sm:$0xf]
      %v224 = vld [vmem:[%s1 + $0xa0] sm:$0xf]
      %v225 = vld [vmem:[%s1 + $0xa4] sm:$0xf]
      %v226 = vld [vmem:[%s1 + $0xa8] sm:$0xf]
      %v227 = vld [vmem:[%s1 + $0xac] sm:$0xf]
      %v228 = vld [vmem:[%s1 + $0xb0] sm:$0xf]
      %v229 = vld [vmem:[%s1 + $0xb4] sm:$0xf]
      %v230 = vld [vmem:[%s1 + $0xb8] sm:$0xf]
      %v231 = vld [vmem:[%s1 + $0xbc] sm:$0xf]
      %v232 = vld [vmem:[%s1 + $0xc0] sm:$0xf]
      %v233 = vld [vmem:[%s1 + $0xc4] sm:$0xf]
      %v234 = vld [vmem:[%s1 + $0xc8] sm:$0xf]
      %v235 = vld [vmem:[%s1 + $0xcc] sm:$0xf]
      %v236 = vld [vmem:[%s1 + $0xd0] sm:$0xf]
      %v237 = vld [vmem:[%s1 + $0xd4] sm:$0xf]
      %v238 = vld [vmem:[%s1 + $0xd8] sm:$0xf]
      %v239 = vld [vmem:[%s1 + $0xdc] sm:$0xf]
      %v240 = vld [vmem:[%s1 + $0xe0] sm:$0xf]
      %v241 = vld [vmem:[%s1 + $0xe4] sm:$0xf]
      %v242 = vld [vmem:[%s1 + $0xe8] sm:$0xf]
      %v243 = vld [vmem:[%s1 + $0xec] sm:$0xf]
      %v244 = vld [vmem:[%s1 + $0xf0] sm:$0xf]
      %v245 = vld [vmem:[%s1 + $0xf4] sm:$0xf]
      %v246 = vld [vmem:[%s1 + $0xf8] sm:$0xf]
      %v247 = vld [vmem:[%s1 + $0xfc] sm:$0xf]
      %v248 = vld [vmem:[%s1 + $0x100] sm:$0xf]
      %v249 = vld [vmem:[%s1 + $0x104] sm:$0xf]
      %v250 = vld [vmem:[%s1 + $0x108] sm:$0xf]
      %v251 = vld [vmem:[%s1 + $0x10c] sm:$0xf]
      %v252 = vld [vmem:[%s1 + $0x110] sm:$0xf]
      %v253 = vld [vmem:[%s1 + $0x114] sm:$0xf]
      %v254 = vld [vmem:[%s1 + $0x118] sm:$0xf]
      %v255 = vld [vmem:[%s1 + $0x11c] sm:$0xf]
      %v256 = vld [vmem:[%s2] sm:$0x1]
      %v258 = vlaneseq
      %v259 = vshrl.u32 %v258, 7
      %v260 = vsub.s32 0, %v259
      %v261 = vrot.slane %v256, %v260
      %v269 = vunpack.c.l.b16 %v178
      %v270 = vunpack.c.h.b16 %v178
      %v271 = vunpack.c.l.b16 %v179
      %v272 = vunpack.c.h.b16 %v179
      %v273 = vunpack.c.l.b16 %v180
      %v274 = vunpack.c.l.b16 %v181
      %v275 = vunpack.c.h.b16 %v181
      %v276 = vunpack.c.l.b16 %v182
      %v277 = vunpack.c.h.b16 %v182
      %v278 = vunpack.c.l.b16 %v183
      %v279 = vpack.c.b16 %v274, %v269
      %v280 = vpack.c.b16 %v275, %v270
      %v281 = vpack.c.b16 %v276, %v271
      %v282 = vpack.c.b16 %v277, %v272
      %v283 = vpack.c.b16 %v278, %v273
      %v360 = vunpack.c.l.b16 %v184
      %v361 = vunpack.c.l.b16 %v185
      %v362 = vunpack.c.l.b16 %v186
      %v363 = vunpack.c.l.b16 %v187
      %v364 = vunpack.c.l.b16 %v188
      %v365 = vunpack.c.l.b16 %v189
      %v366 = vunpack.c.l.b16 %v190
      %v367 = vunpack.c.l.b16 %v191
      %v368 = vunpack.c.l.b16 %v192
      %v369 = vunpack.c.l.b16 %v193
      %v370 = vunpack.c.l.b16 %v194
      %v371 = vunpack.c.l.b16 %v195
      %v372 = vunpack.c.l.b16 %v196
      %v373 = vunpack.c.l.b16 %v197
      %v374 = vunpack.c.l.b16 %v198
      %v375 = vunpack.c.l.b16 %v199
      %v376 = vunpack.c.l.b16 %v200
      %v377 = vunpack.c.l.b16 %v201
      %v378 = vunpack.c.l.b16 %v202
      %v379 = vunpack.c.l.b16 %v203
      %v380 = vunpack.c.l.b16 %v204
      %v381 = vunpack.c.l.b16 %v205
      %v382 = vunpack.c.l.b16 %v206
      %v383 = vunpack.c.l.b16 %v207
      %v384 = vunpack.c.l.b16 %v208
      %v385 = vunpack.c.l.b16 %v209
      %v386 = vunpack.c.l.b16 %v210
      %v387 = vunpack.c.l.b16 %v211
      %v388 = vunpack.c.l.b16 %v212
      %v389 = vunpack.c.l.b16 %v213
      %v390 = vunpack.c.l.b16 %v214
      %v391 = vunpack.c.l.b16 %v215
      %v392 = vunpack.c.l.b16 %v216
      %v393 = vunpack.c.l.b16 %v217
      %v394 = vunpack.c.l.b16 %v218
      %v395 = vunpack.c.l.b16 %v219
      %v396 = vunpack.c.l.b16 %v220
      %v397 = vunpack.c.l.b16 %v221
      %v398 = vunpack.c.l.b16 %v222
      %v399 = vunpack.c.l.b16 %v223
      %v400 = vunpack.c.l.b16 %v224
      %v401 = vunpack.c.l.b16 %v225
      %v402 = vunpack.c.l.b16 %v226
      %v403 = vunpack.c.l.b16 %v227
      %v404 = vunpack.c.l.b16 %v228
      %v405 = vunpack.c.l.b16 %v229
      %v406 = vunpack.c.l.b16 %v230
      %v407 = vunpack.c.l.b16 %v231
      %v408 = vunpack.c.l.b16 %v232
      %v409 = vunpack.c.l.b16 %v233
      %v410 = vunpack.c.l.b16 %v234
      %v411 = vunpack.c.l.b16 %v235
      %v412 = vunpack.c.l.b16 %v236
      %v413 = vunpack.c.l.b16 %v237
      %v414 = vunpack.c.l.b16 %v238
      %v415 = vunpack.c.l.b16 %v239
      %v416 = vunpack.c.l.b16 %v240
      %v417 = vunpack.c.l.b16 %v241
      %v418 = vunpack.c.l.b16 %v242
      %v419 = vunpack.c.l.b16 %v243
      %v420 = vunpack.c.l.b16 %v244
      %v421 = vunpack.c.l.b16 %v245
      %v422 = vunpack.c.l.b16 %v246
      %v423 = vunpack.c.l.b16 %v247
      %v424 = vunpack.c.l.b16 %v248
      %v425 = vunpack.c.l.b16 %v249
      %v426 = vunpack.c.l.b16 %v250
      %v427 = vunpack.c.l.b16 %v251
      %v428 = vunpack.c.l.b16 %v252
      %v429 = vunpack.c.l.b16 %v253
      %v430 = vunpack.c.l.b16 %v254
      %v431 = vunpack.c.l.b16 %v255
      %v432 = vpack.c.b16 %v361, %v360
      %v433 = vpack.c.b16 %v363, %v362
      %v434 = vpack.c.b16 %v365, %v364
      %v435 = vpack.c.b16 %v367, %v366
      %v436 = vpack.c.b16 %v369, %v368
      %v437 = vpack.c.b16 %v371, %v370
      %v438 = vpack.c.b16 %v373, %v372
      %v439 = vpack.c.b16 %v375, %v374
      %v440 = vpack.c.b16 %v377, %v376
      %v441 = vpack.c.b16 %v379, %v378
      %v442 = vpack.c.b16 %v381, %v380
      %v443 = vpack.c.b16 %v383, %v382
      %v444 = vpack.c.b16 %v385, %v384
      %v445 = vpack.c.b16 %v387, %v386
      %v446 = vpack.c.b16 %v389, %v388
      %v447 = vpack.c.b16 %v391, %v390
      %v448 = vpack.c.b16 %v393, %v392
      %v449 = vpack.c.b16 %v395, %v394
      %v450 = vpack.c.b16 %v397, %v396
      %v451 = vpack.c.b16 %v399, %v398
      %v452 = vpack.c.b16 %v401, %v400
      %v453 = vpack.c.b16 %v403, %v402
      %v454 = vpack.c.b16 %v405, %v404
      %v455 = vpack.c.b16 %v407, %v406
      %v456 = vpack.c.b16 %v409, %v408
      %v457 = vpack.c.b16 %v411, %v410
      %v458 = vpack.c.b16 %v413, %v412
      %v459 = vpack.c.b16 %v415, %v414
      %v460 = vpack.c.b16 %v417, %v416
      %v461 = vpack.c.b16 %v419, %v418
      %v462 = vpack.c.b16 %v421, %v420
      %v463 = vpack.c.b16 %v423, %v422
      %v464 = vpack.c.b16 %v425, %v424
      %v465 = vpack.c.b16 %v427, %v426
      %v466 = vpack.c.b16 %v429, %v428
      %v467 = vpack.c.b16 %v431, %v430
      %vm504 = vcmask 523264
      %v506 = vsel %vm504, %v283, 0
      %508 = vmatprep.subr.bf16.mxu0 0
      %509 = vmatpush1.bf16.msra.mxu0 %v439
      %510 = vmatprep.subr.bf16.mxu0 0
      %511 = vmatpush1.bf16.msra.mxu0 %v438
      %512 = vmatprep.subr.bf16.mxu0 0
      %513 = vmatpush1.bf16.msra.mxu0 %v437
      %514 = vmatprep.subr.bf16.mxu0 0
      %515 = vmatpush1.bf16.msra.mxu0 %v436
      %516 = vmatprep.subr.bf16.mxu0 0
      %517 = vmatpush1.bf16.msra.mxu0 %v435
      %518 = vmatprep.subr.bf16.mxu0 0
      %519 = vmatpush1.bf16.msra.mxu0 %v434
      %520 = vmatprep.subr.bf16.mxu0 0
      %521 = vmatpush1.bf16.msra.mxu0 %v433
      %522 = vmatprep.subr.bf16.mxu0 0
      %523 = vmatpush1.bf16.msra.mxu0 %v432
      %524 = vmatprep.subr.bf16.mxu0 0
      %525 = vmatpush2.bf16.msra.mxu0 %v447
      %526 = vmatprep.subr.bf16.mxu0 0
      %527 = vmatpush2.bf16.msra.mxu0 %v446
      %528 = vmatprep.subr.bf16.mxu0 0
      %529 = vmatpush2.bf16.msra.mxu0 %v445
      %530 = vmatprep.subr.bf16.mxu0 0
      %531 = vmatpush2.bf16.msra.mxu0 %v444
      %532 = vmatprep.subr.bf16.mxu0 0
      %533 = vmatpush2.bf16.msra.mxu0 %v443
      %534 = vmatprep.subr.bf16.mxu0 0
      %535 = vmatpush2.bf16.msra.mxu0 %v442
      %536 = vmatprep.subr.bf16.mxu0 0
      %537 = vmatpush2.bf16.msra.mxu0 %v441
      %538 = vmatprep.subr.bf16.mxu0 0
      %539 = vmatpush2.bf16.msra.mxu0 %v440
      %540 = vmatprep.mubr.bf16.mxu0 %v280
      %541 = vmatmul.mubr.bf16.gmra.mxu0 %v279
      %v542 = vpop.f32.mrf.mxu0
      %v543 = vadd.f32 %v261, %v542
      %v544 = vpop.f32.mrf.mxu0
      %v545 = vpop.f32.mrf.mxu0
      %v546 = vadd.f32 %v261, %v545
      %v547 = vpop.f32.mrf.mxu0
      %548 = vdwg.mxu0
      %549 = vmatprep.subr.bf16.mxu0 0
      %550 = vmatpush1.bf16.msra.mxu0 %v455
      %551 = vmatprep.subr.bf16.mxu0 0
      %552 = vmatpush1.bf16.msra.mxu0 %v454
      %553 = vmatprep.subr.bf16.mxu0 0
      %554 = vmatpush1.bf16.msra.mxu0 %v453
      %555 = vmatprep.subr.bf16.mxu0 0
      %556 = vmatpush1.bf16.msra.mxu0 %v452
      %557 = vmatprep.subr.bf16.mxu0 0
      %558 = vmatpush1.bf16.msra.mxu0 %v451
      %559 = vmatprep.subr.bf16.mxu0 0
      %560 = vmatpush1.bf16.msra.mxu0 %v450
      %561 = vmatprep.subr.bf16.mxu0 0
      %562 = vmatpush1.bf16.msra.mxu0 %v449
      %563 = vmatprep.subr.bf16.mxu0 0
      %564 = vmatpush1.bf16.msra.mxu0 %v448
      %565 = vmatprep.subr.bf16.mxu0 0
      %566 = vmatpush2.bf16.msra.mxu0 %v463
      %567 = vmatprep.subr.bf16.mxu0 0
      %568 = vmatpush2.bf16.msra.mxu0 %v462
      %569 = vmatprep.subr.bf16.mxu0 0
      %570 = vmatpush2.bf16.msra.mxu0 %v461
      %571 = vmatprep.subr.bf16.mxu0 0
      %572 = vmatpush2.bf16.msra.mxu0 %v460
      %573 = vmatprep.subr.bf16.mxu0 0
      %574 = vmatpush2.bf16.msra.mxu0 %v459
      %575 = vmatprep.subr.bf16.mxu0 0
      %576 = vmatpush2.bf16.msra.mxu0 %v458
      %577 = vmatprep.subr.bf16.mxu0 0
      %578 = vmatpush2.bf16.msra.mxu0 %v457
      %579 = vmatprep.subr.bf16.mxu0 0
      %580 = vmatpush2.bf16.msra.mxu0 %v456
      %581 = vmatprep.mubr.bf16.mxu0 %v282
      %582 = vmatmul.mubr.bf16.gmra.mxu0 %v281
      %v583 = vpop.f32.mrf.mxu0
      %v584 = vadd.f32 %v543, %v583
      %v585 = vpop.f32.mrf.mxu0
      %v586 = vpop.f32.mrf.mxu0
      %v587 = vadd.f32 %v546, %v586
      %v588 = vpop.f32.mrf.mxu0
      %589 = vdwg.mxu0
      %590 = vmatprep.subr.bf16.mxu0 0
      %591 = vmatpush1.bf16.msra.mxu0 0
      %592 = vmatprep.subr.bf16.mxu0 0
      %593 = vmatpush1.bf16.msra.mxu0 0
      %594 = vmatprep.subr.bf16.mxu0 0
      %595 = vmatpush1.bf16.msra.mxu0 0
      %596 = vmatprep.subr.bf16.mxu0 0
      %597 = vmatpush1.bf16.msra.mxu0 0
      %598 = vmatprep.subr.bf16.mxu0 0
      %599 = vmatpush1.bf16.msra.mxu0 %v467
      %600 = vmatprep.subr.bf16.mxu0 0
      %601 = vmatpush1.bf16.msra.mxu0 %v466
      %602 = vmatprep.subr.bf16.mxu0 0
      %603 = vmatpush1.bf16.msra.mxu0 %v465
      %604 = vmatprep.subr.bf16.mxu0 0
      %605 = vmatpush1.bf16.msra.mxu0 %v464
      %606 = vmatprep.subr.bf16.mxu0 0
      %607 = vmatpush2.bf16.msra.mxu0 0
      %608 = vmatprep.subr.bf16.mxu0 0
      %609 = vmatpush2.bf16.msra.mxu0 0
      %610 = vmatprep.subr.bf16.mxu0 0
      %611 = vmatpush2.bf16.msra.mxu0 0
      %612 = vmatprep.subr.bf16.mxu0 0
      %613 = vmatpush2.bf16.msra.mxu0 0
      %614 = vmatprep.subr.bf16.mxu0 0
      %615 = vmatpush2.bf16.msra.mxu0 0
      %616 = vmatprep.subr.bf16.mxu0 0
      %617 = vmatpush2.bf16.msra.mxu0 0
      %618 = vmatprep.subr.bf16.mxu0 0
      %619 = vmatpush2.bf16.msra.mxu0 0
      %620 = vmatprep.subr.bf16.mxu0 0
      %621 = vmatpush2.bf16.msra.mxu0 0
      %622 = vmatprep.mubr.bf16.mxu0 0
      %623 = vmatmul.mubr.bf16.gmra.mxu0 %v506
      %v624 = vpop.f32.mrf.mxu0
      %v625 = vadd.f32 %v584, %v624
      %v626 = vpop.f32.mrf.mxu0
      %v627 = vpop.f32.mrf.mxu0
      %v628 = vadd.f32 %v587, %v627
      %v629 = vpop.f32.mrf.mxu0
      %630 = vdwg.mxu0
      %v631 = vmax.f32 %v625, 0.0
      %v632 = vmax.f32 %v628, 0.0
      %vm633 = vcmask 785408
      %634 = vst.msk [vmem:[%s175] sm:$0xff] %vm633, %v631
      %635 = vst.msk [vmem:[%s175 + $0x8] sm:$0xff] %vm633, %v632
      %s636 = smul.u32 2, %s14
      %p637 = scmp.lt.s32.totalorder %s636, 3
      %s638 = scalar_select %p637, %s636, 3
      %s639 = smul.addr %s638, 8
      %s640 = scalar_lea.vmem %s3, %s639
      // Predicated region
      $region33: #{stem_forward.18} parent=31 // pred_check
        %p641 = pneg %p100
      $region34: #{stem_forward.18} parent=31 // pred_check_branch
        %643 = sbr.rel (%p641) target = $region36
      $region35: #{stem_forward.18} parent=31 // pred_region
        %s644 = smul.u32 2, %s14
      $region36: #{stem_forward.18} parent=31 // pred_fallthru
        _
    $region32: #{stem_forward.18} parent=5 // pred_fallthru
      _
    %p645 = scmp.le.s32.totalorder 2, %s9
    // Predicated region
    $region37: #{stem_forward.18} parent=5 // pred_check
      %p646 = pneg %p645
    $region38: #{stem_forward.18} parent=5 // pred_check_branch
      %648 = sbr.rel (%p646) target = $region40
    $region39: #{stem_forward.18} parent=5 // pred_region
      %s649 = ssub.s32 %s9, 2
      // Predicated region
      $region41: #{stem_forward.18} parent=39 // pred_check
        %p650 = pneg %p106
      $region42: #{stem_forward.18} parent=39 // pred_check_branch
        %652 = sbr.rel (%p650) target = $region44
      $region43: #{stem_forward.18} parent=39 // pred_region
        %s653 = smul.u32 2, %s15
        %p654 = scmp.lt.s32.totalorder %s653, 3
        %s655 = scalar_select %p654, %s653, 3
        %s656 = smul.addr %s655, 8
        %s657 = scalar_lea.vmem %s3, %s656
      $region44: #{stem_forward.18} parent=39 // pred_fallthru
        _
    $region40: #{stem_forward.18} parent=5 // pred_fallthru
      _
  $region6: #{stem_forward.18} parent=0 // loop_footer
    %s13 = sadd.s32 1, %s9
  $region7: #{stem_forward.18} parent=0 // loop_footer_branch
    %8 = sbr.rel target = $region3
  $region8: #{stem_forward.18} parent=0 // loop_exit
    _

// kernel: stem_forward.19
$region0: #{stem_forward.19}
  #allocation0 [shape = 'u32[]', space=smem, size = 0x4, offset = 0x4, fixed_abs, tag = 'smem constant byte address 0x4 - core index']
  #allocation1 [shape = 'u32[144,128]{1,0:T(1,128)}', space=vmem, size = 0x12000, scoped, tag = 'internal scratch']
  %s0 = inlined_call_operand.vmem [shape: bf16[64,448], index: 0, kind: input, shape index: {}]
  %s1 = inlined_call_operand.vmem [shape: bf16[448,64], index: 1, kind: input, shape index: {}]
  %s2 = inlined_call_operand.vmem [shape: f32[1,64], index: 2, kind: input, shape index: {}]
  %s3 = inlined_call_operand.vmem [shape: f32[64,64], index: 3, kind: output, shape index: {}]
  %s4 = sld [smem:[#allocation0]]
  $region45: #{stem_forward.19} parent=0
    _
  %s6 = ssub.s32 1, %s4
  %s7 = scalar_select 0, %s6, %s4
  loop: start=0, step=1, limit=4
  $region2: #{stem_forward.19} parent=0 // loop_pre_header
    _
  $region3: #{stem_forward.19} parent=0 // loop_header
    %s9 = sphi 0, %s13
    %p10 = scmp.ge.s32.totalorder %s9, 4
    %s19 = sphi 0, %s21
    %s22 = sphi 0, %s19
    %s23 = sphi 0, %s22
    %s39 = sphi 0, %s23
    %s43 = sphi 0, %s43
    %s45 = sphi 0, %s43
    %s46 = sphi 0, %s45
    %s60 = sphi 0, %s46
    %s64 = sphi 0, %s64
    %s66 = sphi 0, %s64
    %s67 = sphi 0, %s66
    %s81 = sphi 0, %s67
    %s87 = sphi 0, %s89
    %s90 = sphi 0, %s87
    %s91 = sphi 0, %s90
    %s107 = sphi 0, %s91
  $region4: #{stem_forward.19} parent=0 // loop_header_branch
    %12 = sbr.rel (%p10) target = $region8
  $region5: #{stem_forward.19} parent=0 // loop_body
    %s14 = ssub.s32 %s9, 1
    %s15 = ssub.s32 %s9, 2
    %s16 = sadd.s32 %s9, 1
    %s17 = ssub.s32 %s9, %s16
    %p18 = scmp.eq.s32.totalorder %s17, 0
    %s20 = sadd.s32 %s19, 1
    %s21 = scalar_select %p18, %s19, %s20
    %p24 = pneg %p18
    %p25 = scmp.eq.s32.totalorder %s9, 1
    %p26 = por %p24, %p25
    %p27 = scmp.ne.s32.totalorder %s19, %s22
    %p28 = scmp.eq.s32.totalorder %s9, 0
    %p29 = por %p27, %p28
    %p30 = scmp.ne.s32.totalorder %s19, %s22
    %p31 = scmp.eq.s32.totalorder %s14, 1
    %p32 = por %p30, %p31
    %p33 = scmp.ne.s32.totalorder %s22, %s23
    %p34 = scmp.eq.s32.totalorder %s14, 0
    %p35 = por %p33, %p34
    %p36 = scmp.ne.s32.totalorder %s22, %s23
    %p37 = scmp.eq.s32.totalorder %s15, 1
    %p38 = por %p36, %p37
    %p40 = scmp.ne.s32.totalorder %s23, %s39
    %p41 = scmp.eq.s32.totalorder %s15, 0
    %p42 = por %p40, %p41
    %s44 = sadd.s32 %s43, 1
    %p47 = scmp.eq.s32.totalorder %s9, 1
    %p48 = scmp.ne.s32.totalorder %s43, %s45
    %p49 = scmp.eq.s32.totalorder %s9, 0
    %p50 = por %p48, %p49
    %p51 = scmp.ne.s32.totalorder %s43, %s45
    %p52 = scmp.eq.s32.totalorder %s14, 1
    %p53 = por %p51, %p52
    %p54 = scmp.ne.s32.totalorder %s45, %s46
    %p55 = scmp.eq.s32.totalorder %s14, 0
    %p56 = por %p54, %p55
    %p57 = scmp.ne.s32.totalorder %s45, %s46
    %p58 = scmp.eq.s32.totalorder %s15, 1
    %p59 = por %p57, %p58
    %p61 = scmp.ne.s32.totalorder %s46, %s60
    %p62 = scmp.eq.s32.totalorder %s15, 0
    %p63 = por %p61, %p62
    %s65 = sadd.s32 %s64, 1
    %p68 = scmp.eq.s32.totalorder %s9, 1
    %p69 = scmp.ne.s32.totalorder %s64, %s66
    %p70 = scmp.eq.s32.totalorder %s9, 0
    %p71 = por %p69, %p70
    %p72 = scmp.ne.s32.totalorder %s64, %s66
    %p73 = scmp.eq.s32.totalorder %s14, 1
    %p74 = por %p72, %p73
    %p75 = scmp.ne.s32.totalorder %s66, %s67
    %p76 = scmp.eq.s32.totalorder %s14, 0
    %p77 = por %p75, %p76
    %p78 = scmp.ne.s32.totalorder %s66, %s67
    %p79 = scmp.eq.s32.totalorder %s15, 1
    %p80 = por %p78, %p79
    %p82 = scmp.ne.s32.totalorder %s67, %s81
    %p83 = scmp.eq.s32.totalorder %s15, 0
    %p84 = por %p82, %p83
    %s85 = ssub.s32 %s9, %s16
    %p86 = scmp.eq.s32.totalorder %s85, 0
    %s88 = sadd.s32 %s87, 1
    %s89 = scalar_select %p86, %s87, %s88
    %p92 = pneg %p86
    %p93 = scmp.eq.s32.totalorder %s9, 1
    %p94 = por %p92, %p93
    %p95 = scmp.ne.s32.totalorder %s87, %s90
    %p96 = scmp.eq.s32.totalorder %s9, 0
    %p97 = por %p95, %p96
    %p98 = scmp.ne.s32.totalorder %s87, %s90
    %p99 = scmp.eq.s32.totalorder %s14, 1
    %p100 = por %p98, %p99
    %p101 = scmp.ne.s32.totalorder %s90, %s91
    %p102 = scmp.eq.s32.totalorder %s14, 0
    %p103 = por %p101, %p102
    %p104 = scmp.ne.s32.totalorder %s90, %s91
    %p105 = scmp.eq.s32.totalorder %s15, 1
    %p106 = por %p104, %p105
    %p108 = scmp.ne.s32.totalorder %s91, %s107
    %p109 = scmp.eq.s32.totalorder %s15, 0
    %p110 = por %p108, %p109
    %p111 = scmp.le.s32.totalorder 1, %s9
    %p112 = scmp.lt.s32.totalorder %s9, 3
    %p113 = pnand %p111, %p112
    %p114 = pneg %p113
    // Predicated region
    $region9: #{stem_forward.19} parent=5 // pred_check
      _
    $region10: #{stem_forward.19} parent=5 // pred_check_branch
      %116 = sbr.rel (%p113) target = $region12
    $region11: #{stem_forward.19} parent=5 // pred_region
      %s117 = ssub.s32 %s9, 1
      // Predicated region
      $region13: #{stem_forward.19} parent=11 // pred_check
        %p118 = pneg %p56
      $region14: #{stem_forward.19} parent=11 // pred_check_branch
        %120 = sbr.rel (%p118) target = $region16
      $region15: #{stem_forward.19} parent=11 // pred_region
        _
      $region16: #{stem_forward.19} parent=11 // pred_fallthru
        _
      // Predicated region
      $region17: #{stem_forward.19} parent=11 // pred_check
        %p121 = pneg %p77
      $region18: #{stem_forward.19} parent=11 // pred_check_branch
        %123 = sbr.rel (%p121) target = $region20
      $region19: #{stem_forward.19} parent=11 // pred_region
        _
      $region20: #{stem_forward.19} parent=11 // pred_fallthru
        _
    $region12: #{stem_forward.19} parent=5 // pred_fallthru
      _
    %p124 = scmp.lt.s32.totalorder %s9, 2
    // Predicated region
    $region21: #{stem_forward.19} parent=5 // pred_check
      %p125 = pneg %p124
    $region22: #{stem_forward.19} parent=5 // pred_check_branch
      %127 = sbr.rel (%p125) target = $region24
    $region23: #{stem_forward.19} parent=5 // pred_region
      // Predicated region
      $region25: #{stem_forward.19} parent=23 // pred_check
        %p128 = pneg %p29
      $region26: #{stem_forward.19} parent=23 // pred_check_branch
        %130 = sbr.rel (%p128) target = $region28
      $region27: #{stem_forward.19} parent=23 // pred_region
        %s131 = smul.u32 4, %s9
        %p132 = scmp.lt.s32.totalorder %s131, 7
        %s133 = scalar_select %p132, %s131, 7
        %s134 = smul.addr %s133, 4
        %s135 = smul.addr %s134, 4
        %s136 = scalar_lea.vmem %s0, %s135
        %s137 = smul.u32 4, %s9
      $region28: #{stem_forward.19} parent=23 // pred_fallthru
        _
    $region24: #{stem_forward.19} parent=5 // pred_fallthru
      _
    %p138 = scmp.le.s32.totalorder 1, %s9
    %p139 = scmp.lt.s32.totalorder %s9, 3
    %p140 = pnand %p138, %p139
    %p141 = pneg %p140
    // Predicated region
    $region29: #{stem_forward.19} parent=5 // pred_check
      _
    $region30: #{stem_forward.19} parent=5 // pred_check_branch
      %143 = sbr.rel (%p140) target = $region32
    $region31: #{stem_forward.19} parent=5 // pred_region
      %s144 = ssub.s32 %s9, 1
      %s145 = smul.u32 4, %s14
      %p146 = scmp.lt.s32.totalorder %s145, 7
      %s147 = scalar_select %p146, %s145, 7
      %s148 = smul.addr %s147, 4
      %s149 = smul.addr %s148, 4
      %s150 = scalar_lea.vmem %s0, %s149
      %p151 = pneg %p35
      %p152 = pneg %p32
      %p153 = pneg %p56
      %p154 = pneg %p53
      %p155 = pneg %p77
      %p156 = pneg %p74
      %p157 = pneg %p103
      %p158 = pneg %p100
      %s159 = smul.u32 4, %s14
      %p160 = scmp.lt.s32.totalorder %s159, 7
      %s161 = scalar_select %p160, %s159, 7
      %s162 = smul.addr %s161, 8
      %s163 = scalar_lea.vmem %s3, %s162
      %s164 = smul.u32 4, %s14
      %p165 = scmp.lt.s32.totalorder %s164, 7
      %s166 = scalar_select %p165, %s164, 7
      %s167 = smul.addr %s166, 4
      %s168 = smul.addr %s167, 4
      %s169 = scalar_lea.vmem %s0, %s168
      %s170 = smul.u32 4, %s14
      %s171 = smul.u32 4, %s14
      %p172 = scmp.lt.s32.totalorder %s171, 7
      %s173 = scalar_select %p172, %s171, 7
      %s174 = smul.addr %s173, 8
      %s175 = scalar_lea.vmem %s3, %s174
      %s176 = smul.u32 4, %s14
      %v178 = vld [vmem:[%s169] sm:$0xff]
      %v179 = vld [vmem:[%s169 + $0x8] sm:$0xff]
      %v180 = vld [vmem:[%s169 + $0x10] sm:$0xff]
      %v181 = vld [vmem:[%s169 + $0x18] sm:$0xff]
      %v182 = vld [vmem:[%s169 + $0x20] sm:$0xff]
      %v183 = vld [vmem:[%s169 + $0x28] sm:$0xff]
      %v184 = vld [vmem:[%s169 + $0x30] sm:$0xff]
      %v185 = vld [vmem:[%s169 + $0x38] sm:$0xff]
      %v186 = vld [vmem:[%s1] sm:$0xf]
      %v187 = vld [vmem:[%s1 + $0x4] sm:$0xf]
      %v188 = vld [vmem:[%s1 + $0x8] sm:$0xf]
      %v189 = vld [vmem:[%s1 + $0xc] sm:$0xf]
      %v190 = vld [vmem:[%s1 + $0x10] sm:$0xf]
      %v191 = vld [vmem:[%s1 + $0x14] sm:$0xf]
      %v192 = vld [vmem:[%s1 + $0x18] sm:$0xf]
      %v193 = vld [vmem:[%s1 + $0x1c] sm:$0xf]
      %v194 = vld [vmem:[%s1 + $0x20] sm:$0xf]
      %v195 = vld [vmem:[%s1 + $0x24] sm:$0xf]
      %v196 = vld [vmem:[%s1 + $0x28] sm:$0xf]
      %v197 = vld [vmem:[%s1 + $0x2c] sm:$0xf]
      %v198 = vld [vmem:[%s1 + $0x30] sm:$0xf]
      %v199 = vld [vmem:[%s1 + $0x34] sm:$0xf]
      %v200 = vld [vmem:[%s1 + $0x38] sm:$0xf]
      %v201 = vld [vmem:[%s1 + $0x3c] sm:$0xf]
      %v202 = vld [vmem:[%s1 + $0x40] sm:$0xf]
      %v203 = vld [vmem:[%s1 + $0x44] sm:$0xf]
      %v204 = vld [vmem:[%s1 + $0x48] sm:$0xf]
      %v205 = vld [vmem:[%s1 + $0x4c] sm:$0xf]
      %v206 = vld [vmem:[%s1 + $0x50] sm:$0xf]
      %v207 = vld [vmem:[%s1 + $0x54] sm:$0xf]
      %v208 = vld [vmem:[%s1 + $0x58] sm:$0xf]
      %v209 = vld [vmem:[%s1 + $0x5c] sm:$0xf]
      %v210 = vld [vmem:[%s1 + $0x60] sm:$0xf]
      %v211 = vld [vmem:[%s1 + $0x64] sm:$0xf]
      %v212 = vld [vmem:[%s1 + $0x68] sm:$0xf]
      %v213 = vld [vmem:[%s1 + $0x6c] sm:$0xf]
      %v214 = vld [vmem:[%s1 + $0x70] sm:$0xf]
      %v215 = vld [vmem:[%s1 + $0x74] sm:$0xf]
      %v216 = vld [vmem:[%s1 + $0x78] sm:$0xf]
      %v217 = vld [vmem:[%s1 + $0x7c] sm:$0xf]
      %v218 = vld [vmem:[%s1 + $0x80] sm:$0xf]
      %v219 = vld [vmem:[%s1 + $0x84] sm:$0xf]
      %v220 = vld [vmem:[%s1 + $0x88] sm:$0xf]
      %v221 = vld [vmem:[%s1 + $0x8c] sm:$0xf]
      %v222 = vld [vmem:[%s1 + $0x90] sm:$0xf]
      %v223 = vld [vmem:[%s1 + $0x94] sm:$0xf]
      %v224 = vld [vmem:[%s1 + $0x98] sm:$0xf]
      %v225 = vld [vmem:[%s1 + $0x9c] sm:$0xf]
      %v226 = vld [vmem:[%s1 + $0xa0] sm:$0xf]
      %v227 = vld [vmem:[%s1 + $0xa4] sm:$0xf]
      %v228 = vld [vmem:[%s1 + $0xa8] sm:$0xf]
      %v229 = vld [vmem:[%s1 + $0xac] sm:$0xf]
      %v230 = vld [vmem:[%s1 + $0xb0] sm:$0xf]
      %v231 = vld [vmem:[%s1 + $0xb4] sm:$0xf]
      %v232 = vld [vmem:[%s1 + $0xb8] sm:$0xf]
      %v233 = vld [vmem:[%s1 + $0xbc] sm:$0xf]
      %v234 = vld [vmem:[%s1 + $0xc0] sm:$0xf]
      %v235 = vld [vmem:[%s1 + $0xc4] sm:$0xf]
      %v236 = vld [vmem:[%s1 + $0xc8] sm:$0xf]
      %v237 = vld [vmem:[%s1 + $0xcc] sm:$0xf]
      %v238 = vld [vmem:[%s1 + $0xd0] sm:$0xf]
      %v239 = vld [vmem:[%s1 + $0xd4] sm:$0xf]
      %v240 = vld [vmem:[%s1 + $0xd8] sm:$0xf]
      %v241 = vld [vmem:[%s1 + $0xdc] sm:$0xf]
      %v242 = vld [vmem:[%s2] sm:$0x1]
      %v244 = vlaneseq
      %v245 = vshrl.u32 %v244, 7
      %v246 = vsub.s32 0, %v245
      %v247 = vrot.slane %v242, %v246
      %v257 = vunpack.c.l.b16 %v178
      %v258 = vunpack.c.h.b16 %v178
      %v259 = vunpack.c.l.b16 %v179
      %v260 = vunpack.c.h.b16 %v179
      %v261 = vunpack.c.l.b16 %v180
      %v262 = vunpack.c.h.b16 %v180
      %v263 = vunpack.c.l.b16 %v181
      %v264 = vunpack.c.h.b16 %v181
      %v265 = vunpack.c.l.b16 %v182
      %v266 = vunpack.c.h.b16 %v182
      %v267 = vunpack.c.l.b16 %v183
      %v268 = vunpack.c.h.b16 %v183
      %v269 = vunpack.c.l.b16 %v184
      %v270 = vunpack.c.h.b16 %v184
      %v271 = vunpack.c.l.b16 %v185
      %v272 = vunpack.c.h.b16 %v185
      %v273 = vpack.c.b16 %v261, %v257
      %v274 = vpack.c.b16 %v262, %v258
      %v275 = vpack.c.b16 %v263, %v259
      %v276 = vpack.c.b16 %v264, %v260
      %v277 = vpack.c.b16 %v269, %v265
      %v278 = vpack.c.b16 %v270, %v266
      %v279 = vpack.c.b16 %v271, %v267
      %v280 = vpack.c.b16 %v272, %v268
      %v343 = vunpack.c.l.b16 %v186
      %v344 = vunpack.c.l.b16 %v187
      %v345 = vunpack.c.l.b16 %v188
      %v346 = vunpack.c.l.b16 %v189
      %v347 = vunpack.c.l.b16 %v190
      %v348 = vunpack.c.l.b16 %v191
      %v349 = vunpack.c.l.b16 %v192
      %v350 = vunpack.c.l.b16 %v193
      %v351 = vunpack.c.l.b16 %v194
      %v352 = vunpack.c.l.b16 %v195
      %v353 = vunpack.c.l.b16 %v196
      %v354 = vunpack.c.l.b16 %v197
      %v355 = vunpack.c.l.b16 %v198
      %v356 = vunpack.c.l.b16 %v199
      %v357 = vunpack.c.l.b16 %v200
      %v358 = vunpack.c.l.b16 %v201
      %v359 = vunpack.c.l.b16 %v202
      %v360 = vunpack.c.l.b16 %v203
      %v361 = vunpack.c.l.b16 %v204
      %v362 = vunpack.c.l.b16 %v205
      %v363 = vunpack.c.l.b16 %v206
      %v364 = vunpack.c.l.b16 %v207
      %v365 = vunpack.c.l.b16 %v208
      %v366 = vunpack.c.l.b16 %v209
      %v367 = vunpack.c.l.b16 %v210
      %v368 = vunpack.c.l.b16 %v211
      %v369 = vunpack.c.l.b16 %v212
      %v370 = vunpack.c.l.b16 %v213
      %v371 = vunpack.c.l.b16 %v214
      %v372 = vunpack.c.l.b16 %v215
      %v373 = vunpack.c.l.b16 %v216
      %v374 = vunpack.c.l.b16 %v217
      %v375 = vunpack.c.l.b16 %v218
      %v376 = vunpack.c.l.b16 %v219
      %v377 = vunpack.c.l.b16 %v220
      %v378 = vunpack.c.l.b16 %v221
      %v379 = vunpack.c.l.b16 %v222
      %v380 = vunpack.c.l.b16 %v223
      %v381 = vunpack.c.l.b16 %v224
      %v382 = vunpack.c.l.b16 %v225
      %v383 = vunpack.c.l.b16 %v226
      %v384 = vunpack.c.l.b16 %v227
      %v385 = vunpack.c.l.b16 %v228
      %v386 = vunpack.c.l.b16 %v229
      %v387 = vunpack.c.l.b16 %v230
      %v388 = vunpack.c.l.b16 %v231
      %v389 = vunpack.c.l.b16 %v232
      %v390 = vunpack.c.l.b16 %v233
      %v391 = vunpack.c.l.b16 %v234
      %v392 = vunpack.c.l.b16 %v235
      %v393 = vunpack.c.l.b16 %v236
      %v394 = vunpack.c.l.b16 %v237
      %v395 = vunpack.c.l.b16 %v238
      %v396 = vunpack.c.l.b16 %v239
      %v397 = vunpack.c.l.b16 %v240
      %v398 = vunpack.c.l.b16 %v241
      %v399 = vpack.c.b16 %v344, %v343
      %v400 = vpack.c.b16 %v346, %v345
      %v401 = vpack.c.b16 %v348, %v347
      %v402 = vpack.c.b16 %v350, %v349
      %v403 = vpack.c.b16 %v352, %v351
      %v404 = vpack.c.b16 %v354, %v353
      %v405 = vpack.c.b16 %v356, %v355
      %v406 = vpack.c.b16 %v358, %v357
      %v407 = vpack.c.b16 %v360, %v359
      %v408 = vpack.c.b16 %v362, %v361
      %v409 = vpack.c.b16 %v364, %v363
      %v410 = vpack.c.b16 %v366, %v365
      %v411 = vpack.c.b16 %v368, %v367
      %v412 = vpack.c.b16 %v370, %v369
      %v413 = vpack.c.b16 %v372, %v371
      %v414 = vpack.c.b16 %v374, %v373
      %v415 = vpack.c.b16 %v376, %v375
      %v416 = vpack.c.b16 %v378, %v377
      %v417 = vpack.c.b16 %v380, %v379
      %v418 = vpack.c.b16 %v382, %v381
      %v419 = vpack.c.b16 %v384, %v383
      %v420 = vpack.c.b16 %v386, %v385
      %v421 = vpack.c.b16 %v388, %v387
      %v422 = vpack.c.b16 %v390, %v389
      %v423 = vpack.c.b16 %v392, %v391
      %v424 = vpack.c.b16 %v394, %v393
      %v425 = vpack.c.b16 %v396, %v395
      %v426 = vpack.c.b16 %v398, %v397
      %vm455 = vcmask 523264
      %v457 = vsel %vm455, %v276, 0
      %v460 = vsel %vm455, %v280, 0
      %462 = vmatprep.subr.bf16.mxu0 0
      %463 = vmatpush1.bf16.msra.mxu0 %v406
      %464 = vmatprep.subr.bf16.mxu0 0
      %465 = vmatpush1.bf16.msra.mxu0 %v405
      %466 = vmatprep.subr.bf16.mxu0 0
      %467 = vmatpush1.bf16.msra.mxu0 %v404
      %468 = vmatprep.subr.bf16.mxu0 0
      %469 = vmatpush1.bf16.msra.mxu0 %v403
      %470 = vmatprep.subr.bf16.mxu0 0
      %471 = vmatpush1.bf16.msra.mxu0 %v402
      %472 = vmatprep.subr.bf16.mxu0 0
      %473 = vmatpush1.bf16.msra.mxu0 %v401
      %474 = vmatprep.subr.bf16.mxu0 0
      %475 = vmatpush1.bf16.msra.mxu0 %v400
      %476 = vmatprep.subr.bf16.mxu0 0
      %477 = vmatpush1.bf16.msra.mxu0 %v399
      %478 = vmatprep.subr.bf16.mxu0 0
      %479 = vmatpush2.bf16.msra.mxu0 %v414
      %480 = vmatprep.subr.bf16.mxu0 0
      %481 = vmatpush2.bf16.msra.mxu0 %v413
      %482 = vmatprep.subr.bf16.mxu0 0
      %483 = vmatpush2.bf16.msra.mxu0 %v412
      %484 = vmatprep.subr.bf16.mxu0 0
      %485 = vmatpush2.bf16.msra.mxu0 %v411
      %486 = vmatprep.subr.bf16.mxu0 0
      %487 = vmatpush2.bf16.msra.mxu0 %v410
      %488 = vmatprep.subr.bf16.mxu0 0
      %489 = vmatpush2.bf16.msra.mxu0 %v409
      %490 = vmatprep.subr.bf16.mxu0 0
      %491 = vmatpush2.bf16.msra.mxu0 %v408
      %492 = vmatprep.subr.bf16.mxu0 0
      %493 = vmatpush2.bf16.msra.mxu0 %v407
      %494 = vmatprep.mubr.bf16.mxu0 %v274
      %495 = vmatmul.mubr.bf16.gmra.mxu0 %v273
      %v496 = vpop.f32.mrf.mxu0
      %v497 = vadd.f32 %v247, %v496
      %v498 = vpop.f32.mrf.mxu0
      %v499 = vpop.f32.mrf.mxu0
      %v500 = vadd.f32 %v247, %v499
      %v501 = vpop.f32.mrf.mxu0
      %502 = vmatprep.mubr.bf16.mxu0 %v278
      %503 = vmatmul.mubr.bf16.gmra.mxu0 %v277
      %v504 = vpop.f32.mrf.mxu0
      %v505 = vadd.f32 %v247, %v504
      %v506 = vpop.f32.mrf.mxu0
      %v507 = vpop.f32.mrf.mxu0
      %v508 = vadd.f32 %v247, %v507
      %v509 = vpop.f32.mrf.mxu0
      %510 = vdwg.mxu0
      %511 = vmatprep.subr.bf16.mxu0 0
      %512 = vmatpush1.bf16.msra.mxu0 %v422
      %513 = vmatprep.subr.bf16.mxu0 0
      %514 = vmatpush1.bf16.msra.mxu0 %v421
      %515 = vmatprep.subr.bf16.mxu0 0
      %516 = vmatpush1.bf16.msra.mxu0 %v420
      %517 = vmatprep.subr.bf16.mxu0 0
      %518 = vmatpush1.bf16.msra.mxu0 %v419
      %519 = vmatprep.subr.bf16.mxu0 0
      %520 = vmatpush1.bf16.msra.mxu0 %v418
      %521 = vmatprep.subr.bf16.mxu0 0
      %522 = vmatpush1.bf16.msra.mxu0 %v417
      %523 = vmatprep.subr.bf16.mxu0 0
      %524 = vmatpush1.bf16.msra.mxu0 %v416
      %525 = vmatprep.subr.bf16.mxu0 0
      %526 = vmatpush1.bf16.msra.mxu0 %v415
      %527 = vmatprep.subr.bf16.mxu0 0
      %528 = vmatpush2.bf16.msra.mxu0 0
      %529 = vmatprep.subr.bf16.mxu0 0
      %530 = vmatpush2.bf16.msra.mxu0 0
      %531 = vmatprep.subr.bf16.mxu0 0
      %532 = vmatpush2.bf16.msra.mxu0 0
      %533 = vmatprep.subr.bf16.mxu0 0
      %534 = vmatpush2.bf16.msra.mxu0 0
      %535 = vmatprep.subr.bf16.mxu0 0
      %536 = vmatpush2.bf16.msra.mxu0 %v426
      %537 = vmatprep.subr.bf16.mxu0 0
      %538 = vmatpush2.bf16.msra.mxu0 %v425
      %539 = vmatprep.subr.bf16.mxu0 0
      %540 = vmatpush2.bf16.msra.mxu0 %v424
      %541 = vmatprep.subr.bf16.mxu0 0
      %542 = vmatpush2.bf16.msra.mxu0 %v423
      %543 = vmatprep.mubr.bf16.mxu0 %v457
      %544 = vmatmul.mubr.bf16.gmra.mxu0 %v275
      %v545 = vpop.f32.mrf.mxu0
      %v546 = vadd.f32 %v497, %v545
      %v547 = vpop.f32.mrf.mxu0
      %v548 = vpop.f32.mrf.mxu0
      %v549 = vadd.f32 %v500, %v548
      %v550 = vpop.f32.mrf.mxu0
      %551 = vmatprep.mubr.bf16.mxu0 %v460
      %552 = vmatmul.mubr.bf16.gmra.mxu0 %v279
      %v553 = vpop.f32.mrf.mxu0
      %v554 = vadd.f32 %v505, %v553
      %v555 = vpop.f32.mrf.mxu0
      %v556 = vpop.f32.mrf.mxu0
      %v557 = vadd.f32 %v508, %v556
      %v558 = vpop.f32.mrf.mxu0
      %559 = vdwg.mxu0
      %v560 = vmax.f32 %v546, 0.0
      %v561 = vmax.f32 %v549, 0.0
      %v562 = vmax.f32 %v554, 0.0
      %v563 = vmax.f32 %v557, 0.0
      %564 = vst.msk [vmem:[%s175] sm:$0xff] %vm455, %v560
      %565 = vst.msk [vmem:[%s175 + $0x8] sm:$0xff] %vm455, %v561
      %566 = vst.msk [vmem:[%s175 + $0x10] sm:$0xff] %vm455, %v562
      %567 = vst.msk [vmem:[%s175 + $0x18] sm:$0xff] %vm455, %v563
      %s568 = smul.u32 4, %s14
      %p569 = scmp.lt.s32.totalorder %s568, 7
      %s570 = scalar_select %p569, %s568, 7
      %s571 = smul.addr %s570, 8
      %s572 = scalar_lea.vmem %s3, %s571
      // Predicated region
      $region33: #{stem_forward.19} parent=31 // pred_check
        %p573 = pneg %p100
      $region34: #{stem_forward.19} parent=31 // pred_check_branch
        %575 = sbr.rel (%p573) target = $region36
      $region35: #{stem_forward.19} parent=31 // pred_region
        %s576 = smul.u32 4, %s14
      $region36: #{stem_forward.19} parent=31 // pred_fallthru
        _
    $region32: #{stem_forward.19} parent=5 // pred_fallthru
      _
    %p577 = scmp.le.s32.totalorder 2, %s9
    // Predicated region
    $region37: #{stem_forward.19} parent=5 // pred_check
      %p578 = pneg %p577
    $region38: #{stem_forward.19} parent=5 // pred_check_branch
      %580 = sbr.rel (%p578) target = $region40
    $region39: #{stem_forward.19} parent=5 // pred_region
      %s581 = ssub.s32 %s9, 2
      // Predicated region
      $region41: #{stem_forward.19} parent=39 // pred_check
        %p582 = pneg %p106
      $region42: #{stem_forward.19} parent=39 // pred_check_branch
        %584 = sbr.rel (%p582) target = $region44
      $region43: #{stem_forward.19} parent=39 // pred_region
        %s585 = smul.u32 4, %s15
        %p586 = scmp.lt.s32.totalorder %s585, 7
        %s587 = scalar_select %p586, %s585, 7
        %s588 = smul.addr %s587, 8
        %s589 = scalar_lea.vmem %s3, %s588
      $region44: #{stem_forward.19} parent=39 // pred_fallthru
        _
    $region40: #{stem_forward.19} parent=5 // pred_fallthru
      _
  $region6: #{stem_forward.19} parent=0 // loop_footer
    %s13 = sadd.s32 1, %s9
  $region7: #{stem_forward.19} parent=0 // loop_footer_branch
    %8 = sbr.rel target = $region3
  $region8: #{stem_forward.19} parent=0 // loop_exit
    _

// kernel: stem_forward.23
$region0: #{stem_forward.23}
  #allocation0 [shape = 'u32[]', space=smem, size = 0x4, offset = 0x4, fixed_abs, tag = 'smem constant byte address 0x4 - core index']
  #allocation1 [shape = 'u32[144,128]{1,0:T(1,128)}', space=vmem, size = 0x12000, scoped, tag = 'internal scratch']
  %s0 = inlined_call_operand.vmem [shape: f32[8,192], index: 0, kind: input, shape index: {}]
  %s1 = inlined_call_operand.vmem [shape: f32[8,192], index: 1, kind: input, shape index: {}]
  %s2 = inlined_call_operand.vmem [shape: f32[8,192], index: 2, kind: input, shape index: {}]
  %s3 = inlined_call_operand.vmem [shape: f32[8,192], index: 3, kind: output, shape index: {}]
  %s4 = sld [smem:[#allocation0]]
  $region22: #{stem_forward.23} parent=0
    _
  %s6 = ssub.s32 1, %s4
  %s7 = scalar_select 0, %s6, %s4
  // Predicated region
  $region2: #{stem_forward.23} parent=0 // pred_check
    _
  $region3: #{stem_forward.23} parent=0 // pred_check_branch
    %9 = sbr.rel (0) target = $region5
  $region4: #{stem_forward.23} parent=0 // pred_region
    _
  $region5: #{stem_forward.23} parent=0 // pred_fallthru
    _
  // Predicated region
  $region6: #{stem_forward.23} parent=0 // pred_check
    _
  $region7: #{stem_forward.23} parent=0 // pred_check_branch
    %11 = sbr.rel (0) target = $region9
  $region8: #{stem_forward.23} parent=0 // pred_region
    _
  $region9: #{stem_forward.23} parent=0 // pred_fallthru
    _
  // Predicated region
  $region10: #{stem_forward.23} parent=0 // pred_check
    _
  $region11: #{stem_forward.23} parent=0 // pred_check_branch
    %13 = sbr.rel (0) target = $region13
  $region12: #{stem_forward.23} parent=0 // pred_region
    _
  $region13: #{stem_forward.23} parent=0 // pred_fallthru
    _
  %v14 = vld [vmem:[%s0] sm:$0xff]
  %v15 = vld [vmem:[%s0 + $0x8] sm:$0xff]
  %v16 = vld [vmem:[%s1] sm:$0xff]
  %v17 = vld [vmem:[%s1 + $0x8] sm:$0xff]
  %v18 = vmax.f32 %v14, %v16
  %v19 = vmax.f32 %v15, %v17
  %v20 = vld [vmem:[%s2] sm:$0xff]
  %v21 = vld [vmem:[%s2 + $0x8] sm:$0xff]
  %v22 = vmax.f32 %v18, %v20
  %v23 = vmax.f32 %v19, %v21
  %24 = vst [vmem:[%s3] sm:$0xff] %v22
  %vm25 = vcmask 523264
  %26 = vst.msk [vmem:[%s3 + $0x8] sm:$0xff] %vm25, %v23
  // Predicated region
  $region14: #{stem_forward.23} parent=0 // pred_check
    _
  $region15: #{stem_forward.23} parent=0 // pred_check_branch
    %28 = sbr.rel (0) target = $region17
  $region16: #{stem_forward.23} parent=0 // pred_region
    _
  $region17: #{stem_forward.23} parent=0 // pred_fallthru
    _
  // Predicated region
  $region18: #{stem_forward.23} parent=0 // pred_check
    _
  $region19: #{stem_forward.23} parent=0 // pred_check_branch
    %30 = sbr.rel (0) target = $region21
  $region20: #{stem_forward.23} parent=0 // pred_region
    _
  $region21: #{stem_forward.23} parent=0 // pred_fallthru
    _

// kernel: stem_forward.22
$region0: #{stem_forward.22}
  #allocation0 [shape = 'u32[]', space=smem, size = 0x4, offset = 0x4, fixed_abs, tag = 'smem constant byte address 0x4 - core index']
  #allocation1 [shape = 'u32[144,128]{1,0:T(1,128)}', space=vmem, size = 0x12000, scoped, tag = 'internal scratch']
  %s0 = inlined_call_operand.vmem [shape: bf16[8,1728], index: 0, kind: input, shape index: {}]
  %s1 = inlined_call_operand.vmem [shape: bf16[1728,192], index: 1, kind: input, shape index: {}]
  %s2 = inlined_call_operand.vmem [shape: f32[1,192], index: 2, kind: input, shape index: {}]
  %s3 = inlined_call_operand.vmem [shape: f32[8,192], index: 3, kind: output, shape index: {}]
  %s4 = sld [smem:[#allocation0]]
  $region22: #{stem_forward.22} parent=0
    _
  %s6 = ssub.s32 1, %s4
  %s7 = scalar_select 0, %s6, %s4
  // Predicated region
  $region2: #{stem_forward.22} parent=0 // pred_check
    _
  $region3: #{stem_forward.22} parent=0 // pred_check_branch
    %9 = sbr.rel (0) target = $region5
  $region4: #{stem_forward.22} parent=0 // pred_region
    _
  $region5: #{stem_forward.22} parent=0 // pred_fallthru
    _
  // Predicated region
  $region6: #{stem_forward.22} parent=0 // pred_check
    _
  $region7: #{stem_forward.22} parent=0 // pred_check_branch
    %11 = sbr.rel (0) target = $region9
  $region8: #{stem_forward.22} parent=0 // pred_region
    _
  $region9: #{stem_forward.22} parent=0 // pred_fallthru
    _
  // Predicated region
  $region10: #{stem_forward.22} parent=0 // pred_check
    _
  $region11: #{stem_forward.22} parent=0 // pred_check_branch
    %13 = sbr.rel (0) target = $region13
  $region12: #{stem_forward.22} parent=0 // pred_region
    _
  $region13: #{stem_forward.22} parent=0 // pred_fallthru
    _
  %v15 = vld [vmem:[%s0] sm:$0xff]
  %v16 = vld [vmem:[%s0 + $0x8] sm:$0xff]
  %v17 = vld [vmem:[%s0 + $0x10] sm:$0xff]
  %v18 = vld [vmem:[%s0 + $0x18] sm:$0xff]
  %v19 = vld [vmem:[%s0 + $0x20] sm:$0xff]
  %v20 = vld [vmem:[%s0 + $0x28] sm:$0xff]
  %v21 = vld [vmem:[%s0 + $0x30] sm:$0xff]
  %v22 = vld [vmem:[%s1] sm:$0xff]
  %v23 = vld [vmem:[%s1 + $0x8] sm:$0xff]
  %v24 = vld [vmem:[%s1 + $0x10] sm:$0xff]
  %v25 = vld [vmem:[%s1 + $0x18] sm:$0xff]
  %v26 = vld [vmem:[%s1 + $0x20] sm:$0xff]
  %v27 = vld [vmem:[%s1 + $0x28] sm:$0xff]
  %v28 = vld [vmem:[%s1 + $0x30] sm:$0xff]
  %v29 = vld [vmem:[%s1 + $0x38] sm:$0xff]
  %v30 = vld [vmem:[%s1 + $0x40] sm:$0xff]
  %v31 = vld [vmem:[%s1 + $0x48] sm:$0xff]
  %v32 = vld [vmem:[%s1 + $0x50] sm:$0xff]
  %v33 = vld [vmem:[%s1 + $0x58] sm:$0xff]
  %v34 = vld [vmem:[%s1 + $0x60] sm:$0xff]
  %v35 = vld [vmem:[%s1 + $0x68] sm:$0xff]
  %v36 = vld [vmem:[%s1 + $0x70] sm:$0xff]
  %v37 = vld [vmem:[%s1 + $0x78] sm:$0xff]
  %v38 = vld [vmem:[%s1 + $0x80] sm:$0xff]
  %v39 = vld [vmem:[%s1 + $0x88] sm:$0xff]
  %v40 = vld [vmem:[%s1 + $0x90] sm:$0xff]
  %v41 = vld [vmem:[%s1 + $0x98] sm:$0xff]
  %v42 = vld [vmem:[%s1 + $0xa0] sm:$0xff]
  %v43 = vld [vmem:[%s1 + $0xa8] sm:$0xff]
  %v44 = vld [vmem:[%s1 + $0xb0] sm:$0xff]
  %v45 = vld [vmem:[%s1 + $0xb8] sm:$0xff]
  %v46 = vld [vmem:[%s1 + $0xc0] sm:$0xff]
  %v47 = vld [vmem:[%s1 + $0xc8] sm:$0xff]
  %v48 = vld [vmem:[%s1 + $0xd0] sm:$0xff]
  %v49 = vld [vmem:[%s1 + $0xd8] sm:$0xff]
  %v50 = vld [vmem:[%s1 + $0xe0] sm:$0xff]
  %v51 = vld [vmem:[%s1 + $0xe8] sm:$0xff]
  %v52 = vld [vmem:[%s1 + $0xf0] sm:$0xff]
  %v53 = vld [vmem:[%s1 + $0xf8] sm:$0xff]
  %v54 = vld [vmem:[%s1 + $0x100] sm:$0xff]
  %v55 = vld [vmem:[%s1 + $0x108] sm:$0xff]
  %v56 = vld [vmem:[%s1 + $0x110] sm:$0xff]
  %v57 = vld [vmem:[%s1 + $0x118] sm:$0xff]
  %v58 = vld [vmem:[%s1 + $0x120] sm:$0xff]
  %v59 = vld [vmem:[%s1 + $0x128] sm:$0xff]
  %v60 = vld [vmem:[%s1 + $0x130] sm:$0xff]
  %v61 = vld [vmem:[%s1 + $0x138] sm:$0xff]
  %v62 = vld [vmem:[%s1 + $0x140] sm:$0xff]
  %v63 = vld [vmem:[%s1 + $0x148] sm:$0xff]
  %v64 = vld [vmem:[%s1 + $0x150] sm:$0xff]
  %v65 = vld [vmem:[%s1 + $0x158] sm:$0xff]
  %v66 = vld [vmem:[%s1 + $0x160] sm:$0xff]
  %v67 = vld [vmem:[%s1 + $0x168] sm:$0xff]
  %v68 = vld [vmem:[%s1 + $0x170] sm:$0xff]
  %v69 = vld [vmem:[%s1 + $0x178] sm:$0xff]
  %v70 = vld [vmem:[%s1 + $0x180] sm:$0xff]
  %v71 = vld [vmem:[%s1 + $0x188] sm:$0xff]
  %v72 = vld [vmem:[%s1 + $0x190] sm:$0xff]
  %v73 = vld [vmem:[%s1 + $0x198] sm:$0xff]
  %v74 = vld [vmem:[%s1 + $0x1a0] sm:$0xff]
  %v75 = vld [vmem:[%s1 + $0x1a8] sm:$0xff]
  %v76 = vld [vmem:[%s1 + $0x1b0] sm:$0xff]
  %v77 = vld [vmem:[%s1 + $0x1b8] sm:$0xff]
  %v78 = vld [vmem:[%s1 + $0x1c0] sm:$0xff]
  %v79 = vld [vmem:[%s1 + $0x1c8] sm:$0xff]
  %v80 = vld [vmem:[%s1 + $0x1d0] sm:$0xff]
  %v81 = vld [vmem:[%s1 + $0x1d8] sm:$0xff]
  %v82 = vld [vmem:[%s1 + $0x1e0] sm:$0xff]
  %v83 = vld [vmem:[%s1 + $0x1e8] sm:$0xff]
  %v84 = vld [vmem:[%s1 + $0x1f0] sm:$0xff]
  %v85 = vld [vmem:[%s1 + $0x1f8] sm:$0xff]
  %v86 = vld [vmem:[%s1 + $0x200] sm:$0xff]
  %v87 = vld [vmem:[%s1 + $0x208] sm:$0xff]
  %v88 = vld [vmem:[%s1 + $0x210] sm:$0xff]
  %v89 = vld [vmem:[%s1 + $0x218] sm:$0xff]
  %v90 = vld [vmem:[%s1 + $0x220] sm:$0xff]
  %v91 = vld [vmem:[%s1 + $0x228] sm:$0xff]
  %v92 = vld [vmem:[%s1 + $0x230] sm:$0xff]
  %v93 = vld [vmem:[%s1 + $0x238] sm:$0xff]
  %v94 = vld [vmem:[%s1 + $0x240] sm:$0xff]
  %v95 = vld [vmem:[%s1 + $0x248] sm:$0xff]
  %v96 = vld [vmem:[%s1 + $0x250] sm:$0xff]
  %v97 = vld [vmem:[%s1 + $0x258] sm:$0xff]
  %v98 = vld [vmem:[%s1 + $0x260] sm:$0xff]
  %v99 = vld [vmem:[%s1 + $0x268] sm:$0xff]
  %v100 = vld [vmem:[%s1 + $0x270] sm:$0xff]
  %v101 = vld [vmem:[%s1 + $0x278] sm:$0xff]
  %v102 = vld [vmem:[%s1 + $0x280] sm:$0xff]
  %v103 = vld [vmem:[%s1 + $0x288] sm:$0xff]
  %v104 = vld [vmem:[%s1 + $0x290] sm:$0xff]
  %v105 = vld [vmem:[%s1 + $0x298] sm:$0xff]
  %v106 = vld [vmem:[%s1 + $0x2a0] sm:$0xff]
  %v107 = vld [vmem:[%s1 + $0x2a8] sm:$0xff]
  %v108 = vld [vmem:[%s1 + $0x2b0] sm:$0xff]
  %v109 = vld [vmem:[%s1 + $0x2b8] sm:$0xff]
  %v110 = vld [vmem:[%s1 + $0x2c0] sm:$0xff]
  %v111 = vld [vmem:[%s1 + $0x2c8] sm:$0xff]
  %v112 = vld [vmem:[%s1 + $0x2d0] sm:$0xff]
  %v113 = vld [vmem:[%s1 + $0x2d8] sm:$0xff]
  %v114 = vld [vmem:[%s1 + $0x2e0] sm:$0xff]
  %v115 = vld [vmem:[%s1 + $0x2e8] sm:$0xff]
  %v116 = vld [vmem:[%s1 + $0x2f0] sm:$0xff]
  %v117 = vld [vmem:[%s1 + $0x2f8] sm:$0xff]
  %v118 = vld [vmem:[%s1 + $0x300] sm:$0xff]
  %v119 = vld [vmem:[%s1 + $0x308] sm:$0xff]
  %v120 = vld [vmem:[%s1 + $0x310] sm:$0xff]
  %v121 = vld [vmem:[%s1 + $0x318] sm:$0xff]
  %v122 = vld [vmem:[%s1 + $0x320] sm:$0xff]
  %v123 = vld [vmem:[%s1 + $0x328] sm:$0xff]
  %v124 = vld [vmem:[%s1 + $0x330] sm:$0xff]
  %v125 = vld [vmem:[%s1 + $0x338] sm:$0xff]
  %v126 = vld [vmem:[%s1 + $0x340] sm:$0xff]
  %v127 = vld [vmem:[%s1 + $0x348] sm:$0xff]
  %v128 = vld [vmem:[%s1 + $0x350] sm:$0xff]
  %v129 = vld [vmem:[%s1 + $0x358] sm:$0xff]
  %v130 = vld [vmem:[%s1 + $0x360] sm:$0xff]
  %v131 = vld [vmem:[%s1 + $0x368] sm:$0xff]
  %v132 = vld [vmem:[%s1 + $0x370] sm:$0xff]
  %v133 = vld [vmem:[%s1 + $0x378] sm:$0xff]
  %v134 = vld [vmem:[%s1 + $0x380] sm:$0xff]
  %v135 = vld [vmem:[%s1 + $0x388] sm:$0xff]
  %v136 = vld [vmem:[%s1 + $0x390] sm:$0xff]
  %v137 = vld [vmem:[%s1 + $0x398] sm:$0xff]
  %v138 = vld [vmem:[%s1 + $0x3a0] sm:$0xff]
  %v139 = vld [vmem:[%s1 + $0x3a8] sm:$0xff]
  %v140 = vld [vmem:[%s1 + $0x3b0] sm:$0xff]
  %v141 = vld [vmem:[%s1 + $0x3b8] sm:$0xff]
  %v142 = vld [vmem:[%s1 + $0x3c0] sm:$0xff]
  %v143 = vld [vmem:[%s1 + $0x3c8] sm:$0xff]
  %v144 = vld [vmem:[%s1 + $0x3d0] sm:$0xff]
  %v145 = vld [vmem:[%s1 + $0x3d8] sm:$0xff]
  %v146 = vld [vmem:[%s1 + $0x3e0] sm:$0xff]
  %v147 = vld [vmem:[%s1 + $0x3e8] sm:$0xff]
  %v148 = vld [vmem:[%s1 + $0x3f0] sm:$0xff]
  %v149 = vld [vmem:[%s1 + $0x3f8] sm:$0xff]
  %v150 = vld [vmem:[%s1 + $0x400] sm:$0xff]
  %v151 = vld [vmem:[%s1 + $0x408] sm:$0xff]
  %v152 = vld [vmem:[%s1 + $0x410] sm:$0xff]
  %v153 = vld [vmem:[%s1 + $0x418] sm:$0xff]
  %v154 = vld [vmem:[%s1 + $0x420] sm:$0xff]
  %v155 = vld [vmem:[%s1 + $0x428] sm:$0xff]
  %v156 = vld [vmem:[%s1 + $0x430] sm:$0xff]
  %v157 = vld [vmem:[%s1 + $0x438] sm:$0xff]
  %v158 = vld [vmem:[%s1 + $0x440] sm:$0xff]
  %v159 = vld [vmem:[%s1 + $0x448] sm:$0xff]
  %v160 = vld [vmem:[%s1 + $0x450] sm:$0xff]
  %v161 = vld [vmem:[%s1 + $0x458] sm:$0xff]
  %v162 = vld [vmem:[%s1 + $0x460] sm:$0xff]
  %v163 = vld [vmem:[%s1 + $0x468] sm:$0xff]
  %v164 = vld [vmem:[%s1 + $0x470] sm:$0xff]
  %v165 = vld [vmem:[%s1 + $0x478] sm:$0xff]
  %v166 = vld [vmem:[%s1 + $0x480] sm:$0xff]
  %v167 = vld [vmem:[%s1 + $0x488] sm:$0xff]
  %v168 = vld [vmem:[%s1 + $0x490] sm:$0xff]
  %v169 = vld [vmem:[%s1 + $0x498] sm:$0xff]
  %v170 = vld [vmem:[%s1 + $0x4a0] sm:$0xff]
  %v171 = vld [vmem:[%s1 + $0x4a8] sm:$0xff]
  %v172 = vld [vmem:[%s1 + $0x4b0] sm:$0xff]
  %v173 = vld [vmem:[%s1 + $0x4b8] sm:$0xff]
  %v174 = vld [vmem:[%s1 + $0x4c0] sm:$0xff]
  %v175 = vld [vmem:[%s1 + $0x4c8] sm:$0xff]
  %v176 = vld [vmem:[%s1 + $0x4d0] sm:$0xff]
  %v177 = vld [vmem:[%s1 + $0x4d8] sm:$0xff]
  %v178 = vld [vmem:[%s1 + $0x4e0] sm:$0xff]
  %v179 = vld [vmem:[%s1 + $0x4e8] sm:$0xff]
  %v180 = vld [vmem:[%s1 + $0x4f0] sm:$0xff]
  %v181 = vld [vmem:[%s1 + $0x4f8] sm:$0xff]
  %v182 = vld [vmem:[%s1 + $0x500] sm:$0xff]
  %v183 = vld [vmem:[%s1 + $0x508] sm:$0xff]
  %v184 = vld [vmem:[%s1 + $0x510] sm:$0xff]
  %v185 = vld [vmem:[%s1 + $0x518] sm:$0xff]
  %v186 = vld [vmem:[%s1 + $0x520] sm:$0xff]
  %v187 = vld [vmem:[%s1 + $0x528] sm:$0xff]
  %v188 = vld [vmem:[%s1 + $0x530] sm:$0xff]
  %v189 = vld [vmem:[%s1 + $0x538] sm:$0xff]
  %v190 = vld [vmem:[%s1 + $0x540] sm:$0xff]
  %v191 = vld [vmem:[%s1 + $0x548] sm:$0xff]
  %v192 = vld [vmem:[%s1 + $0x550] sm:$0xff]
  %v193 = vld [vmem:[%s1 + $0x558] sm:$0xff]
  %v194 = vld [vmem:[%s1 + $0x560] sm:$0xff]
  %v195 = vld [vmem:[%s1 + $0x568] sm:$0xff]
  %v196 = vld [vmem:[%s1 + $0x570] sm:$0xff]
  %v197 = vld [vmem:[%s1 + $0x578] sm:$0xff]
  %v198 = vld [vmem:[%s1 + $0x580] sm:$0xff]
  %v199 = vld [vmem:[%s1 + $0x588] sm:$0xff]
  %v200 = vld [vmem:[%s1 + $0x590] sm:$0xff]
  %v201 = vld [vmem:[%s1 + $0x598] sm:$0xff]
  %v202 = vld [vmem:[%s1 + $0x5a0] sm:$0xff]
  %v203 = vld [vmem:[%s1 + $0x5a8] sm:$0xff]
  %v204 = vld [vmem:[%s1 + $0x5b0] sm:$0xff]
  %v205 = vld [vmem:[%s1 + $0x5b8] sm:$0xff]
  %v206 = vld [vmem:[%s1 + $0x5c0] sm:$0xff]
  %v207 = vld [vmem:[%s1 + $0x5c8] sm:$0xff]
  %v208 = vld [vmem:[%s1 + $0x5d0] sm:$0xff]
  %v209 = vld [vmem:[%s1 + $0x5d8] sm:$0xff]
  %v210 = vld [vmem:[%s1 + $0x5e0] sm:$0xff]
  %v211 = vld [vmem:[%s1 + $0x5e8] sm:$0xff]
  %v212 = vld [vmem:[%s1 + $0x5f0] sm:$0xff]
  %v213 = vld [vmem:[%s1 + $0x5f8] sm:$0xff]
  %v214 = vld [vmem:[%s1 + $0x600] sm:$0xff]
  %v215 = vld [vmem:[%s1 + $0x608] sm:$0xff]
  %v216 = vld [vmem:[%s1 + $0x610] sm:$0xff]
  %v217 = vld [vmem:[%s1 + $0x618] sm:$0xff]
  %v218 = vld [vmem:[%s1 + $0x620] sm:$0xff]
  %v219 = vld [vmem:[%s1 + $0x628] sm:$0xff]
  %v220 = vld [vmem:[%s1 + $0x630] sm:$0xff]
  %v221 = vld [vmem:[%s1 + $0x638] sm:$0xff]
  %v222 = vld [vmem:[%s1 + $0x640] sm:$0xff]
  %v223 = vld [vmem:[%s1 + $0x648] sm:$0xff]
  %v224 = vld [vmem:[%s1 + $0x650] sm:$0xff]
  %v225 = vld [vmem:[%s1 + $0x658] sm:$0xff]
  %v226 = vld [vmem:[%s1 + $0x660] sm:$0xff]
  %v227 = vld [vmem:[%s1 + $0x668] sm:$0xff]
  %v228 = vld [vmem:[%s1 + $0x670] sm:$0xff]
  %v229 = vld [vmem:[%s1 + $0x678] sm:$0xff]
  %v230 = vld [vmem:[%s1 + $0x680] sm:$0xff]
  %v231 = vld [vmem:[%s1 + $0x688] sm:$0xff]
  %v232 = vld [vmem:[%s1 + $0x690] sm:$0xff]
  %v233 = vld [vmem:[%s1 + $0x698] sm:$0xff]
  %v234 = vld [vmem:[%s1 + $0x6a0] sm:$0xff]
  %v235 = vld [vmem:[%s1 + $0x6a8] sm:$0xff]
  %v236 = vld [vmem:[%s1 + $0x6b0] sm:$0xff]
  %v237 = vld [vmem:[%s1 + $0x6b8] sm:$0xff]
  %v238 = vld [vmem:[%s2] sm:$0x3]
  %v240 = vlaneseq
  %v241 = vshrl.u32 %v240, 7
  %v242 = vsub.s32 0, %v241
  %v243 = vrot.slane %v238, %v242
  %v244 = vlaneseq
  %v245 = vshrl.u32 %v244, 7
  %v246 = vsub.s32 1, %v245
  %v247 = vrot.slane %v238, %v246
  %v257 = vunpack.c.l.b16 %v15
  %v258 = vunpack.c.h.b16 %v15
  %v259 = vunpack.c.l.b16 %v16
  %v260 = vunpack.c.h.b16 %v16
  %v261 = vunpack.c.l.b16 %v17
  %v262 = vunpack.c.h.b16 %v17
  %v263 = vunpack.c.l.b16 %v18
  %v264 = vunpack.c.h.b16 %v18
  %v265 = vunpack.c.l.b16 %v19
  %v266 = vunpack.c.h.b16 %v19
  %v267 = vunpack.c.l.b16 %v20
  %v268 = vunpack.c.h.b16 %v20
  %v269 = vunpack.c.l.b16 %v21
  %v270 = vunpack.c.h.b16 %v21
  %v271 = vpack.c.b16 %v257, %v257
  %v272 = vpack.c.b16 %v258, %v258
  %v273 = vpack.c.b16 %v259, %v259
  %v274 = vpack.c.b16 %v260, %v260
  %v275 = vpack.c.b16 %v261, %v261
  %v276 = vpack.c.b16 %v262, %v262
  %v277 = vpack.c.b16 %v263, %v263
  %v278 = vpack.c.b16 %v264, %v264
  %v279 = vpack.c.b16 %v265, %v265
  %v280 = vpack.c.b16 %v266, %v266
  %v281 = vpack.c.b16 %v267, %v267
  %v282 = vpack.c.b16 %v268, %v268
  %v283 = vpack.c.b16 %v269, %v269
  %v284 = vpack.c.b16 %v270, %v270
  %v514 = vunpack.c.l.b16 %v22
  %v515 = vunpack.c.h.b16 %v22
  %v516 = vunpack.c.l.b16 %v23
  %v517 = vunpack.c.h.b16 %v23
  %v518 = vunpack.c.l.b16 %v24
  %v519 = vunpack.c.h.b16 %v24
  %v520 = vunpack.c.l.b16 %v25
  %v521 = vunpack.c.h.b16 %v25
  %v522 = vunpack.c.l.b16 %v26
  %v523 = vunpack.c.h.b16 %v26
  %v524 = vunpack.c.l.b16 %v27
  %v525 = vunpack.c.h.b16 %v27
  %v526 = vunpack.c.l.b16 %v28
  %v527 = vunpack.c.h.b16 %v28
  %v528 = vunpack.c.l.b16 %v29
  %v529 = vunpack.c.h.b16 %v29
  %v530 = vunpack.c.l.b16 %v30
  %v531 = vunpack.c.h.b16 %v30
  %v532 = vunpack.c.l.b16 %v31
  %v533 = vunpack.c.h.b16 %v31
  %v534 = vunpack.c.l.b16 %v32
  %v535 = vunpack.c.h.b16 %v32
  %v536 = vunpack.c.l.b16 %v33
  %v537 = vunpack.c.h.b16 %v33
  %v538 = vunpack.c.l.b16 %v34
  %v539 = vunpack.c.h.b16 %v34
  %v540 = vunpack.c.l.b16 %v35
  %v541 = vunpack.c.h.b16 %v35
  %v542 = vunpack.c.l.b16 %v36
  %v543 = vunpack.c.h.b16 %v36
  %v544 = vunpack.c.l.b16 %v37
  %v545 = vunpack.c.h.b16 %v37
  %v546 = vunpack.c.l.b16 %v38
  %v547 = vunpack.c.h.b16 %v38
  %v548 = vunpack.c.l.b16 %v39
  %v549 = vunpack.c.h.b16 %v39
  %v550 = vunpack.c.l.b16 %v40
  %v551 = vunpack.c.h.b16 %v40
  %v552 = vunpack.c.l.b16 %v41
  %v553 = vunpack.c.h.b16 %v41
  %v554 = vunpack.c.l.b16 %v42
  %v555 = vunpack.c.h.b16 %v42
  %v556 = vunpack.c.l.b16 %v43
  %v557 = vunpack.c.h.b16 %v43
  %v558 = vunpack.c.l.b16 %v44
  %v559 = vunpack.c.h.b16 %v44
  %v560 = vunpack.c.l.b16 %v45
  %v561 = vunpack.c.h.b16 %v45
  %v562 = vunpack.c.l.b16 %v46
  %v563 = vunpack.c.h.b16 %v46
  %v564 = vunpack.c.l.b16 %v47
  %v565 = vunpack.c.h.b16 %v47
  %v566 = vunpack.c.l.b16 %v48
  %v567 = vunpack.c.h.b16 %v48
  %v568 = vunpack.c.l.b16 %v49
  %v569 = vunpack.c.h.b16 %v49
  %v570 = vunpack.c.l.b16 %v50
  %v571 = vunpack.c.h.b16 %v50
  %v572 = vunpack.c.l.b16 %v51
  %v573 = vunpack.c.h.b16 %v51
  %v574 = vunpack.c.l.b16 %v52
  %v575 = vunpack.c.h.b16 %v52
  %v576 = vunpack.c.l.b16 %v53
  %v577 = vunpack.c.h.b16 %v53
  %v578 = vunpack.c.l.b16 %v54
  %v579 = vunpack.c.h.b16 %v54
  %v580 = vunpack.c.l.b16 %v55
  %v581 = vunpack.c.h.b16 %v55
  %v582 = vunpack.c.l.b16 %v56
  %v583 = vunpack.c.h.b16 %v56
  %v584 = vunpack.c.l.b16 %v57
  %v585 = vunpack.c.h.b16 %v57
  %v586 = vunpack.c.l.b16 %v58
  %v587 = vunpack.c.h.b16 %v58
  %v588 = vunpack.c.l.b16 %v59
  %v589 = vunpack.c.h.b16 %v59
  %v590 = vunpack.c.l.b16 %v60
  %v591 = vunpack.c.h.b16 %v60
  %v592 = vunpack.c.l.b16 %v61
  %v593 = vunpack.c.h.b16 %v61
  %v594 = vunpack.c.l.b16 %v62
  %v595 = vunpack.c.h.b16 %v62
  %v596 = vunpack.c.l.b16 %v63
  %v597 = vunpack.c.h.b16 %v63
  %v598 = vunpack.c.l.b16 %v64
  %v599 = vunpack.c.h.b16 %v64
  %v600 = vunpack.c.l.b16 %v65
  %v601 = vunpack.c.h.b16 %v65
  %v602 = vunpack.c.l.b16 %v66
  %v603 = vunpack.c.h.b16 %v66
  %v604 = vunpack.c.l.b16 %v67
  %v605 = vunpack.c.h.b16 %v67
  %v606 = vunpack.c.l.b16 %v68
  %v607 = vunpack.c.h.b16 %v68
  %v608 = vunpack.c.l.b16 %v69
  %v609 = vunpack.c.h.b16 %v69
  %v610 = vunpack.c.l.b16 %v70
  %v611 = vunpack.c.h.b16 %v70
  %v612 = vunpack.c.l.b16 %v71
  %v613 = vunpack.c.h.b16 %v71
  %v614 = vunpack.c.l.b16 %v72
  %v615 = vunpack.c.h.b16 %v72
  %v616 = vunpack.c.l.b16 %v73
  %v617 = vunpack.c.h.b16 %v73
  %v618 = vunpack.c.l.b16 %v74
  %v619 = vunpack.c.h.b16 %v74
  %v620 = vunpack.c.l.b16 %v75
  %v621 = vunpack.c.h.b16 %v75
  %v622 = vunpack.c.l.b16 %v76
  %v623 = vunpack.c.h.b16 %v76
  %v624 = vunpack.c.l.b16 %v77
  %v625 = vunpack.c.h.b16 %v77
  %v626 = vunpack.c.l.b16 %v78
  %v627 = vunpack.c.h.b16 %v78
  %v628 = vunpack.c.l.b16 %v79
  %v629 = vunpack.c.h.b16 %v79
  %v630 = vunpack.c.l.b16 %v80
  %v631 = vunpack.c.h.b16 %v80
  %v632 = vunpack.c.l.b16 %v81
  %v633 = vunpack.c.h.b16 %v81
  %v634 = vunpack.c.l.b16 %v82
  %v635 = vunpack.c.h.b16 %v82
  %v636 = vunpack.c.l.b16 %v83
  %v637 = vunpack.c.h.b16 %v83
  %v638 = vunpack.c.l.b16 %v84
  %v639 = vunpack.c.h.b16 %v84
  %v640 = vunpack.c.l.b16 %v85
  %v641 = vunpack.c.h.b16 %v85
  %v642 = vunpack.c.l.b16 %v86
  %v643 = vunpack.c.h.b16 %v86
  %v644 = vunpack.c.l.b16 %v87
  %v645 = vunpack.c.h.b16 %v87
  %v646 = vunpack.c.l.b16 %v88
  %v647 = vunpack.c.h.b16 %v88
  %v648 = vunpack.c.l.b16 %v89
  %v649 = vunpack.c.h.b16 %v89
  %v650 = vunpack.c.l.b16 %v90
  %v651 = vunpack.c.h.b16 %v90
  %v652 = vunpack.c.l.b16 %v91
  %v653 = vunpack.c.h.b16 %v91
  %v654 = vunpack.c.l.b16 %v92
  %v655 = vunpack.c.h.b16 %v92
  %v656 = vunpack.c.l.b16 %v93
  %v657 = vunpack.c.h.b16 %v93
  %v658 = vunpack.c.l.b16 %v94
  %v659 = vunpack.c.h.b16 %v94
  %v660 = vunpack.c.l.b16 %v95
  %v661 = vunpack.c.h.b16 %v95
  %v662 = vunpack.c.l.b16 %v96
  %v663 = vunpack.c.h.b16 %v96
  %v664 = vunpack.c.l.b16 %v97
  %v665 = vunpack.c.h.b16 %v97
  %v666 = vunpack.c.l.b16 %v98
  %v667 = vunpack.c.h.b16 %v98
  %v668 = vunpack.c.l.b16 %v99
  %v669 = vunpack.c.h.b16 %v99
  %v670 = vunpack.c.l.b16 %v100
  %v671 = vunpack.c.h.b16 %v100
  %v672 = vunpack.c.l.b16 %v101
  %v673 = vunpack.c.h.b16 %v101
  %v674 = vunpack.c.l.b16 %v102
  %v675 = vunpack.c.h.b16 %v102
  %v676 = vunpack.c.l.b16 %v103
  %v677 = vunpack.c.h.b16 %v103
  %v678 = vunpack.c.l.b16 %v104
  %v679 = vunpack.c.h.b16 %v104
  %v680 = vunpack.c.l.b16 %v105
  %v681 = vunpack.c.h.b16 %v105
  %v682 = vunpack.c.l.b16 %v106
  %v683 = vunpack.c.h.b16 %v106
  %v684 = vunpack.c.l.b16 %v107
  %v685 = vunpack.c.h.b16 %v107
  %v686 = vunpack.c.l.b16 %v108
  %v687 = vunpack.c.h.b16 %v108
  %v688 = vunpack.c.l.b16 %v109
  %v689 = vunpack.c.h.b16 %v109
  %v690 = vunpack.c.l.b16 %v110
  %v691 = vunpack.c.h.b16 %v110
  %v692 = vunpack.c.l.b16 %v111
  %v693 = vunpack.c.h.b16 %v111
  %v694 = vunpack.c.l.b16 %v112
  %v695 = vunpack.c.h.b16 %v112
  %v696 = vunpack.c.l.b16 %v113
  %v697 = vunpack.c.h.b16 %v113
  %v698 = vunpack.c.l.b16 %v114
  %v699 = vunpack.c.h.b16 %v114
  %v700 = vunpack.c.l.b16 %v115
  %v701 = vunpack.c.h.b16 %v115
  %v702 = vunpack.c.l.b16 %v116
  %v703 = vunpack.c.h.b16 %v116
  %v704 = vunpack.c.l.b16 %v117
  %v705 = vunpack.c.h.b16 %v117
  %v706 = vunpack.c.l.b16 %v118
  %v707 = vunpack.c.h.b16 %v118
  %v708 = vunpack.c.l.b16 %v119
  %v709 = vunpack.c.h.b16 %v119
  %v710 = vunpack.c.l.b16 %v120
  %v711 = vunpack.c.h.b16 %v120
  %v712 = vunpack.c.l.b16 %v121
  %v713 = vunpack.c.h.b16 %v121
  %v714 = vunpack.c.l.b16 %v122
  %v715 = vunpack.c.h.b16 %v122
  %v716 = vunpack.c.l.b16 %v123
  %v717 = vunpack.c.h.b16 %v123
  %v718 = vunpack.c.l.b16 %v124
  %v719 = vunpack.c.h.b16 %v124
  %v720 = vunpack.c.l.b16 %v125
  %v721 = vunpack.c.h.b16 %v125
  %v722 = vunpack.c.l.b16 %v126
  %v723 = vunpack.c.h.b16 %v126
  %v724 = vunpack.c.l.b16 %v127
  %v725 = vunpack.c.h.b16 %v127
  %v726 = vunpack.c.l.b16 %v128
  %v727 = vunpack.c.h.b16 %v128
  %v728 = vunpack.c.l.b16 %v129
  %v729 = vunpack.c.h.b16 %v129
  %v730 = vunpack.c.l.b16 %v130
  %v731 = vunpack.c.h.b16 %v130
  %v732 = vunpack.c.l.b16 %v131
  %v733 = vunpack.c.h.b16 %v131
  %v734 = vunpack.c.l.b16 %v132
  %v735 = vunpack.c.h.b16 %v132
  %v736 = vunpack.c.l.b16 %v133
  %v737 = vunpack.c.h.b16 %v133
  %v738 = vunpack.c.l.b16 %v134
  %v739 = vunpack.c.h.b16 %v134
  %v740 = vunpack.c.l.b16 %v135
  %v741 = vunpack.c.h.b16 %v135
  %v742 = vunpack.c.l.b16 %v136
  %v743 = vunpack.c.h.b16 %v136
  %v744 = vunpack.c.l.b16 %v137
  %v745 = vunpack.c.h.b16 %v137
  %v746 = vunpack.c.l.b16 %v138
  %v747 = vunpack.c.h.b16 %v138
  %v748 = vunpack.c.l.b16 %v139
  %v749 = vunpack.c.h.b16 %v139
  %v750 = vunpack.c.l.b16 %v140
  %v751 = vunpack.c.h.b16 %v140
  %v752 = vunpack.c.l.b16 %v141
  %v753 = vunpack.c.h.b16 %v141
  %v754 = vunpack.c.l.b16 %v142
  %v755 = vunpack.c.h.b16 %v142
  %v756 = vunpack.c.l.b16 %v143
  %v757 = vunpack.c.h.b16 %v143
  %v758 = vunpack.c.l.b16 %v144
  %v759 = vunpack.c.h.b16 %v144
  %v760 = vunpack.c.l.b16 %v145
  %v761 = vunpack.c.h.b16 %v145
  %v762 = vunpack.c.l.b16 %v146
  %v763 = vunpack.c.h.b16 %v146
  %v764 = vunpack.c.l.b16 %v147
  %v765 = vunpack.c.h.b16 %v147
  %v766 = vunpack.c.l.b16 %v148
  %v767 = vunpack.c.h.b16 %v148
  %v768 = vunpack.c.l.b16 %v149
  %v769 = vunpack.c.h.b16 %v149
  %v770 = vunpack.c.l.b16 %v150
  %v771 = vunpack.c.h.b16 %v150
  %v772 = vunpack.c.l.b16 %v151
  %v773 = vunpack.c.h.b16 %v151
  %v774 = vunpack.c.l.b16 %v152
  %v775 = vunpack.c.h.b16 %v152
  %v776 = vunpack.c.l.b16 %v153
  %v777 = vunpack.c.h.b16 %v153
  %v778 = vunpack.c.l.b16 %v154
  %v779 = vunpack.c.h.b16 %v154
  %v780 = vunpack.c.l.b16 %v155
  %v781 = vunpack.c.h.b16 %v155
  %v782 = vunpack.c.l.b16 %v156
  %v783 = vunpack.c.h.b16 %v156
  %v784 = vunpack.c.l.b16 %v157
  %v785 = vunpack.c.h.b16 %v157
  %v786 = vunpack.c.l.b16 %v158
  %v787 = vunpack.c.h.b16 %v158
  %v788 = vunpack.c.l.b16 %v159
  %v789 = vunpack.c.h.b16 %v159
  %v790 = vunpack.c.l.b16 %v160
  %v791 = vunpack.c.h.b16 %v160
  %v792 = vunpack.c.l.b16 %v161
  %v793 = vunpack.c.h.b16 %v161
  %v794 = vunpack.c.l.b16 %v162
  %v795 = vunpack.c.h.b16 %v162
  %v796 = vunpack.c.l.b16 %v163
  %v797 = vunpack.c.h.b16 %v163
  %v798 = vunpack.c.l.b16 %v164
  %v799 = vunpack.c.h.b16 %v164
  %v800 = vunpack.c.l.b16 %v165
  %v801 = vunpack.c.h.b16 %v165
  %v802 = vunpack.c.l.b16 %v166
  %v803 = vunpack.c.h.b16 %v166
  %v804 = vunpack.c.l.b16 %v167
  %v805 = vunpack.c.h.b16 %v167
  %v806 = vunpack.c.l.b16 %v168
  %v807 = vunpack.c.h.b16 %v168
  %v808 = vunpack.c.l.b16 %v169
  %v809 = vunpack.c.h.b16 %v169
  %v810 = vunpack.c.l.b16 %v170
  %v811 = vunpack.c.h.b16 %v170
  %v812 = vunpack.c.l.b16 %v171
  %v813 = vunpack.c.h.b16 %v171
  %v814 = vunpack.c.l.b16 %v172
  %v815 = vunpack.c.h.b16 %v172
  %v816 = vunpack.c.l.b16 %v173
  %v817 = vunpack.c.h.b16 %v173
  %v818 = vunpack.c.l.b16 %v174
  %v819 = vunpack.c.h.b16 %v174
  %v820 = vunpack.c.l.b16 %v175
  %v821 = vunpack.c.h.b16 %v175
  %v822 = vunpack.c.l.b16 %v176
  %v823 = vunpack.c.h.b16 %v176
  %v824 = vunpack.c.l.b16 %v177
  %v825 = vunpack.c.h.b16 %v177
  %v826 = vunpack.c.l.b16 %v178
  %v827 = vunpack.c.h.b16 %v178
  %v828 = vunpack.c.l.b16 %v179
  %v829 = vunpack.c.h.b16 %v179
  %v830 = vunpack.c.l.b16 %v180
  %v831 = vunpack.c.h.b16 %v180
  %v832 = vunpack.c.l.b16 %v181
  %v833 = vunpack.c.h.b16 %v181
  %v834 = vunpack.c.l.b16 %v182
  %v835 = vunpack.c.h.b16 %v182
  %v836 = vunpack.c.l.b16 %v183
  %v837 = vunpack.c.h.b16 %v183
  %v838 = vunpack.c.l.b16 %v184
  %v839 = vunpack.c.h.b16 %v184
  %v840 = vunpack.c.l.b16 %v185
  %v841 = vunpack.c.h.b16 %v185
  %v842 = vunpack.c.l.b16 %v186
  %v843 = vunpack.c.h.b16 %v186
  %v844 = vunpack.c.l.b16 %v187
  %v845 = vunpack.c.h.b16 %v187
  %v846 = vunpack.c.l.b16 %v188
  %v847 = vunpack.c.h.b16 %v188
  %v848 = vunpack.c.l.b16 %v189
  %v849 = vunpack.c.h.b16 %v189
  %v850 = vunpack.c.l.b16 %v190
  %v851 = vunpack.c.h.b16 %v190
  %v852 = vunpack.c.l.b16 %v191
  %v853 = vunpack.c.h.b16 %v191
  %v854 = vunpack.c.l.b16 %v192
  %v855 = vunpack.c.h.b16 %v192
  %v856 = vunpack.c.l.b16 %v193
  %v857 = vunpack.c.h.b16 %v193
  %v858 = vunpack.c.l.b16 %v194
  %v859 = vunpack.c.h.b16 %v194
  %v860 = vunpack.c.l.b16 %v195
  %v861 = vunpack.c.h.b16 %v195
  %v862 = vunpack.c.l.b16 %v196
  %v863 = vunpack.c.h.b16 %v196
  %v864 = vunpack.c.l.b16 %v197
  %v865 = vunpack.c.h.b16 %v197
  %v866 = vunpack.c.l.b16 %v198
  %v867 = vunpack.c.h.b16 %v198
  %v868 = vunpack.c.l.b16 %v199
  %v869 = vunpack.c.h.b16 %v199
  %v870 = vunpack.c.l.b16 %v200
  %v871 = vunpack.c.h.b16 %v200
  %v872 = vunpack.c.l.b16 %v201
  %v873 = vunpack.c.h.b16 %v201
  %v874 = vunpack.c.l.b16 %v202
  %v875 = vunpack.c.h.b16 %v202
  %v876 = vunpack.c.l.b16 %v203
  %v877 = vunpack.c.h.b16 %v203
  %v878 = vunpack.c.l.b16 %v204
  %v879 = vunpack.c.h.b16 %v204
  %v880 = vunpack.c.l.b16 %v205
  %v881 = vunpack.c.h.b16 %v205
  %v882 = vunpack.c.l.b16 %v206
  %v883 = vunpack.c.h.b16 %v206
  %v884 = vunpack.c.l.b16 %v207
  %v885 = vunpack.c.h.b16 %v207
  %v886 = vunpack.c.l.b16 %v208
  %v887 = vunpack.c.h.b16 %v208
  %v888 = vunpack.c.l.b16 %v209
  %v889 = vunpack.c.h.b16 %v209
  %v890 = vunpack.c.l.b16 %v210
  %v891 = vunpack.c.h.b16 %v210
  %v892 = vunpack.c.l.b16 %v211
  %v893 = vunpack.c.h.b16 %v211
  %v894 = vunpack.c.l.b16 %v212
  %v895 = vunpack.c.h.b16 %v212
  %v896 = vunpack.c.l.b16 %v213
  %v897 = vunpack.c.h.b16 %v213
  %v898 = vunpack.c.l.b16 %v214
  %v899 = vunpack.c.h.b16 %v214
  %v900 = vunpack.c.l.b16 %v215
  %v901 = vunpack.c.h.b16 %v215
  %v902 = vunpack.c.l.b16 %v216
  %v903 = vunpack.c.h.b16 %v216
  %v904 = vunpack.c.l.b16 %v217
  %v905 = vunpack.c.h.b16 %v217
  %v906 = vunpack.c.l.b16 %v218
  %v907 = vunpack.c.h.b16 %v218
  %v908 = vunpack.c.l.b16 %v219
  %v909 = vunpack.c.h.b16 %v219
  %v910 = vunpack.c.l.b16 %v220
  %v911 = vunpack.c.h.b16 %v220
  %v912 = vunpack.c.l.b16 %v221
  %v913 = vunpack.c.h.b16 %v221
  %v914 = vunpack.c.l.b16 %v222
  %v915 = vunpack.c.h.b16 %v222
  %v916 = vunpack.c.l.b16 %v223
  %v917 = vunpack.c.h.b16 %v223
  %v918 = vunpack.c.l.b16 %v224
  %v919 = vunpack.c.h.b16 %v224
  %v920 = vunpack.c.l.b16 %v225
  %v921 = vunpack.c.h.b16 %v225
  %v922 = vunpack.c.l.b16 %v226
  %v923 = vunpack.c.h.b16 %v226
  %v924 = vunpack.c.l.b16 %v227
  %v925 = vunpack.c.h.b16 %v227
  %v926 = vunpack.c.l.b16 %v228
  %v927 = vunpack.c.h.b16 %v228
  %v928 = vunpack.c.l.b16 %v229
  %v929 = vunpack.c.h.b16 %v229
  %v930 = vunpack.c.l.b16 %v230
  %v931 = vunpack.c.h.b16 %v230
  %v932 = vunpack.c.l.b16 %v231
  %v933 = vunpack.c.h.b16 %v231
  %v934 = vunpack.c.l.b16 %v232
  %v935 = vunpack.c.h.b16 %v232
  %v936 = vunpack.c.l.b16 %v233
  %v937 = vunpack.c.h.b16 %v233
  %v938 = vunpack.c.l.b16 %v234
  %v939 = vunpack.c.h.b16 %v234
  %v940 = vunpack.c.l.b16 %v235
  %v941 = vunpack.c.h.b16 %v235
  %v942 = vunpack.c.l.b16 %v236
  %v943 = vunpack.c.h.b16 %v236
  %v944 = vunpack.c.l.b16 %v237
  %v945 = vunpack.c.h.b16 %v237
  %v946 = vpack.c.b16 %v516, %v514
  %v947 = vpack.c.b16 %v517, %v515
  %v948 = vpack.c.b16 %v520, %v518
  %v949 = vpack.c.b16 %v521, %v519
  %v950 = vpack.c.b16 %v524, %v522
  %v951 = vpack.c.b16 %v525, %v523
  %v952 = vpack.c.b16 %v528, %v526
  %v953 = vpack.c.b16 %v529, %v527
  %v954 = vpack.c.b16 %v532, %v530
  %v955 = vpack.c.b16 %v533, %v531
  %v956 = vpack.c.b16 %v536, %v534
  %v957 = vpack.c.b16 %v537, %v535
  %v958 = vpack.c.b16 %v540, %v538
  %v959 = vpack.c.b16 %v541, %v539
  %v960 = vpack.c.b16 %v544, %v542
  %v961 = vpack.c.b16 %v545, %v543
  %v962 = vpack.c.b16 %v548, %v546
  %v963 = vpack.c.b16 %v549, %v547
  %v964 = vpack.c.b16 %v552, %v550
  %v965 = vpack.c.b16 %v553, %v551
  %v966 = vpack.c.b16 %v556, %v554
  %v967 = vpack.c.b16 %v557, %v555
  %v968 = vpack.c.b16 %v560, %v558
  %v969 = vpack.c.b16 %v561, %v559
  %v970 = vpack.c.b16 %v564, %v562
  %v971 = vpack.c.b16 %v565, %v563
  %v972 = vpack.c.b16 %v568, %v566
  %v973 = vpack.c.b16 %v569, %v567
  %v974 = vpack.c.b16 %v572, %v570
  %v975 = vpack.c.b16 %v573, %v571
  %v976 = vpack.c.b16 %v576, %v574
  %v977 = vpack.c.b16 %v577, %v575
  %v978 = vpack.c.b16 %v580, %v578
  %v979 = vpack.c.b16 %v581, %v579
  %v980 = vpack.c.b16 %v584, %v582
  %v981 = vpack.c.b16 %v585, %v583
  %v982 = vpack.c.b16 %v588, %v586
  %v983 = vpack.c.b16 %v589, %v587
  %v984 = vpack.c.b16 %v592, %v590
  %v985 = vpack.c.b16 %v593, %v591
  %v986 = vpack.c.b16 %v596, %v594
  %v987 = vpack.c.b16 %v597, %v595
  %v988 = vpack.c.b16 %v600, %v598
  %v989 = vpack.c.b16 %v601, %v599
  %v990 = vpack.c.b16 %v604, %v602
  %v991 = vpack.c.b16 %v605, %v603
  %v992 = vpack.c.b16 %v608, %v606
  %v993 = vpack.c.b16 %v609, %v607
  %v994 = vpack.c.b16 %v612, %v610
  %v995 = vpack.c.b16 %v613, %v611
  %v996 = vpack.c.b16 %v616, %v614
  %v997 = vpack.c.b16 %v617, %v615
  %v998 = vpack.c.b16 %v620, %v618
  %v999 = vpack.c.b16 %v621, %v619
  %v1000 = vpack.c.b16 %v624, %v622
  %v1001 = vpack.c.b16 %v625, %v623
  %v1002 = vpack.c.b16 %v628, %v626
  %v1003 = vpack.c.b16 %v629, %v627
  %v1004 = vpack.c.b16 %v632, %v630
  %v1005 = vpack.c.b16 %v633, %v631
  %v1006 = vpack.c.b16 %v636, %v634
  %v1007 = vpack.c.b16 %v637, %v635
  %v1008 = vpack.c.b16 %v640, %v638
  %v1009 = vpack.c.b16 %v641, %v639
  %v1010 = vpack.c.b16 %v644, %v642
  %v1011 = vpack.c.b16 %v645, %v643
  %v1012 = vpack.c.b16 %v648, %v646
  %v1013 = vpack.c.b16 %v649, %v647
  %v1014 = vpack.c.b16 %v652, %v650
  %v1015 = vpack.c.b16 %v653, %v651
  %v1016 = vpack.c.b16 %v656, %v654
  %v1017 = vpack.c.b16 %v657, %v655
  %v1018 = vpack.c.b16 %v660, %v658
  %v1019 = vpack.c.b16 %v661, %v659
  %v1020 = vpack.c.b16 %v664, %v662
  %v1021 = vpack.c.b16 %v665, %v663
  %v1022 = vpack.c.b16 %v668, %v666
  %v1023 = vpack.c.b16 %v669, %v667
  %v1024 = vpack.c.b16 %v672, %v670
  %v1025 = vpack.c.b16 %v673, %v671
  %v1026 = vpack.c.b16 %v676, %v674
  %v1027 = vpack.c.b16 %v677, %v675
  %v1028 = vpack.c.b16 %v680, %v678
  %v1029 = vpack.c.b16 %v681, %v679
  %v1030 = vpack.c.b16 %v684, %v682
  %v1031 = vpack.c.b16 %v685, %v683
  %v1032 = vpack.c.b16 %v688, %v686
  %v1033 = vpack.c.b16 %v689, %v687
  %v1034 = vpack.c.b16 %v692, %v690
  %v1035 = vpack.c.b16 %v693, %v691
  %v1036 = vpack.c.b16 %v696, %v694
  %v1037 = vpack.c.b16 %v697, %v695
  %v1038 = vpack.c.b16 %v700, %v698
  %v1039 = vpack.c.b16 %v701, %v699
  %v1040 = vpack.c.b16 %v704, %v702
  %v1041 = vpack.c.b16 %v705, %v703
  %v1042 = vpack.c.b16 %v708, %v706
  %v1043 = vpack.c.b16 %v709, %v707
  %v1044 = vpack.c.b16 %v712, %v710
  %v1045 = vpack.c.b16 %v713, %v711
  %v1046 = vpack.c.b16 %v716, %v714
  %v1047 = vpack.c.b16 %v717, %v715
  %v1048 = vpack.c.b16 %v720, %v718
  %v1049 = vpack.c.b16 %v721, %v719
  %v1050 = vpack.c.b16 %v724, %v722
  %v1051 = vpack.c.b16 %v725, %v723
  %v1052 = vpack.c.b16 %v728, %v726
  %v1053 = vpack.c.b16 %v729, %v727
  %v1054 = vpack.c.b16 %v732, %v730
  %v1055 = vpack.c.b16 %v733, %v731
  %v1056 = vpack.c.b16 %v736, %v734
  %v1057 = vpack.c.b16 %v737, %v735
  %v1058 = vpack.c.b16 %v740, %v738
  %v1059 = vpack.c.b16 %v741, %v739
  %v1060 = vpack.c.b16 %v744, %v742
  %v1061 = vpack.c.b16 %v745, %v743
  %v1062 = vpack.c.b16 %v748, %v746
  %v1063 = vpack.c.b16 %v749, %v747
  %v1064 = vpack.c.b16 %v752, %v750
  %v1065 = vpack.c.b16 %v753, %v751
  %v1066 = vpack.c.b16 %v756, %v754
  %v1067 = vpack.c.b16 %v757, %v755
  %v1068 = vpack.c.b16 %v760, %v758
  %v1069 = vpack.c.b16 %v761, %v759
  %v1070 = vpack.c.b16 %v764, %v762
  %v1071 = vpack.c.b16 %v765, %v763
  %v1072 = vpack.c.b16 %v768, %v766
  %v1073 = vpack.c.b16 %v769, %v767
  %v1074 = vpack.c.b16 %v772, %v770
  %v1075 = vpack.c.b16 %v773, %v771
  %v1076 = vpack.c.b16 %v776, %v774
  %v1077 = vpack.c.b16 %v777, %v775
  %v1078 = vpack.c.b16 %v780, %v778
  %v1079 = vpack.c.b16 %v781, %v779
  %v1080 = vpack.c.b16 %v784, %v782
  %v1081 = vpack.c.b16 %v785, %v783
  %v1082 = vpack.c.b16 %v788, %v786
  %v1083 = vpack.c.b16 %v789, %v787
  %v1084 = vpack.c.b16 %v792, %v790
  %v1085 = vpack.c.b16 %v793, %v791
  %v1086 = vpack.c.b16 %v796, %v794
  %v1087 = vpack.c.b16 %v797, %v795
  %v1088 = vpack.c.b16 %v800, %v798
  %v1089 = vpack.c.b16 %v801, %v799
  %v1090 = vpack.c.b16 %v804, %v802
  %v1091 = vpack.c.b16 %v805, %v803
  %v1092 = vpack.c.b16 %v808, %v806
  %v1093 = vpack.c.b16 %v809, %v807
  %v1094 = vpack.c.b16 %v812, %v810
  %v1095 = vpack.c.b16 %v813, %v811
  %v1096 = vpack.c.b16 %v816, %v814
  %v1097 = vpack.c.b16 %v817, %v815
  %v1098 = vpack.c.b16 %v820, %v818
  %v1099 = vpack.c.b16 %v821, %v819
  %v1100 = vpack.c.b16 %v824, %v822
  %v1101 = vpack.c.b16 %v825, %v823
  %v1102 = vpack.c.b16 %v828, %v826
  %v1103 = vpack.c.b16 %v829, %v827
  %v1104 = vpack.c.b16 %v832, %v830
  %v1105 = vpack.c.b16 %v833, %v831
  %v1106 = vpack.c.b16 %v836, %v834
  %v1107 = vpack.c.b16 %v837, %v835
  %v1108 = vpack.c.b16 %v840, %v838
  %v1109 = vpack.c.b16 %v841, %v839
  %v1110 = vpack.c.b16 %v844, %v842
  %v1111 = vpack.c.b16 %v845, %v843
  %v1112 = vpack.c.b16 %v848, %v846
  %v1113 = vpack.c.b16 %v849, %v847
  %v1114 = vpack.c.b16 %v852, %v850
  %v1115 = vpack.c.b16 %v853, %v851
  %v1116 = vpack.c.b16 %v856, %v854
  %v1117 = vpack.c.b16 %v857, %v855
  %v1118 = vpack.c.b16 %v860, %v858
  %v1119 = vpack.c.b16 %v861, %v859
  %v1120 = vpack.c.b16 %v864, %v862
  %v1121 = vpack.c.b16 %v865, %v863
  %v1122 = vpack.c.b16 %v868, %v866
  %v1123 = vpack.c.b16 %v869, %v867
  %v1124 = vpack.c.b16 %v872, %v870
  %v1125 = vpack.c.b16 %v873, %v871
  %v1126 = vpack.c.b16 %v876, %v874
  %v1127 = vpack.c.b16 %v877, %v875
  %v1128 = vpack.c.b16 %v880, %v878
  %v1129 = vpack.c.b16 %v881, %v879
  %v1130 = vpack.c.b16 %v884, %v882
  %v1131 = vpack.c.b16 %v885, %v883
  %v1132 = vpack.c.b16 %v888, %v886
  %v1133 = vpack.c.b16 %v889, %v887
  %v1134 = vpack.c.b16 %v892, %v890
  %v1135 = vpack.c.b16 %v893, %v891
  %v1136 = vpack.c.b16 %v896, %v894
  %v1137 = vpack.c.b16 %v897, %v895
  %v1138 = vpack.c.b16 %v900, %v898
  %v1139 = vpack.c.b16 %v901, %v899
  %v1140 = vpack.c.b16 %v904, %v902
  %v1141 = vpack.c.b16 %v905, %v903
  %v1142 = vpack.c.b16 %v908, %v906
  %v1143 = vpack.c.b16 %v909, %v907
  %v1144 = vpack.c.b16 %v912, %v910
  %v1145 = vpack.c.b16 %v913, %v911
  %v1146 = vpack.c.b16 %v916, %v914
  %v1147 = vpack.c.b16 %v917, %v915
  %v1148 = vpack.c.b16 %v920, %v918
  %v1149 = vpack.c.b16 %v921, %v919
  %v1150 = vpack.c.b16 %v924, %v922
  %v1151 = vpack.c.b16 %v925, %v923
  %v1152 = vpack.c.b16 %v928, %v926
  %v1153 = vpack.c.b16 %v929, %v927
  %v1154 = vpack.c.b16 %v932, %v930
  %v1155 = vpack.c.b16 %v933, %v931
  %v1156 = vpack.c.b16 %v936, %v934
  %v1157 = vpack.c.b16 %v937, %v935
  %v1158 = vpack.c.b16 %v940, %v938
  %v1159 = vpack.c.b16 %v941, %v939
  %v1160 = vpack.c.b16 %v944, %v942
  %v1161 = vpack.c.b16 %v945, %v943
  %vm1378 = vcmask 523264
  %v1380 = vsel %vm1378, %v284, 0
  %1382 = vmatprep.subr.bf16.mxu0 %v961
  %1383 = vmatpush1.bf16.msra.mxu0 %v960
  %1384 = vmatprep.subr.bf16.mxu0 %v959
  %1385 = vmatpush1.bf16.msra.mxu0 %v958
  %1386 = vmatprep.subr.bf16.mxu0 %v957
  %1387 = vmatpush1.bf16.msra.mxu0 %v956
  %1388 = vmatprep.subr.bf16.mxu0 %v955
  %1389 = vmatpush1.bf16.msra.mxu0 %v954
  %1390 = vmatprep.subr.bf16.mxu0 %v953
  %1391 = vmatpush1.bf16.msra.mxu0 %v952
  %1392 = vmatprep.subr.bf16.mxu0 %v951
  %1393 = vmatpush1.bf16.msra.mxu0 %v950
  %1394 = vmatprep.subr.bf16.mxu0 %v949
  %1395 = vmatpush1.bf16.msra.mxu0 %v948
  %1396 = vmatprep.subr.bf16.mxu0 %v947
  %1397 = vmatpush1.bf16.msra.mxu0 %v946
  %1398 = vmatprep.subr.bf16.mxu0 %v977
  %1399 = vmatpush2.bf16.msra.mxu0 %v976
  %1400 = vmatprep.subr.bf16.mxu0 %v975
  %1401 = vmatpush2.bf16.msra.mxu0 %v974
  %1402 = vmatprep.subr.bf16.mxu0 %v973
  %1403 = vmatpush2.bf16.msra.mxu0 %v972
  %1404 = vmatprep.subr.bf16.mxu0 %v971
  %1405 = vmatpush2.bf16.msra.mxu0 %v970
  %1406 = vmatprep.subr.bf16.mxu0 %v969
  %1407 = vmatpush2.bf16.msra.mxu0 %v968
  %1408 = vmatprep.subr.bf16.mxu0 %v967
  %1409 = vmatpush2.bf16.msra.mxu0 %v966
  %1410 = vmatprep.subr.bf16.mxu0 %v965
  %1411 = vmatpush2.bf16.msra.mxu0 %v964
  %1412 = vmatprep.subr.bf16.mxu0 %v963
  %1413 = vmatpush2.bf16.msra.mxu0 %v962
  %1414 = vmatprep.mubr.bf16.mxu0 %v272
  %1415 = vmatmul.mubr.bf16.gmra.mxu0 %v271
  %v1416 = vpop.f32.mrf.mxu0
  %v1417 = vadd.f32 %v243, %v1416
  %v1418 = vpop.f32.mrf.mxu0
  %v1419 = vadd.f32 %v247, %v1418
  %v1420 = vpop.f32.mrf.mxu0
  %v1421 = vpop.f32.mrf.mxu0
  %1422 = vdwg.mxu0
  %1423 = vmatprep.subr.bf16.mxu0 %v993
  %1424 = vmatpush1.bf16.msra.mxu0 %v992
  %1425 = vmatprep.subr.bf16.mxu0 %v991
  %1426 = vmatpush1.bf16.msra.mxu0 %v990
  %1427 = vmatprep.subr.bf16.mxu0 %v989
  %1428 = vmatpush1.bf16.msra.mxu0 %v988
  %1429 = vmatprep.subr.bf16.mxu0 %v987
  %1430 = vmatpush1.bf16.msra.mxu0 %v986
  %1431 = vmatprep.subr.bf16.mxu0 %v985
  %1432 = vmatpush1.bf16.msra.mxu0 %v984
  %1433 = vmatprep.subr.bf16.mxu0 %v983
  %1434 = vmatpush1.bf16.msra.mxu0 %v982
  %1435 = vmatprep.subr.bf16.mxu0 %v981
  %1436 = vmatpush1.bf16.msra.mxu0 %v980
  %1437 = vmatprep.subr.bf16.mxu0 %v979
  %1438 = vmatpush1.bf16.msra.mxu0 %v978
  %1439 = vmatprep.subr.bf16.mxu0 %v1009
  %1440 = vmatpush2.bf16.msra.mxu0 %v1008
  %1441 = vmatprep.subr.bf16.mxu0 %v1007
  %1442 = vmatpush2.bf16.msra.mxu0 %v1006
  %1443 = vmatprep.subr.bf16.mxu0 %v1005
  %1444 = vmatpush2.bf16.msra.mxu0 %v1004
  %1445 = vmatprep.subr.bf16.mxu0 %v1003
  %1446 = vmatpush2.bf16.msra.mxu0 %v1002
  %1447 = vmatprep.subr.bf16.mxu0 %v1001
  %1448 = vmatpush2.bf16.msra.mxu0 %v1000
  %1449 = vmatprep.subr.bf16.mxu0 %v999
  %1450 = vmatpush2.bf16.msra.mxu0 %v998
  %1451 = vmatprep.subr.bf16.mxu0 %v997
  %1452 = vmatpush2.bf16.msra.mxu0 %v996
  %1453 = vmatprep.subr.bf16.mxu0 %v995
  %1454 = vmatpush2.bf16.msra.mxu0 %v994
  %1455 = vmatprep.mubr.bf16.mxu0 %v274
  %1456 = vmatmul.mubr.bf16.gmra.mxu0 %v273
  %v1457 = vpop.f32.mrf.mxu0
  %v1458 = vadd.f32 %v1417, %v1457
  %v1459 = vpop.f32.mrf.mxu0
  %v1460 = vadd.f32 %v1419, %v1459
  %v1461 = vpop.f32.mrf.mxu0
  %v1462 = vpop.f32.mrf.mxu0
  %1463 = vdwg.mxu0
  %1464 = vmatprep.subr.bf16.mxu0 %v1025
  %1465 = vmatpush1.bf16.msra.mxu0 %v1024
  %1466 = vmatprep.subr.bf16.mxu0 %v1023
  %1467 = vmatpush1.bf16.msra.mxu0 %v1022
  %1468 = vmatprep.subr.bf16.mxu0 %v1021
  %1469 = vmatpush1.bf16.msra.mxu0 %v1020
  %1470 = vmatprep.subr.bf16.mxu0 %v1019
  %1471 = vmatpush1.bf16.msra.mxu0 %v1018
  %1472 = vmatprep.subr.bf16.mxu0 %v1017
  %1473 = vmatpush1.bf16.msra.mxu0 %v1016
  %1474 = vmatprep.subr.bf16.mxu0 %v1015
  %1475 = vmatpush1.bf16.msra.mxu0 %v1014
  %1476 = vmatprep.subr.bf16.mxu0 %v1013
  %1477 = vmatpush1.bf16.msra.mxu0 %v1012
  %1478 = vmatprep.subr.bf16.mxu0 %v1011
  %1479 = vmatpush1.bf16.msra.mxu0 %v1010
  %1480 = vmatprep.subr.bf16.mxu0 %v1041
  %1481 = vmatpush2.bf16.msra.mxu0 %v1040
  %1482 = vmatprep.subr.bf16.mxu0 %v1039
  %1483 = vmatpush2.bf16.msra.mxu0 %v1038
  %1484 = vmatprep.subr.bf16.mxu0 %v1037
  %1485 = vmatpush2.bf16.msra.mxu0 %v1036
  %1486 = vmatprep.subr.bf16.mxu0 %v1035
  %1487 = vmatpush2.bf16.msra.mxu0 %v1034
  %1488 = vmatprep.subr.bf16.mxu0 %v1033
  %1489 = vmatpush2.bf16.msra.mxu0 %v1032
  %1490 = vmatprep.subr.bf16.mxu0 %v1031
  %1491 = vmatpush2.bf16.msra.mxu0 %v1030
  %1492 = vmatprep.subr.bf16.mxu0 %v1029
  %1493 = vmatpush2.bf16.msra.mxu0 %v1028
  %1494 = vmatprep.subr.bf16.mxu0 %v1027
  %1495 = vmatpush2.bf16.msra.mxu0 %v1026
  %1496 = vmatprep.mubr.bf16.mxu0 %v276
  %1497 = vmatmul.mubr.bf16.gmra.mxu0 %v275
  %v1498 = vpop.f32.mrf.mxu0
  %v1499 = vadd.f32 %v1458, %v1498
  %v1500 = vpop.f32.mrf.mxu0
  %v1501 = vadd.f32 %v1460, %v1500
  %v1502 = vpop.f32.mrf.mxu0
  %v1503 = vpop.f32.mrf.mxu0
  %1504 = vdwg.mxu0
  %1505 = vmatprep.subr.bf16.mxu0 %v1057
  %1506 = vmatpush1.bf16.msra.mxu0 %v1056
  %1507 = vmatprep.subr.bf16.mxu0 %v1055
  %1508 = vmatpush1.bf16.msra.mxu0 %v1054
  %1509 = vmatprep.subr.bf16.mxu0 %v1053
  %1510 = vmatpush1.bf16.msra.mxu0 %v1052
  %1511 = vmatprep.subr.bf16.mxu0 %v1051
  %1512 = vmatpush1.bf16.msra.mxu0 %v1050
  %1513 = vmatprep.subr.bf16.mxu0 %v1049
  %1514 = vmatpush1.bf16.msra.mxu0 %v1048
  %1515 = vmatprep.subr.bf16.mxu0 %v1047
  %1516 = vmatpush1.bf16.msra.mxu0 %v1046
  %1517 = vmatprep.subr.bf16.mxu0 %v1045
  %1518 = vmatpush1.bf16.msra.mxu0 %v1044
  %1519 = vmatprep.subr.bf16.mxu0 %v1043
  %1520 = vmatpush1.bf16.msra.mxu0 %v1042
  %1521 = vmatprep.subr.bf16.mxu0 %v1073
  %1522 = vmatpush2.bf16.msra.mxu0 %v1072
  %1523 = vmatprep.subr.bf16.mxu0 %v1071
  %1524 = vmatpush2.bf16.msra.mxu0 %v1070
  %1525 = vmatprep.subr.bf16.mxu0 %v1069
  %1526 = vmatpush2.bf16.msra.mxu0 %v1068
  %1527 = vmatprep.subr.bf16.mxu0 %v1067
  %1528 = vmatpush2.bf16.msra.mxu0 %v1066
  %1529 = vmatprep.subr.bf16.mxu0 %v1065
  %1530 = vmatpush2.bf16.msra.mxu0 %v1064
  %1531 = vmatprep.subr.bf16.mxu0 %v1063
  %1532 = vmatpush2.bf16.msra.mxu0 %v1062
  %1533 = vmatprep.subr.bf16.mxu0 %v1061
  %1534 = vmatpush2.bf16.msra.mxu0 %v1060
  %1535 = vmatprep.subr.bf16.mxu0 %v1059
  %1536 = vmatpush2.bf16.msra.mxu0 %v1058
  %1537 = vmatprep.mubr.bf16.mxu0 %v278
  %1538 = vmatmul.mubr.bf16.gmra.mxu0 %v277
  %v1539 = vpop.f32.mrf.mxu0
  %v1540 = vadd.f32 %v1499, %v1539
  %v1541 = vpop.f32.mrf.mxu0
  %v1542 = vadd.f32 %v1501, %v1541
  %v1543 = vpop.f32.mrf.mxu0
  %v1544 = vpop.f32.mrf.mxu0
  %1545 = vdwg.mxu0
  %1546 = vmatprep.subr.bf16.mxu0 %v1089
  %1547 = vmatpush1.bf16.msra.mxu0 %v1088
  %1548 = vmatprep.subr.bf16.mxu0 %v1087
  %1549 = vmatpush1.bf16.msra.mxu0 %v1086
  %1550 = vmatprep.subr.bf16.mxu0 %v1085
  %1551 = vmatpush1.bf16.msra.mxu0 %v1084
  %1552 = vmatprep.subr.bf16.mxu0 %v1083
  %1553 = vmatpush1.bf16.msra.mxu0 %v1082
  %1554 = vmatprep.subr.bf16.mxu0 %v1081
  %1555 = vmatpush1.bf16.msra.mxu0 %v1080
  %1556 = vmatprep.subr.bf16.mxu0 %v1079
  %1557 = vmatpush1.bf16.msra.mxu0 %v1078
  %1558 = vmatprep.subr.bf16.mxu0 %v1077
  %1559 = vmatpush1.bf16.msra.mxu0 %v1076
  %1560 = vmatprep.subr.bf16.mxu0 %v1075
  %1561 = vmatpush1.bf16.msra.mxu0 %v1074
  %1562 = vmatprep.subr.bf16.mxu0 %v1105
  %1563 = vmatpush2.bf16.msra.mxu0 %v1104
  %1564 = vmatprep.subr.bf16.mxu0 %v1103
  %1565 = vmatpush2.bf16.msra.mxu0 %v1102
  %1566 = vmatprep.subr.bf16.mxu0 %v1101
  %1567 = vmatpush2.bf16.msra.mxu0 %v1100
  %1568 = vmatprep.subr.bf16.mxu0 %v1099
  %1569 = vmatpush2.bf16.msra.mxu0 %v1098
  %1570 = vmatprep.subr.bf16.mxu0 %v1097
  %1571 = vmatpush2.bf16.msra.mxu0 %v1096
  %1572 = vmatprep.subr.bf16.mxu0 %v1095
  %1573 = vmatpush2.bf16.msra.mxu0 %v1094
  %1574 = vmatprep.subr.bf16.mxu0 %v1093
  %1575 = vmatpush2.bf16.msra.mxu0 %v1092
  %1576 = vmatprep.subr.bf16.mxu0 %v1091
  %1577 = vmatpush2.bf16.msra.mxu0 %v1090
  %1578 = vmatprep.mubr.bf16.mxu0 %v280
  %1579 = vmatmul.mubr.bf16.gmra.mxu0 %v279
  %v1580 = vpop.f32.mrf.mxu0
  %v1581 = vadd.f32 %v1540, %v1580
  %v1582 = vpop.f32.mrf.mxu0
  %v1583 = vadd.f32 %v1542, %v1582
  %v1584 = vpop.f32.mrf.mxu0
  %v1585 = vpop.f32.mrf.mxu0
  %1586 = vdwg.mxu0
  %1587 = vmatprep.subr.bf16.mxu0 %v1121
  %1588 = vmatpush1.bf16.msra.mxu0 %v1120
  %1589 = vmatprep.subr.bf16.mxu0 %v1119
  %1590 = vmatpush1.bf16.msra.mxu0 %v1118
  %1591 = vmatprep.subr.bf16.mxu0 %v1117
  %1592 = vmatpush1.bf16.msra.mxu0 %v1116
  %1593 = vmatprep.subr.bf16.mxu0 %v1115
  %1594 = vmatpush1.bf16.msra.mxu0 %v1114
  %1595 = vmatprep.subr.bf16.mxu0 %v1113
  %1596 = vmatpush1.bf16.msra.mxu0 %v1112
  %1597 = vmatprep.subr.bf16.mxu0 %v1111
  %1598 = vmatpush1.bf16.msra.mxu0 %v1110
  %1599 = vmatprep.subr.bf16.mxu0 %v1109
  %1600 = vmatpush1.bf16.msra.mxu0 %v1108
  %1601 = vmatprep.subr.bf16.mxu0 %v1107
  %1602 = vmatpush1.bf16.msra.mxu0 %v1106
  %1603 = vmatprep.subr.bf16.mxu0 %v1137
  %1604 = vmatpush2.bf16.msra.mxu0 %v1136
  %1605 = vmatprep.subr.bf16.mxu0 %v1135
  %1606 = vmatpush2.bf16.msra.mxu0 %v1134
  %1607 = vmatprep.subr.bf16.mxu0 %v1133
  %1608 = vmatpush2.bf16.msra.mxu0 %v1132
  %1609 = vmatprep.subr.bf16.mxu0 %v1131
  %1610 = vmatpush2.bf16.msra.mxu0 %v1130
  %1611 = vmatprep.subr.bf16.mxu0 %v1129
  %1612 = vmatpush2.bf16.msra.mxu0 %v1128
  %1613 = vmatprep.subr.bf16.mxu0 %v1127
  %1614 = vmatpush2.bf16.msra.mxu0 %v1126
  %1615 = vmatprep.subr.bf16.mxu0 %v1125
  %1616 = vmatpush2.bf16.msra.mxu0 %v1124
  %1617 = vmatprep.subr.bf16.mxu0 %v1123
  %1618 = vmatpush2.bf16.msra.mxu0 %v1122
  %1619 = vmatprep.mubr.bf16.mxu0 %v282
  %1620 = vmatmul.mubr.bf16.gmra.mxu0 %v281
  %v1621 = vpop.f32.mrf.mxu0
  %v1622 = vadd.f32 %v1581, %v1621
  %v1623 = vpop.f32.mrf.mxu0
  %v1624 = vadd.f32 %v1583, %v1623
  %v1625 = vpop.f32.mrf.mxu0
  %v1626 = vpop.f32.mrf.mxu0
  %1627 = vdwg.mxu0
  %1628 = vmatprep.subr.bf16.mxu0 %v1153
  %1629 = vmatpush1.bf16.msra.mxu0 %v1152
  %1630 = vmatprep.subr.bf16.mxu0 %v1151
  %1631 = vmatpush1.bf16.msra.mxu0 %v1150
  %1632 = vmatprep.subr.bf16.mxu0 %v1149
  %1633 = vmatpush1.bf16.msra.mxu0 %v1148
  %1634 = vmatprep.subr.bf16.mxu0 %v1147
  %1635 = vmatpush1.bf16.msra.mxu0 %v1146
  %1636 = vmatprep.subr.bf16.mxu0 %v1145
  %1637 = vmatpush1.bf16.msra.mxu0 %v1144
  %1638 = vmatprep.subr.bf16.mxu0 %v1143
  %1639 = vmatpush1.bf16.msra.mxu0 %v1142
  %1640 = vmatprep.subr.bf16.mxu0 %v1141
  %1641 = vmatpush1.bf16.msra.mxu0 %v1140
  %1642 = vmatprep.subr.bf16.mxu0 %v1139
  %1643 = vmatpush1.bf16.msra.mxu0 %v1138
  %1644 = vmatprep.subr.bf16.mxu0 0
  %1645 = vmatpush2.bf16.msra.mxu0 0
  %1646 = vmatprep.subr.bf16.mxu0 0
  %1647 = vmatpush2.bf16.msra.mxu0 0
  %1648 = vmatprep.subr.bf16.mxu0 0
  %1649 = vmatpush2.bf16.msra.mxu0 0
  %1650 = vmatprep.subr.bf16.mxu0 0
  %1651 = vmatpush2.bf16.msra.mxu0 0
  %1652 = vmatprep.subr.bf16.mxu0 %v1161
  %1653 = vmatpush2.bf16.msra.mxu0 %v1160
  %1654 = vmatprep.subr.bf16.mxu0 %v1159
  %1655 = vmatpush2.bf16.msra.mxu0 %v1158
  %1656 = vmatprep.subr.bf16.mxu0 %v1157
  %1657 = vmatpush2.bf16.msra.mxu0 %v1156
  %1658 = vmatprep.subr.bf16.mxu0 %v1155
  %1659 = vmatpush2.bf16.msra.mxu0 %v1154
  %1660 = vmatprep.mubr.bf16.mxu0 %v1380
  %1661 = vmatmul.mubr.bf16.gmra.mxu0 %v283
  %v1662 = vpop.f32.mrf.mxu0
  %v1663 = vadd.f32 %v1622, %v1662
  %v1664 = vpop.f32.mrf.mxu0
  %v1665 = vadd.f32 %v1624, %v1664
  %v1666 = vpop.f32.mrf.mxu0
  %v1667 = vpop.f32.mrf.mxu0
  %1668 = vdwg.mxu0
  %v1669 = vmax.f32 %v1663, 0.0
  %v1670 = vmax.f32 %v1665, 0.0
  %1671 = vst [vmem:[%s3] sm:$0xff] %v1669
  %1672 = vst.msk [vmem:[%s3 + $0x8] sm:$0xff] %vm1378, %v1670
  // Predicated region
  $region14: #{stem_forward.22} parent=0 // pred_check
    _
  $region15: #{stem_forward.22} parent=0 // pred_check_branch
    %1674 = sbr.rel (0) target = $region17
  $region16: #{stem_forward.22} parent=0 // pred_region
    _
  $region17: #{stem_forward.22} parent=0 // pred_fallthru
    _
  // Predicated region
  $region18: #{stem_forward.22} parent=0 // pred_check
    _
  $region19: #{stem_forward.22} parent=0 // pred_check_branch
    %1676 = sbr.rel (0) target = $region21
  $region20: #{stem_forward.22} parent=0 // pred_region
    _
  $region21: #{stem_forward.22} parent=0 // pred_fallthru
    _

</llo_original>
